<compile_context>
chip_gen: v6e
topology: v6e:2x2x1
jax: 0.10.0
libtpu: 0.0.40
codegen_flags: <defaults>
</compile_context>

<pallas_src>
import functools

import jax
import jax.numpy as jnp
from jax.experimental import pallas as pl
from jax.experimental.pallas import tpu as pltpu


def _basic_block_kernel(x_ref, g1_ref, b1_ref, g2_ref, b2_ref, w1_ref, w2_ref,
                        o_ref, pad1_ref, patch1_ref, pad2_ref, patch2_ref,
                        *, N, Ho, Wo, Cin, Cout, S, act_before):
    eps = 1e-5
    slope = 0.1
    G = S * S                      # space-to-depth groups (= stride * stride)
    Rm = N * Ho * Wo               # rows at output resolution
    bf16 = jnp.bfloat16
    Wp = Wo + 10                   # padded width; interior starts at col 8 (aligned)

    def leaky(v):
        return jnp.where(v > 0, v, slope * v)

    # ---- BN1 statistics: single pass (sum, sum of squares) per channel ----
    xgs = [x_ref[g:g + 1].reshape(Rm, Cin) for g in range(G)]     # f32 (Rm, Cin)
    s1 = jnp.zeros((1, Cin), jnp.float32)
    s2 = jnp.zeros((1, Cin), jnp.float32)
    for xg in xgs:
        s1 = s1 + jnp.sum(xg, axis=0, keepdims=True)
        s2 = s2 + jnp.sum(xg * xg, axis=0, keepdims=True)
    cnt = float(Rm * G)                                           # = N*H*W
    mean1 = s1 / cnt
    var1 = jnp.maximum(s2 / cnt - mean1 * mean1, 0.0)
    scale1 = g1_ref[...] * jax.lax.rsqrt(var1 + eps)
    shift1 = b1_ref[...] - mean1 * scale1

    # ---- zero only the halo ring of the conv1 input buffer ----
    zr1 = jnp.zeros((G, N, 1, Wp, Cin), bf16)
    pad1_ref[:, :, 0:1, :, :] = zr1
    pad1_ref[:, :, Ho + 1:Ho + 2, :, :] = zr1
    zc1 = jnp.zeros((G, N, Ho, 1, Cin), bf16)
    pad1_ref[:, :, 1:Ho + 1, 7:8, :] = zc1
    pad1_ref[:, :, 1:Ho + 1, Wo + 8:Wo + 9, :] = zc1

    # ---- BN1 apply + LeakyReLU (f32 on VPU); shortcut pooling on the fly ----
    pooled = jnp.zeros((Rm, Cin), jnp.float32)
    for g, xg in enumerate(xgs):
        ag = leaky(xg * scale1 + shift1)
        pad1_ref[g:g + 1, :, 1:Ho + 1, 8:8 + Wo, :] = (
            ag.reshape(1, N, Ho, Wo, Cin).astype(bf16))
        pooled = pooled + (ag if act_before else xg)
    pooled = pooled * (1.0 / G)        # == AvgPool2d(S, S) of `orig` (identity if S==1)

    # ---- conv1: 3x3 stride-S as ONE im2col matmul on the MXU (bf16 in, f32 acc) ----
    # Tap (ky, kx) of the strided conv maps to s2d group g = di*S + dj shifted
    # by (Di, Dj) in {-1, 0, 1} blocks of the space-to-depth grid.
    for ky in range(3):
        for kx in range(3):
            di, dj = (ky - 1) % S, (kx - 1) % S
            Di, Dj = (ky - 1 - di) // S, (kx - 1 - dj) // S
            g = di * S + dj
            t = ky * 3 + kx
            tap = pad1_ref[g:g + 1, :, 1 + Di:1 + Di + Ho, 8 + Dj:8 + Dj + Wo, :]
            patch1_ref[:, t * Cin:(t + 1) * Cin] = tap.reshape(Rm, Cin)
    out1 = jnp.dot(patch1_ref[...], w1_ref[...],
                   preferred_element_type=jnp.float32)            # (Rm, Cout) f32

    # ---- BN2 (single-pass stats) + LeakyReLU ----
    mean2 = jnp.sum(out1, axis=0, keepdims=True) / float(Rm)
    var2 = jnp.maximum(
        jnp.sum(out1 * out1, axis=0, keepdims=True) / float(Rm) - mean2 * mean2, 0.0)
    scale2 = g2_ref[...] * jax.lax.rsqrt(var2 + eps)
    shift2 = b2_ref[...] - mean2 * scale2
    a2 = leaky(out1 * scale2 + shift2)

    # ---- conv2: 3x3 stride-1 as ONE im2col matmul (bf16) ----
    zr2 = jnp.zeros((N, 1, Wp, Cout), bf16)
    pad2_ref[:, 0:1, :, :] = zr2
    pad2_ref[:, Ho + 1:Ho + 2, :, :] = zr2
    zc2 = jnp.zeros((N, Ho, 1, Cout), bf16)
    pad2_ref[:, 1:Ho + 1, 7:8, :] = zc2
    pad2_ref[:, 1:Ho + 1, Wo + 8:Wo + 9, :] = zc2
    pad2_ref[:, 1:Ho + 1, 8:8 + Wo, :] = a2.reshape(N, Ho, Wo, Cout).astype(bf16)
    for ky in range(3):
        for kx in range(3):
            t = ky * 3 + kx
            tap = pad2_ref[:, ky:ky + Ho, 7 + kx:7 + kx + Wo, :]
            patch2_ref[:, t * Cout:(t + 1) * Cout] = tap.reshape(Rm, Cout)
    out2 = jnp.dot(patch2_ref[...], w2_ref[...],
                   preferred_element_type=jnp.float32)            # (Rm, Cout) f32

    # ---- residual add: shortcut lands at a static channel (lane) offset ----
    off = (Cout - Cin) // 2
    if Cin == Cout:
        o_ref[...] = (out2 + pooled).reshape(N, Ho, Wo, Cout)
    else:
        o_ref[...] = jnp.zeros((N, Ho, Wo, Cout), jnp.float32)
        o_ref[:, :, :, off:off + Cin] = pooled.reshape(N, Ho, Wo, Cin)
        o_ref[...] = o_ref[...] + out2.reshape(N, Ho, Wo, Cout)


def basic_block_forward(x_nchw, params, *, stride, activate_before_residual):
    """Pallas implementation of BasicBlock.forward. Input/output are NCHW."""
    N, Cin, H, W = x_nchw.shape
    Cout = params["w1"].shape[0]
    assert H % stride == 0 and W % stride == 0, "H, W must be divisible by stride"
    if Cin != Cout:
        assert (Cout - Cin) % 2 == 0, "channel zero-pad assumes even Cout - Cin"
    S = stride
    G = S * S
    Ho, Wo = H // S, W // S
    Rm = N * Ho * Wo

    # NHWC, f32 for BN statistics
    x = jnp.transpose(x_nchw, (0, 2, 3, 1)).astype(jnp.float32)
    # space-to-depth: xs[di*S+dj, n, i, j, c] = x[n, i*S+di, j*S+dj, c]
    xs = jnp.transpose(x.reshape(N, Ho, S, Wo, S, Cin),
                       (2, 4, 0, 1, 3, 5)).reshape(G, N, Ho, Wo, Cin)

    # im2col weight matrices: row index = (ky*3 + kx)*Cin + cin  (bf16 for the MXU)
    w1f = jnp.transpose(params["w1"].astype(jnp.float32),
                        (2, 3, 1, 0)).reshape(9 * Cin, Cout).astype(jnp.bfloat16)
    w2f = jnp.transpose(params["w2"].astype(jnp.float32),
                        (2, 3, 1, 0)).reshape(9 * Cout, Cout).astype(jnp.bfloat16)
    g1 = params["g1"].reshape(1, Cin).astype(jnp.float32)
    b1 = params["b1"].reshape(1, Cin).astype(jnp.float32)
    g2 = params["g2"].reshape(1, Cout).astype(jnp.float32)
    b2 = params["b2"].reshape(1, Cout).astype(jnp.float32)

    kernel = functools.partial(
        _basic_block_kernel, N=N, Ho=Ho, Wo=Wo, Cin=Cin, Cout=Cout, S=S,
        act_before=activate_before_residual)

    vmem_spec = pl.BlockSpec(memory_space=pltpu.MemorySpace.VMEM)
    out_nhwc = pl.pallas_call(
        kernel,
        out_shape=jax.ShapeDtypeStruct((N, Ho, Wo, Cout), jnp.float32),
        in_specs=[vmem_spec] * 7,
        out_specs=vmem_spec,
        scratch_shapes=[
            # zero-halo padded conv inputs (interior at column offset 8 -> aligned stores)
            pltpu.VMEM((G, N, Ho + 2, Wo + 10, Cin), jnp.bfloat16),   # pad1 (s2d groups)
            pltpu.VMEM((Rm, 9 * Cin), jnp.bfloat16),                  # im2col patch, conv1
            pltpu.VMEM((N, Ho + 2, Wo + 10, Cout), jnp.bfloat16),     # pad2
            pltpu.VMEM((Rm, 9 * Cout), jnp.bfloat16),                 # im2col patch, conv2
        ],
        compiler_params=pltpu.CompilerParams(vmem_limit_bytes=32 * 1024 * 1024),
    )(xs, g1, b1, g2, b2, w1f, w2f)

    return jnp.transpose(out_nhwc, (0, 3, 1, 2))                     # back to NCHW


def reference_forward(x, params, *, stride, activate_before_residual):
    """Pure-JAX reference of the PyTorch BasicBlock.forward (training-mode BN)."""
    eps = 1e-5
    Cin = x.shape[1]
    Cout = params["w1"].shape[0]
    equal_in_out = (Cin == Cout and stride == 1)

    def bn(v, g, b):
        mean = v.mean(axis=(0, 2, 3), keepdims=True)
        var = ((v - mean) ** 2).mean(axis=(0, 2, 3), keepdims=True)
        return (v - mean) / jnp.sqrt(var + eps) * g.reshape(1, -1, 1, 1) + b.reshape(1, -1, 1, 1)

    def lrelu(v):
        return jnp.where(v > 0, v, 0.1 * v)

    out = lrelu(bn(x, params["g1"], params["b1"]))
    orig = out if activate_before_residual else x
    out = jax.lax.conv_general_dilated(out, params["w1"], (stride, stride), ((1, 1), (1, 1)),
                                       dimension_numbers=("NCHW", "OIHW", "NCHW"))
    out = lrelu(bn(out, params["g2"], params["b2"]))
    out = jax.lax.conv_general_dilated(out, params["w2"], (1, 1), ((1, 1), (1, 1)),
                                       dimension_numbers=("NCHW", "OIHW", "NCHW"))
    if equal_in_out:
        sc = orig
    else:
        pooled = jax.lax.reduce_window(orig, 0.0, jax.lax.add,
                                       (1, 1, stride, stride), (1, 1, stride, stride),
                                       "VALID") / float(stride * stride)
        pc = (Cout - Cin) // 2
        sc = jnp.pad(pooled, ((0, 0), (pc, pc), (0, 0), (0, 0)))
    return out + sc


if __name__ == "__main__":
    key = jax.random.PRNGKey(0)
    N, Cin, H, W = 2, 4, 16, 16
    Cout, stride = 8, 2
    activate_before_residual = False

    ks = jax.random.split(key, 7)
    x = jax.random.normal(ks[0], (N, Cin, H, W), jnp.float32)
    params = dict(
        g1=1.0 + 0.1 * jax.random.normal(ks[1], (Cin,), jnp.float32),
        b1=0.1 * jax.random.normal(ks[2], (Cin,), jnp.float32),
        w1=jax.random.normal(ks[3], (Cout, Cin, 3, 3), jnp.float32) * (2.0 / (9 * Cin)) ** 0.5,
        g2=1.0 + 0.1 * jax.random.normal(ks[4], (Cout,), jnp.float32),
        b2=0.1 * jax.random.normal(ks[5], (Cout,), jnp.float32),
        w2=jax.random.normal(ks[6], (Cout, Cout, 3, 3), jnp.float32) * (2.0 / (9 * Cout)) ** 0.5,
    )

    out = basic_block_forward(x, params, stride=stride,
                              activate_before_residual=activate_before_residual)
    out = jax.block_until_ready(out)
    assert out.shape == (N, Cout, H // stride, W // stride), out.shape

    ref = reference_forward(x, params, stride=stride,
                            activate_before_residual=activate_before_residual)
    if not jnp.allclose(out, ref, atol=5e-2, rtol=5e-2):
        max_err = float(jnp.max(jnp.abs(out - ref)))
        raise AssertionError(f"kernel/reference mismatch, max abs err = {max_err}")

    print("KERNEL_OK")
</pallas_src>

<mosaic_0001>
module attributes {stable_mosaic.version = 11 : i64} {
  func.func @_basic_block_kernel(%arg0: memref<4x2x8x8x4xf32, #tpu.memory_space<vmem>>, %arg1: memref<1x4xf32, #tpu.memory_space<vmem>>, %arg2: memref<1x4xf32, #tpu.memory_space<vmem>>, %arg3: memref<1x8xf32, #tpu.memory_space<vmem>>, %arg4: memref<1x8xf32, #tpu.memory_space<vmem>>, %arg5: memref<36x8xbf16, #tpu.memory_space<vmem>>, %arg6: memref<72x8xbf16, #tpu.memory_space<vmem>>, %arg7: memref<2x8x8x8xf32, #tpu.memory_space<vmem>>, %arg8: memref<4x2x10x18x4xbf16, #tpu.memory_space<vmem>>, %arg9: memref<128x36xbf16, #tpu.memory_space<vmem>>, %arg10: memref<2x10x18x8xbf16, #tpu.memory_space<vmem>>, %arg11: memref<128x72xbf16, #tpu.memory_space<vmem>>) attributes {dimension_semantics = [], scalar_prefetch = 0 : i64, scratch_operands = 4 : i64, tpu.core_type = #tpu.core_type<tc>} {
    %c0 = arith.constant 0 : index
    %c0_0 = arith.constant 0 : index
    %c0_1 = arith.constant 0 : index
    %c0_2 = arith.constant 0 : index
    %c0_3 = arith.constant 0 : index
    %0 = vector.load %arg0[%c0, %c0_0, %c0_1, %c0_2, %c0_3] : memref<4x2x8x8x4xf32, #tpu.memory_space<vmem>>, vector<1x2x8x8x4xf32>
    %1 = vector.shape_cast %0 : vector<1x2x8x8x4xf32> to vector<128x4xf32>
    %c1 = arith.constant 1 : index
    %c0_4 = arith.constant 0 : index
    %c0_5 = arith.constant 0 : index
    %c0_6 = arith.constant 0 : index
    %c0_7 = arith.constant 0 : index
    %2 = vector.load %arg0[%c1, %c0_4, %c0_5, %c0_6, %c0_7] : memref<4x2x8x8x4xf32, #tpu.memory_space<vmem>>, vector<1x2x8x8x4xf32>
    %3 = vector.shape_cast %2 : vector<1x2x8x8x4xf32> to vector<128x4xf32>
    %c2 = arith.constant 2 : index
    %c0_8 = arith.constant 0 : index
    %c0_9 = arith.constant 0 : index
    %c0_10 = arith.constant 0 : index
    %c0_11 = arith.constant 0 : index
    %4 = vector.load %arg0[%c2, %c0_8, %c0_9, %c0_10, %c0_11] : memref<4x2x8x8x4xf32, #tpu.memory_space<vmem>>, vector<1x2x8x8x4xf32>
    %5 = vector.shape_cast %4 : vector<1x2x8x8x4xf32> to vector<128x4xf32>
    %c3 = arith.constant 3 : index
    %c0_12 = arith.constant 0 : index
    %c0_13 = arith.constant 0 : index
    %c0_14 = arith.constant 0 : index
    %c0_15 = arith.constant 0 : index
    %6 = vector.load %arg0[%c3, %c0_12, %c0_13, %c0_14, %c0_15] : memref<4x2x8x8x4xf32, #tpu.memory_space<vmem>>, vector<1x2x8x8x4xf32>
    %7 = vector.shape_cast %6 : vector<1x2x8x8x4xf32> to vector<128x4xf32>
    %cst = arith.constant 0.000000e+00 : f32
    %8 = vector.broadcast %cst : f32 to vector<1x4xf32>
    %cst_16 = arith.constant 0.000000e+00 : f32
    %9 = vector.broadcast %cst_16 : f32 to vector<1x4xf32>
    %cst_17 = arith.constant dense<0.000000e+00> : vector<4xf32>
    %10 = vector.multi_reduction <add>, %1, %cst_17 [0] : vector<128x4xf32> to vector<4xf32>
    %11 = vector.shape_cast %10 : vector<4xf32> to vector<1x4xf32>
    %12 = arith.addf %8, %11 : vector<1x4xf32>
    %13 = arith.mulf %1, %1 : vector<128x4xf32>
    %cst_18 = arith.constant dense<0.000000e+00> : vector<4xf32>
    %14 = vector.multi_reduction <add>, %13, %cst_18 [0] : vector<128x4xf32> to vector<4xf32>
    %15 = vector.shape_cast %14 : vector<4xf32> to vector<1x4xf32>
    %16 = arith.addf %9, %15 : vector<1x4xf32>
    %cst_19 = arith.constant dense<0.000000e+00> : vector<4xf32>
    %17 = vector.multi_reduction <add>, %3, %cst_19 [0] : vector<128x4xf32> to vector<4xf32>
    %18 = vector.shape_cast %17 : vector<4xf32> to vector<1x4xf32>
    %19 = arith.addf %12, %18 : vector<1x4xf32>
    %20 = arith.mulf %3, %3 : vector<128x4xf32>
    %cst_20 = arith.constant dense<0.000000e+00> : vector<4xf32>
    %21 = vector.multi_reduction <add>, %20, %cst_20 [0] : vector<128x4xf32> to vector<4xf32>
    %22 = vector.shape_cast %21 : vector<4xf32> to vector<1x4xf32>
    %23 = arith.addf %16, %22 : vector<1x4xf32>
    %cst_21 = arith.constant dense<0.000000e+00> : vector<4xf32>
    %24 = vector.multi_reduction <add>, %5, %cst_21 [0] : vector<128x4xf32> to vector<4xf32>
    %25 = vector.shape_cast %24 : vector<4xf32> to vector<1x4xf32>
    %26 = arith.addf %19, %25 : vector<1x4xf32>
    %27 = arith.mulf %5, %5 : vector<128x4xf32>
    %cst_22 = arith.constant dense<0.000000e+00> : vector<4xf32>
    %28 = vector.multi_reduction <add>, %27, %cst_22 [0] : vector<128x4xf32> to vector<4xf32>
    %29 = vector.shape_cast %28 : vector<4xf32> to vector<1x4xf32>
    %30 = arith.addf %23, %29 : vector<1x4xf32>
    %cst_23 = arith.constant dense<0.000000e+00> : vector<4xf32>
    %31 = vector.multi_reduction <add>, %7, %cst_23 [0] : vector<128x4xf32> to vector<4xf32>
    %32 = vector.shape_cast %31 : vector<4xf32> to vector<1x4xf32>
    %33 = arith.addf %26, %32 : vector<1x4xf32>
    %34 = arith.mulf %7, %7 : vector<128x4xf32>
    %cst_24 = arith.constant dense<0.000000e+00> : vector<4xf32>
    %35 = vector.multi_reduction <add>, %34, %cst_24 [0] : vector<128x4xf32> to vector<4xf32>
    %36 = vector.shape_cast %35 : vector<4xf32> to vector<1x4xf32>
    %37 = arith.addf %30, %36 : vector<1x4xf32>
    %cst_25 = arith.constant 5.120000e+02 : f32
    %38 = vector.broadcast %cst_25 : f32 to vector<1x4xf32>
    %39 = arith.divf %33, %38 : vector<1x4xf32>
    %cst_26 = arith.constant 5.120000e+02 : f32
    %40 = vector.broadcast %cst_26 : f32 to vector<1x4xf32>
    %41 = arith.divf %37, %40 : vector<1x4xf32>
    %42 = arith.mulf %39, %39 : vector<1x4xf32>
    %43 = arith.subf %41, %42 : vector<1x4xf32>
    %cst_27 = arith.constant 0.000000e+00 : f32
    %44 = vector.broadcast %cst_27 : f32 to vector<1x4xf32>
    %45 = arith.maximumf %43, %44 : vector<1x4xf32>
    %c0_28 = arith.constant 0 : index
    %c0_29 = arith.constant 0 : index
    %46 = vector.load %arg1[%c0_28, %c0_29] : memref<1x4xf32, #tpu.memory_space<vmem>>, vector<1x4xf32>
    %cst_30 = arith.constant 9.99999974E-6 : f32
    %47 = vector.broadcast %cst_30 : f32 to vector<1x4xf32>
    %48 = arith.addf %45, %47 : vector<1x4xf32>
    %49 = math.rsqrt %48 : vector<1x4xf32>
    %50 = arith.mulf %46, %49 : vector<1x4xf32>
    %c0_31 = arith.constant 0 : index
    %c0_32 = arith.constant 0 : index
    %51 = vector.load %arg2[%c0_31, %c0_32] : memref<1x4xf32, #tpu.memory_space<vmem>>, vector<1x4xf32>
    %52 = arith.mulf %39, %50 : vector<1x4xf32>
    %53 = arith.subf %51, %52 : vector<1x4xf32>
    %cst_33 = arith.constant 0.000000e+00 : bf16
    %54 = vector.broadcast %cst_33 : bf16 to vector<4x2x1x18x4xbf16>
    %c0_34 = arith.constant 0 : index
    %c0_35 = arith.constant 0 : index
    %c0_36 = arith.constant 0 : index
    %c0_37 = arith.constant 0 : index
    %c0_38 = arith.constant 0 : index
    %55 = vector.load %arg8[%c0_34, %c0_35, %c0_36, %c0_37, %c0_38] : memref<4x2x10x18x4xbf16, #tpu.memory_space<vmem>>, vector<4x2x1x18x4xbf16>
    tpu.vector_store %arg8[%c0_34, %c0_35, %c0_36, %c0_37, %c0_38], %54 {strides = array<i32>} : memref<4x2x10x18x4xbf16, #tpu.memory_space<vmem>>, vector<4x2x1x18x4xbf16>,
    %c0_39 = arith.constant 0 : index
    %c0_40 = arith.constant 0 : index
    %c9 = arith.constant 9 : index
    %c0_41 = arith.constant 0 : index
    %c0_42 = arith.constant 0 : index
    %56 = vector.load %arg8[%c0_39, %c0_40, %c9, %c0_41, %c0_42] : memref<4x2x10x18x4xbf16, #tpu.memory_space<vmem>>, vector<4x2x1x18x4xbf16>
    tpu.vector_store %arg8[%c0_39, %c0_40, %c9, %c0_41, %c0_42], %54 {strides = array<i32>} : memref<4x2x10x18x4xbf16, #tpu.memory_space<vmem>>, vector<4x2x1x18x4xbf16>,
    %cst_43 = arith.constant 0.000000e+00 : bf16
    %57 = vector.broadcast %cst_43 : bf16 to vector<4x2x8x1x4xbf16>
    %c0_44 = arith.constant 0 : index
    %c0_45 = arith.constant 0 : index
    %c1_46 = arith.constant 1 : index
    %c7 = arith.constant 7 : index
    %c0_47 = arith.constant 0 : index
    %58 = vector.load %arg8[%c0_44, %c0_45, %c1_46, %c7, %c0_47] : memref<4x2x10x18x4xbf16, #tpu.memory_space<vmem>>, vector<4x2x8x1x4xbf16>
    tpu.vector_store %arg8[%c0_44, %c0_45, %c1_46, %c7, %c0_47], %57 {strides = array<i32>} : memref<4x2x10x18x4xbf16, #tpu.memory_space<vmem>>, vector<4x2x8x1x4xbf16>,
    %c0_48 = arith.constant 0 : index
    %c0_49 = arith.constant 0 : index
    %c1_50 = arith.constant 1 : index
    %c16 = arith.constant 16 : index
    %c0_51 = arith.constant 0 : index
    %59 = vector.load %arg8[%c0_48, %c0_49, %c1_50, %c16, %c0_51] : memref<4x2x10x18x4xbf16, #tpu.memory_space<vmem>>, vector<4x2x8x1x4xbf16>
    tpu.vector_store %arg8[%c0_48, %c0_49, %c1_50, %c16, %c0_51], %57 {strides = array<i32>} : memref<4x2x10x18x4xbf16, #tpu.memory_space<vmem>>, vector<4x2x8x1x4xbf16>,
    %cst_52 = arith.constant 0.000000e+00 : f32
    %60 = vector.broadcast %cst_52 : f32 to vector<128x4xf32>
    %61 = vector.broadcast %50 : vector<1x4xf32> to vector<128x4xf32>
    %62 = arith.mulf %1, %61 : vector<128x4xf32>
    %63 = vector.broadcast %53 : vector<1x4xf32> to vector<128x4xf32>
    %64 = arith.addf %62, %63 : vector<128x4xf32>
    %cst_53 = arith.constant 0.000000e+00 : f32
    %65 = vector.broadcast %cst_53 : f32 to vector<128x4xf32>
    %66 = arith.cmpf ogt, %64, %65 : vector<128x4xf32>
    %cst_54 = arith.constant 1.000000e-01 : f32
    %67 = vector.broadcast %cst_54 : f32 to vector<128x4xf32>
    %68 = arith.mulf %67, %64 : vector<128x4xf32>
    %69 = arith.select %66, %64, %68 : vector<128x4xi1>, vector<128x4xf32>
    %70 = vector.shape_cast %69 : vector<128x4xf32> to vector<1x2x8x8x4xf32>
    %71 = arith.truncf %70 : vector<1x2x8x8x4xf32> to vector<1x2x8x8x4xbf16>
    %c0_55 = arith.constant 0 : index
    %c0_56 = arith.constant 0 : index
    %c1_57 = arith.constant 1 : index
    %c8 = arith.constant 8 : index
    %c0_58 = arith.constant 0 : index
    %72 = vector.load %arg8[%c0_55, %c0_56, %c1_57, %c8, %c0_58] : memref<4x2x10x18x4xbf16, #tpu.memory_space<vmem>>, vector<1x2x8x8x4xbf16>
    tpu.vector_store %arg8[%c0_55, %c0_56, %c1_57, %c8, %c0_58], %71 {strides = array<i32>} : memref<4x2x10x18x4xbf16, #tpu.memory_space<vmem>>, vector<1x2x8x8x4xbf16>,
    %73 = arith.addf %60, %1 : vector<128x4xf32>
    %74 = vector.broadcast %50 : vector<1x4xf32> to vector<128x4xf32>
    %75 = arith.mulf %3, %74 : vector<128x4xf32>
    %76 = vector.broadcast %53 : vector<1x4xf32> to vector<128x4xf32>
    %77 = arith.addf %75, %76 : vector<128x4xf32>
    %cst_59 = arith.constant 0.000000e+00 : f32
    %78 = vector.broadcast %cst_59 : f32 to vector<128x4xf32>
    %79 = arith.cmpf ogt, %77, %78 : vector<128x4xf32>
    %cst_60 = arith.constant 1.000000e-01 : f32
    %80 = vector.broadcast %cst_60 : f32 to vector<128x4xf32>
    %81 = arith.mulf %80, %77 : vector<128x4xf32>
    %82 = arith.select %79, %77, %81 : vector<128x4xi1>, vector<128x4xf32>
    %83 = vector.shape_cast %82 : vector<128x4xf32> to vector<1x2x8x8x4xf32>
    %84 = arith.truncf %83 : vector<1x2x8x8x4xf32> to vector<1x2x8x8x4xbf16>
    %c1_61 = arith.constant 1 : index
    %c0_62 = arith.constant 0 : index
    %c1_63 = arith.constant 1 : index
    %c8_64 = arith.constant 8 : index
    %c0_65 = arith.constant 0 : index
    %85 = vector.load %arg8[%c1_61, %c0_62, %c1_63, %c8_64, %c0_65] : memref<4x2x10x18x4xbf16, #tpu.memory_space<vmem>>, vector<1x2x8x8x4xbf16>
    tpu.vector_store %arg8[%c1_61, %c0_62, %c1_63, %c8_64, %c0_65], %84 {strides = array<i32>} : memref<4x2x10x18x4xbf16, #tpu.memory_space<vmem>>, vector<1x2x8x8x4xbf16>,
    %86 = arith.addf %73, %3 : vector<128x4xf32>
    %87 = vector.broadcast %50 : vector<1x4xf32> to vector<128x4xf32>
    %88 = arith.mulf %5, %87 : vector<128x4xf32>
    %89 = vector.broadcast %53 : vector<1x4xf32> to vector<128x4xf32>
    %90 = arith.addf %88, %89 : vector<128x4xf32>
    %cst_66 = arith.constant 0.000000e+00 : f32
    %91 = vector.broadcast %cst_66 : f32 to vector<128x4xf32>
    %92 = arith.cmpf ogt, %90, %91 : vector<128x4xf32>
    %cst_67 = arith.constant 1.000000e-01 : f32
    %93 = vector.broadcast %cst_67 : f32 to vector<128x4xf32>
    %94 = arith.mulf %93, %90 : vector<128x4xf32>
    %95 = arith.select %92, %90, %94 : vector<128x4xi1>, vector<128x4xf32>
    %96 = vector.shape_cast %95 : vector<128x4xf32> to vector<1x2x8x8x4xf32>
    %97 = arith.truncf %96 : vector<1x2x8x8x4xf32> to vector<1x2x8x8x4xbf16>
    %c2_68 = arith.constant 2 : index
    %c0_69 = arith.constant 0 : index
    %c1_70 = arith.constant 1 : index
    %c8_71 = arith.constant 8 : index
    %c0_72 = arith.constant 0 : index
    %98 = vector.load %arg8[%c2_68, %c0_69, %c1_70, %c8_71, %c0_72] : memref<4x2x10x18x4xbf16, #tpu.memory_space<vmem>>, vector<1x2x8x8x4xbf16>
    tpu.vector_store %arg8[%c2_68, %c0_69, %c1_70, %c8_71, %c0_72], %97 {strides = array<i32>} : memref<4x2x10x18x4xbf16, #tpu.memory_space<vmem>>, vector<1x2x8x8x4xbf16>,
    %99 = arith.addf %86, %5 : vector<128x4xf32>
    %100 = vector.broadcast %50 : vector<1x4xf32> to vector<128x4xf32>
    %101 = arith.mulf %7, %100 : vector<128x4xf32>
    %102 = vector.broadcast %53 : vector<1x4xf32> to vector<128x4xf32>
    %103 = arith.addf %101, %102 : vector<128x4xf32>
    %cst_73 = arith.constant 0.000000e+00 : f32
    %104 = vector.broadcast %cst_73 : f32 to vector<128x4xf32>
    %105 = arith.cmpf ogt, %103, %104 : vector<128x4xf32>
    %cst_74 = arith.constant 1.000000e-01 : f32
    %106 = vector.broadcast %cst_74 : f32 to vector<128x4xf32>
    %107 = arith.mulf %106, %103 : vector<128x4xf32>
    %108 = arith.select %105, %103, %107 : vector<128x4xi1>, vector<128x4xf32>
    %109 = vector.shape_cast %108 : vector<128x4xf32> to vector<1x2x8x8x4xf32>
    %110 = arith.truncf %109 : vector<1x2x8x8x4xf32> to vector<1x2x8x8x4xbf16>
    %c3_75 = arith.constant 3 : index
    %c0_76 = arith.constant 0 : index
    %c1_77 = arith.constant 1 : index
    %c8_78 = arith.constant 8 : index
    %c0_79 = arith.constant 0 : index
    %111 = vector.load %arg8[%c3_75, %c0_76, %c1_77, %c8_78, %c0_79] : memref<4x2x10x18x4xbf16, #tpu.memory_space<vmem>>, vector<1x2x8x8x4xbf16>
    tpu.vector_store %arg8[%c3_75, %c0_76, %c1_77, %c8_78, %c0_79], %110 {strides = array<i32>} : memref<4x2x10x18x4xbf16, #tpu.memory_space<vmem>>, vector<1x2x8x8x4xbf16>,
    %112 = arith.addf %99, %7 : vector<128x4xf32>
    %cst_80 = arith.constant 2.500000e-01 : f32
    %113 = vector.broadcast %cst_80 : f32 to vector<128x4xf32>
    %114 = arith.mulf %112, %113 : vector<128x4xf32>
    %c3_81 = arith.constant 3 : index
    %c0_82 = arith.constant 0 : index
    %c0_83 = arith.constant 0 : index
    %c7_84 = arith.constant 7 : index
    %c0_85 = arith.constant 0 : index
    %115 = vector.load %arg8[%c3_81, %c0_82, %c0_83, %c7_84, %c0_85] : memref<4x2x10x18x4xbf16, #tpu.memory_space<vmem>>, vector<1x2x8x8x4xbf16>
    %116 = vector.shape_cast %115 : vector<1x2x8x8x4xbf16> to vector<128x4xbf16>
    %c0_86 = arith.constant 0 : index
    %c0_87 = arith.constant 0 : index
    %117 = vector.load %arg9[%c0_86, %c0_87] : memref<128x36xbf16, #tpu.memory_space<vmem>>, vector<128x4xbf16>
    tpu.vector_store %arg9[%c0_86, %c0_87], %116 {strides = array<i32>} : memref<128x36xbf16, #tpu.memory_space<vmem>>, vector<128x4xbf16>,
    %c2_88 = arith.constant 2 : index
    %c0_89 = arith.constant 0 : index
    %c0_90 = arith.constant 0 : index
    %c8_91 = arith.constant 8 : index
    %c0_92 = arith.constant 0 : index
    %118 = vector.load %arg8[%c2_88, %c0_89, %c0_90, %c8_91, %c0_92] : memref<4x2x10x18x4xbf16, #tpu.memory_space<vmem>>, vector<1x2x8x8x4xbf16>
    %119 = vector.shape_cast %118 : vector<1x2x8x8x4xbf16> to vector<128x4xbf16>
    %c0_93 = arith.constant 0 : index
    %c4 = arith.constant 4 : index
    %120 = vector.load %arg9[%c0_93, %c4] : memref<128x36xbf16, #tpu.memory_space<vmem>>, vector<128x4xbf16>
    tpu.vector_store %arg9[%c0_93, %c4], %119 {strides = array<i32>} : memref<128x36xbf16, #tpu.memory_space<vmem>>, vector<128x4xbf16>,
    %c3_94 = arith.constant 3 : index
    %c0_95 = arith.constant 0 : index
    %c0_96 = arith.constant 0 : index
    %c8_97 = arith.constant 8 : index
    %c0_98 = arith.constant 0 : index
    %121 = vector.load %arg8[%c3_94, %c0_95, %c0_96, %c8_97, %c0_98] : memref<4x2x10x18x4xbf16, #tpu.memory_space<vmem>>, vector<1x2x8x8x4xbf16>
    %122 = vector.shape_cast %121 : vector<1x2x8x8x4xbf16> to vector<128x4xbf16>
    %c0_99 = arith.constant 0 : index
    %c8_100 = arith.constant 8 : index
    %123 = vector.load %arg9[%c0_99, %c8_100] : memref<128x36xbf16, #tpu.memory_space<vmem>>, vector<128x4xbf16>
    tpu.vector_store %arg9[%c0_99, %c8_100], %122 {strides = array<i32>} : memref<128x36xbf16, #tpu.memory_space<vmem>>, vector<128x4xbf16>,
    %c1_101 = arith.constant 1 : index
    %c0_102 = arith.constant 0 : index
    %c1_103 = arith.constant 1 : index
    %c7_104 = arith.constant 7 : index
    %c0_105 = arith.constant 0 : index
    %124 = vector.load %arg8[%c1_101, %c0_102, %c1_103, %c7_104, %c0_105] : memref<4x2x10x18x4xbf16, #tpu.memory_space<vmem>>, vector<1x2x8x8x4xbf16>
    %125 = vector.shape_cast %124 : vector<1x2x8x8x4xbf16> to vector<128x4xbf16>
    %c0_106 = arith.constant 0 : index
    %c12 = arith.constant 12 : index
    %126 = vector.load %arg9[%c0_106, %c12] : memref<128x36xbf16, #tpu.memory_space<vmem>>, vector<128x4xbf16>
    tpu.vector_store %arg9[%c0_106, %c12], %125 {strides = array<i32>} : memref<128x36xbf16, #tpu.memory_space<vmem>>, vector<128x4xbf16>,
    %c0_107 = arith.constant 0 : index
    %c0_108 = arith.constant 0 : index
    %c1_109 = arith.constant 1 : index
    %c8_110 = arith.constant 8 : index
    %c0_111 = arith.constant 0 : index
    %127 = vector.load %arg8[%c0_107, %c0_108, %c1_109, %c8_110, %c0_111] : memref<4x2x10x18x4xbf16, #tpu.memory_space<vmem>>, vector<1x2x8x8x4xbf16>
    %128 = vector.shape_cast %127 : vector<1x2x8x8x4xbf16> to vector<128x4xbf16>
    %c0_112 = arith.constant 0 : index
    %c16_113 = arith.constant 16 : index
    %129 = vector.load %arg9[%c0_112, %c16_113] : memref<128x36xbf16, #tpu.memory_space<vmem>>, vector<128x4xbf16>
    tpu.vector_store %arg9[%c0_112, %c16_113], %128 {strides = array<i32>} : memref<128x36xbf16, #tpu.memory_space<vmem>>, vector<128x4xbf16>,
    %c1_114 = arith.constant 1 : index
    %c0_115 = arith.constant 0 : index
    %c1_116 = arith.constant 1 : index
    %c8_117 = arith.constant 8 : index
    %c0_118 = arith.constant 0 : index
    %130 = vector.load %arg8[%c1_114, %c0_115, %c1_116, %c8_117, %c0_118] : memref<4x2x10x18x4xbf16, #tpu.memory_space<vmem>>, vector<1x2x8x8x4xbf16>
    %131 = vector.shape_cast %130 : vector<1x2x8x8x4xbf16> to vector<128x4xbf16>
    %c0_119 = arith.constant 0 : index
    %c20 = arith.constant 20 : index
    %132 = vector.load %arg9[%c0_119, %c20] : memref<128x36xbf16, #tpu.memory_space<vmem>>, vector<128x4xbf16>
    tpu.vector_store %arg9[%c0_119, %c20], %131 {strides = array<i32>} : memref<128x36xbf16, #tpu.memory_space<vmem>>, vector<128x4xbf16>,
    %c3_120 = arith.constant 3 : index
    %c0_121 = arith.constant 0 : index
    %c1_122 = arith.constant 1 : index
    %c7_123 = arith.constant 7 : index
    %c0_124 = arith.constant 0 : index
    %133 = vector.load %arg8[%c3_120, %c0_121, %c1_122, %c7_123, %c0_124] : memref<4x2x10x18x4xbf16, #tpu.memory_space<vmem>>, vector<1x2x8x8x4xbf16>
    %134 = vector.shape_cast %133 : vector<1x2x8x8x4xbf16> to vector<128x4xbf16>
    %c0_125 = arith.constant 0 : index
    %c24 = arith.constant 24 : index
    %135 = vector.load %arg9[%c0_125, %c24] : memref<128x36xbf16, #tpu.memory_space<vmem>>, vector<128x4xbf16>
    tpu.vector_store %arg9[%c0_125, %c24], %134 {strides = array<i32>} : memref<128x36xbf16, #tpu.memory_space<vmem>>, vector<128x4xbf16>,
    %c2_126 = arith.constant 2 : index
    %c0_127 = arith.constant 0 : index
    %c1_128 = arith.constant 1 : index
    %c8_129 = arith.constant 8 : index
    %c0_130 = arith.constant 0 : index
    %136 = vector.load %arg8[%c2_126, %c0_127, %c1_128, %c8_129, %c0_130] : memref<4x2x10x18x4xbf16, #tpu.memory_space<vmem>>, vector<1x2x8x8x4xbf16>
    %137 = vector.shape_cast %136 : vector<1x2x8x8x4xbf16> to vector<128x4xbf16>
    %c0_131 = arith.constant 0 : index
    %c28 = arith.constant 28 : index
    %138 = vector.load %arg9[%c0_131, %c28] : memref<128x36xbf16, #tpu.memory_space<vmem>>, vector<128x4xbf16>
    tpu.vector_store %arg9[%c0_131, %c28], %137 {strides = array<i32>} : memref<128x36xbf16, #tpu.memory_space<vmem>>, vector<128x4xbf16>,
    %c3_132 = arith.constant 3 : index
    %c0_133 = arith.constant 0 : index
    %c1_134 = arith.constant 1 : index
    %c8_135 = arith.constant 8 : index
    %c0_136 = arith.constant 0 : index
    %139 = vector.load %arg8[%c3_132, %c0_133, %c1_134, %c8_135, %c0_136] : memref<4x2x10x18x4xbf16, #tpu.memory_space<vmem>>, vector<1x2x8x8x4xbf16>
    %140 = vector.shape_cast %139 : vector<1x2x8x8x4xbf16> to vector<128x4xbf16>
    %c0_137 = arith.constant 0 : index
    %c32 = arith.constant 32 : index
    %141 = vector.load %arg9[%c0_137, %c32] : memref<128x36xbf16, #tpu.memory_space<vmem>>, vector<128x4xbf16>
    tpu.vector_store %arg9[%c0_137, %c32], %140 {strides = array<i32>} : memref<128x36xbf16, #tpu.memory_space<vmem>>, vector<128x4xbf16>,
    %c0_138 = arith.constant 0 : index
    %c0_139 = arith.constant 0 : index
    %142 = vector.load %arg9[%c0_138, %c0_139] : memref<128x36xbf16, #tpu.memory_space<vmem>>, vector<128x36xbf16>
    %c0_140 = arith.constant 0 : index
    %c0_141 = arith.constant 0 : index
    %143 = vector.load %arg5[%c0_140, %c0_141] : memref<36x8xbf16, #tpu.memory_space<vmem>>, vector<36x8xbf16>
    %cst_142 = arith.constant dense<0.000000e+00> : vector<128x8xf32>
    %144 = tpu.matmul %142, %143, %cst_142 {dimension_numbers = #tpu.dot_dimension_numbers<[1], [0], [0], [1], [0, 0, 1, 1], [], []>} : vector<128x36xbf16>, vector<36x8xbf16>, vector<128x8xf32> -> vector<128x8xf32>
    %cst_143 = arith.constant dense<0.000000e+00> : vector<8xf32>
    %145 = vector.multi_reduction <add>, %144, %cst_143 [0] : vector<128x8xf32> to vector<8xf32>
    %146 = vector.shape_cast %145 : vector<8xf32> to vector<1x8xf32>
    %cst_144 = arith.constant 1.280000e+02 : f32
    %147 = vector.broadcast %cst_144 : f32 to vector<1x8xf32>
    %148 = arith.divf %146, %147 : vector<1x8xf32>
    %149 = arith.mulf %144, %144 : vector<128x8xf32>
    %cst_145 = arith.constant dense<0.000000e+00> : vector<8xf32>
    %150 = vector.multi_reduction <add>, %149, %cst_145 [0] : vector<128x8xf32> to vector<8xf32>
    %151 = vector.shape_cast %150 : vector<8xf32> to vector<1x8xf32>
    %cst_146 = arith.constant 1.280000e+02 : f32
    %152 = vector.broadcast %cst_146 : f32 to vector<1x8xf32>
    %153 = arith.divf %151, %152 : vector<1x8xf32>
    %154 = arith.mulf %148, %148 : vector<1x8xf32>
    %155 = arith.subf %153, %154 : vector<1x8xf32>
    %cst_147 = arith.constant 0.000000e+00 : f32
    %156 = vector.broadcast %cst_147 : f32 to vector<1x8xf32>
    %157 = arith.maximumf %155, %156 : vector<1x8xf32>
    %c0_148 = arith.constant 0 : index
    %c0_149 = arith.constant 0 : index
    %158 = vector.load %arg3[%c0_148, %c0_149] : memref<1x8xf32, #tpu.memory_space<vmem>>, vector<1x8xf32>
    %cst_150 = arith.constant 9.99999974E-6 : f32
    %159 = vector.broadcast %cst_150 : f32 to vector<1x8xf32>
    %160 = arith.addf %157, %159 : vector<1x8xf32>
    %161 = math.rsqrt %160 : vector<1x8xf32>
    %162 = arith.mulf %158, %161 : vector<1x8xf32>
    %c0_151 = arith.constant 0 : index
    %c0_152 = arith.constant 0 : index
    %163 = vector.load %arg4[%c0_151, %c0_152] : memref<1x8xf32, #tpu.memory_space<vmem>>, vector<1x8xf32>
    %164 = arith.mulf %148, %162 : vector<1x8xf32>
    %165 = arith.subf %163, %164 : vector<1x8xf32>
    %166 = vector.broadcast %162 : vector<1x8xf32> to vector<128x8xf32>
    %167 = arith.mulf %144, %166 : vector<128x8xf32>
    %168 = vector.broadcast %165 : vector<1x8xf32> to vector<128x8xf32>
    %169 = arith.addf %167, %168 : vector<128x8xf32>
    %cst_153 = arith.constant 0.000000e+00 : f32
    %170 = vector.broadcast %cst_153 : f32 to vector<128x8xf32>
    %171 = arith.cmpf ogt, %169, %170 : vector<128x8xf32>
    %cst_154 = arith.constant 1.000000e-01 : f32
    %172 = vector.broadcast %cst_154 : f32 to vector<128x8xf32>
    %173 = arith.mulf %172, %169 : vector<128x8xf32>
    %174 = arith.select %171, %169, %173 : vector<128x8xi1>, vector<128x8xf32>
    %cst_155 = arith.constant 0.000000e+00 : bf16
    %175 = vector.broadcast %cst_155 : bf16 to vector<2x1x18x8xbf16>
    %c0_156 = arith.constant 0 : index
    %c0_157 = arith.constant 0 : index
    %c0_158 = arith.constant 0 : index
    %c0_159 = arith.constant 0 : index
    %176 = vector.load %arg10[%c0_156, %c0_157, %c0_158, %c0_159] : memref<2x10x18x8xbf16, #tpu.memory_space<vmem>>, vector<2x1x18x8xbf16>
    tpu.vector_store %arg10[%c0_156, %c0_157, %c0_158, %c0_159], %175 {strides = array<i32>} : memref<2x10x18x8xbf16, #tpu.memory_space<vmem>>, vector<2x1x18x8xbf16>,
    %c0_160 = arith.constant 0 : index
    %c9_161 = arith.constant 9 : index
    %c0_162 = arith.constant 0 : index
    %c0_163 = arith.constant 0 : index
    %177 = vector.load %arg10[%c0_160, %c9_161, %c0_162, %c0_163] : memref<2x10x18x8xbf16, #tpu.memory_space<vmem>>, vector<2x1x18x8xbf16>
    tpu.vector_store %arg10[%c0_160, %c9_161, %c0_162, %c0_163], %175 {strides = array<i32>} : memref<2x10x18x8xbf16, #tpu.memory_space<vmem>>, vector<2x1x18x8xbf16>,
    %cst_164 = arith.constant 0.000000e+00 : bf16
    %178 = vector.broadcast %cst_164 : bf16 to vector<2x8x1x8xbf16>
    %c0_165 = arith.constant 0 : index
    %c1_166 = arith.constant 1 : index
    %c7_167 = arith.constant 7 : index
    %c0_168 = arith.constant 0 : index
    %179 = vector.load %arg10[%c0_165, %c1_166, %c7_167, %c0_168] : memref<2x10x18x8xbf16, #tpu.memory_space<vmem>>, vector<2x8x1x8xbf16>
    tpu.vector_store %arg10[%c0_165, %c1_166, %c7_167, %c0_168], %178 {strides = array<i32>} : memref<2x10x18x8xbf16, #tpu.memory_space<vmem>>, vector<2x8x1x8xbf16>,
    %c0_169 = arith.constant 0 : index
    %c1_170 = arith.constant 1 : index
    %c16_171 = arith.constant 16 : index
    %c0_172 = arith.constant 0 : index
    %180 = vector.load %arg10[%c0_169, %c1_170, %c16_171, %c0_172] : memref<2x10x18x8xbf16, #tpu.memory_space<vmem>>, vector<2x8x1x8xbf16>
    tpu.vector_store %arg10[%c0_169, %c1_170, %c16_171, %c0_172], %178 {strides = array<i32>} : memref<2x10x18x8xbf16, #tpu.memory_space<vmem>>, vector<2x8x1x8xbf16>,
    %181 = vector.shape_cast %174 : vector<128x8xf32> to vector<2x8x8x8xf32>
    %182 = arith.truncf %181 : vector<2x8x8x8xf32> to vector<2x8x8x8xbf16>
    %c0_173 = arith.constant 0 : index
    %c1_174 = arith.constant 1 : index
    %c8_175 = arith.constant 8 : index
    %c0_176 = arith.constant 0 : index
    %183 = vector.load %arg10[%c0_173, %c1_174, %c8_175, %c0_176] : memref<2x10x18x8xbf16, #tpu.memory_space<vmem>>, vector<2x8x8x8xbf16>
    tpu.vector_store %arg10[%c0_173, %c1_174, %c8_175, %c0_176], %182 {strides = array<i32>} : memref<2x10x18x8xbf16, #tpu.memory_space<vmem>>, vector<2x8x8x8xbf16>,
    %c0_177 = arith.constant 0 : index
    %c0_178 = arith.constant 0 : index
    %c7_179 = arith.constant 7 : index
    %c0_180 = arith.constant 0 : index
    %184 = vector.load %arg10[%c0_177, %c0_178, %c7_179, %c0_180] : memref<2x10x18x8xbf16, #tpu.memory_space<vmem>>, vector<2x8x8x8xbf16>
    %185 = vector.shape_cast %184 : vector<2x8x8x8xbf16> to vector<128x8xbf16>
    %c0_181 = arith.constant 0 : index
    %c0_182 = arith.constant 0 : index
    %186 = vector.load %arg11[%c0_181, %c0_182] : memref<128x72xbf16, #tpu.memory_space<vmem>>, vector<128x8xbf16>
    tpu.vector_store %arg11[%c0_181, %c0_182], %185 {strides = array<i32>} : memref<128x72xbf16, #tpu.memory_space<vmem>>, vector<128x8xbf16>,
    %c0_183 = arith.constant 0 : index
    %c0_184 = arith.constant 0 : index
    %c8_185 = arith.constant 8 : index
    %c0_186 = arith.constant 0 : index
    %187 = vector.load %arg10[%c0_183, %c0_184, %c8_185, %c0_186] : memref<2x10x18x8xbf16, #tpu.memory_space<vmem>>, vector<2x8x8x8xbf16>
    %188 = vector.shape_cast %187 : vector<2x8x8x8xbf16> to vector<128x8xbf16>
    %c0_187 = arith.constant 0 : index
    %c8_188 = arith.constant 8 : index
    %189 = vector.load %arg11[%c0_187, %c8_188] : memref<128x72xbf16, #tpu.memory_space<vmem>>, vector<128x8xbf16>
    tpu.vector_store %arg11[%c0_187, %c8_188], %188 {strides = array<i32>} : memref<128x72xbf16, #tpu.memory_space<vmem>>, vector<128x8xbf16>,
    %c0_189 = arith.constant 0 : index
    %c0_190 = arith.constant 0 : index
    %c9_191 = arith.constant 9 : index
    %c0_192 = arith.constant 0 : index
    %190 = vector.load %arg10[%c0_189, %c0_190, %c9_191, %c0_192] : memref<2x10x18x8xbf16, #tpu.memory_space<vmem>>, vector<2x8x8x8xbf16>
    %191 = vector.shape_cast %190 : vector<2x8x8x8xbf16> to vector<128x8xbf16>
    %c0_193 = arith.constant 0 : index
    %c16_194 = arith.constant 16 : index
    %192 = vector.load %arg11[%c0_193, %c16_194] : memref<128x72xbf16, #tpu.memory_space<vmem>>, vector<128x8xbf16>
    tpu.vector_store %arg11[%c0_193, %c16_194], %191 {strides = array<i32>} : memref<128x72xbf16, #tpu.memory_space<vmem>>, vector<128x8xbf16>,
    %c0_195 = arith.constant 0 : index
    %c1_196 = arith.constant 1 : index
    %c7_197 = arith.constant 7 : index
    %c0_198 = arith.constant 0 : index
    %193 = vector.load %arg10[%c0_195, %c1_196, %c7_197, %c0_198] : memref<2x10x18x8xbf16, #tpu.memory_space<vmem>>, vector<2x8x8x8xbf16>
    %194 = vector.shape_cast %193 : vector<2x8x8x8xbf16> to vector<128x8xbf16>
    %c0_199 = arith.constant 0 : index
    %c24_200 = arith.constant 24 : index
    %195 = vector.load %arg11[%c0_199, %c24_200] : memref<128x72xbf16, #tpu.memory_space<vmem>>, vector<128x8xbf16>
    tpu.vector_store %arg11[%c0_199, %c24_200], %194 {strides = array<i32>} : memref<128x72xbf16, #tpu.memory_space<vmem>>, vector<128x8xbf16>,
    %c0_201 = arith.constant 0 : index
    %c1_202 = arith.constant 1 : index
    %c8_203 = arith.constant 8 : index
    %c0_204 = arith.constant 0 : index
    %196 = vector.load %arg10[%c0_201, %c1_202, %c8_203, %c0_204] : memref<2x10x18x8xbf16, #tpu.memory_space<vmem>>, vector<2x8x8x8xbf16>
    %197 = vector.shape_cast %196 : vector<2x8x8x8xbf16> to vector<128x8xbf16>
    %c0_205 = arith.constant 0 : index
    %c32_206 = arith.constant 32 : index
    %198 = vector.load %arg11[%c0_205, %c32_206] : memref<128x72xbf16, #tpu.memory_space<vmem>>, vector<128x8xbf16>
    tpu.vector_store %arg11[%c0_205, %c32_206], %197 {strides = array<i32>} : memref<128x72xbf16, #tpu.memory_space<vmem>>, vector<128x8xbf16>,
    %c0_207 = arith.constant 0 : index
    %c1_208 = arith.constant 1 : index
    %c9_209 = arith.constant 9 : index
    %c0_210 = arith.constant 0 : index
    %199 = vector.load %arg10[%c0_207, %c1_208, %c9_209, %c0_210] : memref<2x10x18x8xbf16, #tpu.memory_space<vmem>>, vector<2x8x8x8xbf16>
    %200 = vector.shape_cast %199 : vector<2x8x8x8xbf16> to vector<128x8xbf16>
    %c0_211 = arith.constant 0 : index
    %c40 = arith.constant 40 : index
    %201 = vector.load %arg11[%c0_211, %c40] : memref<128x72xbf16, #tpu.memory_space<vmem>>, vector<128x8xbf16>
    tpu.vector_store %arg11[%c0_211, %c40], %200 {strides = array<i32>} : memref<128x72xbf16, #tpu.memory_space<vmem>>, vector<128x8xbf16>,
    %c0_212 = arith.constant 0 : index
    %c2_213 = arith.constant 2 : index
    %c7_214 = arith.constant 7 : index
    %c0_215 = arith.constant 0 : index
    %202 = vector.load %arg10[%c0_212, %c2_213, %c7_214, %c0_215] : memref<2x10x18x8xbf16, #tpu.memory_space<vmem>>, vector<2x8x8x8xbf16>
    %203 = vector.shape_cast %202 : vector<2x8x8x8xbf16> to vector<128x8xbf16>
    %c0_216 = arith.constant 0 : index
    %c48 = arith.constant 48 : index
    %204 = vector.load %arg11[%c0_216, %c48] : memref<128x72xbf16, #tpu.memory_space<vmem>>, vector<128x8xbf16>
    tpu.vector_store %arg11[%c0_216, %c48], %203 {strides = array<i32>} : memref<128x72xbf16, #tpu.memory_space<vmem>>, vector<128x8xbf16>,
    %c0_217 = arith.constant 0 : index
    %c2_218 = arith.constant 2 : index
    %c8_219 = arith.constant 8 : index
    %c0_220 = arith.constant 0 : index
    %205 = vector.load %arg10[%c0_217, %c2_218, %c8_219, %c0_220] : memref<2x10x18x8xbf16, #tpu.memory_space<vmem>>, vector<2x8x8x8xbf16>
    %206 = vector.shape_cast %205 : vector<2x8x8x8xbf16> to vector<128x8xbf16>
    %c0_221 = arith.constant 0 : index
    %c56 = arith.constant 56 : index
    %207 = vector.load %arg11[%c0_221, %c56] : memref<128x72xbf16, #tpu.memory_space<vmem>>, vector<128x8xbf16>
    tpu.vector_store %arg11[%c0_221, %c56], %206 {strides = array<i32>} : memref<128x72xbf16, #tpu.memory_space<vmem>>, vector<128x8xbf16>,
    %c0_222 = arith.constant 0 : index
    %c2_223 = arith.constant 2 : index
    %c9_224 = arith.constant 9 : index
    %c0_225 = arith.constant 0 : index
    %208 = vector.load %arg10[%c0_222, %c2_223, %c9_224, %c0_225] : memref<2x10x18x8xbf16, #tpu.memory_space<vmem>>, vector<2x8x8x8xbf16>
    %209 = vector.shape_cast %208 : vector<2x8x8x8xbf16> to vector<128x8xbf16>
    %c0_226 = arith.constant 0 : index
    %c64 = arith.constant 64 : index
    %210 = vector.load %arg11[%c0_226, %c64] : memref<128x72xbf16, #tpu.memory_space<vmem>>, vector<128x8xbf16>
    tpu.vector_store %arg11[%c0_226, %c64], %209 {strides = array<i32>} : memref<128x72xbf16, #tpu.memory_space<vmem>>, vector<128x8xbf16>,
    %c0_227 = arith.constant 0 : index
    %c0_228 = arith.constant 0 : index
    %211 = vector.load %arg11[%c0_227, %c0_228] : memref<128x72xbf16, #tpu.memory_space<vmem>>, vector<128x72xbf16>
    %c0_229 = arith.constant 0 : index
    %c0_230 = arith.constant 0 : index
    %212 = vector.load %arg6[%c0_229, %c0_230] : memref<72x8xbf16, #tpu.memory_space<vmem>>, vector<72x8xbf16>
    %cst_231 = arith.constant dense<0.000000e+00> : vector<128x8xf32>
    %213 = tpu.matmul %211, %212, %cst_231 {dimension_numbers = #tpu.dot_dimension_numbers<[1], [0], [0], [1], [0, 0, 1, 1], [], []>} : vector<128x72xbf16>, vector<72x8xbf16>, vector<128x8xf32> -> vector<128x8xf32>
    %cst_232 = arith.constant 0.000000e+00 : f32
    %214 = vector.broadcast %cst_232 : f32 to vector<2x8x8x8xf32>
    %c0_233 = arith.constant 0 : index
    %c0_234 = arith.constant 0 : index
    %c0_235 = arith.constant 0 : index
    %c0_236 = arith.constant 0 : index
    %215 = vector.load %arg7[%c0_233, %c0_234, %c0_235, %c0_236] : memref<2x8x8x8xf32, #tpu.memory_space<vmem>>, vector<2x8x8x8xf32>
    tpu.vector_store %arg7[%c0_233, %c0_234, %c0_235, %c0_236], %214 {strides = array<i32>} : memref<2x8x8x8xf32, #tpu.memory_space<vmem>>, vector<2x8x8x8xf32>,
    %216 = vector.shape_cast %114 : vector<128x4xf32> to vector<2x8x8x4xf32>
    %c0_237 = arith.constant 0 : index
    %c0_238 = arith.constant 0 : index
    %c0_239 = arith.constant 0 : index
    %c2_240 = arith.constant 2 : index
    %217 = vector.load %arg7[%c0_237, %c0_238, %c0_239, %c2_240] : memref<2x8x8x8xf32, #tpu.memory_space<vmem>>, vector<2x8x8x4xf32>
    tpu.vector_store %arg7[%c0_237, %c0_238, %c0_239, %c2_240], %216 {strides = array<i32>} : memref<2x8x8x8xf32, #tpu.memory_space<vmem>>, vector<2x8x8x4xf32>,
    %c0_241 = arith.constant 0 : index
    %c0_242 = arith.constant 0 : index
    %c0_243 = arith.constant 0 : index
    %c0_244 = arith.constant 0 : index
    %218 = vector.load %arg7[%c0_241, %c0_242, %c0_243, %c0_244] : memref<2x8x8x8xf32, #tpu.memory_space<vmem>>, vector<2x8x8x8xf32>
    %219 = vector.shape_cast %213 : vector<128x8xf32> to vector<2x8x8x8xf32>
    %220 = arith.addf %218, %219 : vector<2x8x8x8xf32>
    %c0_245 = arith.constant 0 : index
    %c0_246 = arith.constant 0 : index
    %c0_247 = arith.constant 0 : index
    %c0_248 = arith.constant 0 : index
    %221 = vector.load %arg7[%c0_245, %c0_246, %c0_247, %c0_248] : memref<2x8x8x8xf32, #tpu.memory_space<vmem>>, vector<2x8x8x8xf32>
    tpu.vector_store %arg7[%c0_245, %c0_246, %c0_247, %c0_248], %220 {strides = array<i32>} : memref<2x8x8x8xf32, #tpu.memory_space<vmem>>, vector<2x8x8x8xf32>,
    return
  }
}

</mosaic_0001>

<llo_original>
// kernel: tpu_custom_call.1
$region0: #{tpu_custom_call.1}
  #allocation0 [shape = 'u32[]', space=smem, size = 0x4, offset = 0x4, fixed_abs, tag = 'smem constant byte address 0x4 - core index']
  #allocation1 [shape = 'u32[144,128]{1,0:T(1,128)}', space=vmem, size = 0x12000, scoped, tag = 'internal scratch']
  #allocation2 [shape = 'bf16[4,2,10,18,4]{4,3,2,1,0:T(8,128)(2,1)}', space=vmem, size = 0x78000, scoped, tag = 'scratch operand']
  #allocation3 [shape = 'bf16[128,36]{1,0:T(8,128)(2,1)}', space=vmem, size = 0x8000, scoped, tag = 'scratch operand']
  #allocation4 [shape = 'bf16[2,10,18,8]{3,2,1,0:T(8,128)(2,1)}', space=vmem, size = 0x1e000, scoped, tag = 'scratch operand']
  #allocation5 [shape = 'bf16[128,72]{1,0:T(8,128)(2,1)}', space=vmem, size = 0x8000, scoped, tag = 'scratch operand']
  %s0 = inlined_call_operand.vmem [shape: f32[4,2,8,8,4], index: 0, kind: input, shape index: {}]
  %s1 = inlined_call_operand.vmem [shape: f32[1,4], index: 1, kind: input, shape index: {}]
  %s2 = inlined_call_operand.vmem [shape: f32[1,4], index: 2, kind: input, shape index: {}]
  %s3 = inlined_call_operand.vmem [shape: f32[1,8], index: 3, kind: input, shape index: {}]
  %s4 = inlined_call_operand.vmem [shape: f32[1,8], index: 4, kind: input, shape index: {}]
  %s5 = inlined_call_operand.vmem [shape: bf16[36,8], index: 5, kind: input, shape index: {}]
  %s6 = inlined_call_operand.vmem [shape: bf16[72,8], index: 6, kind: input, shape index: {}]
  %s7 = inlined_call_operand.hbm [shape: f32[2,8,8,8], index: 7, kind: output, shape index: {}]
  %s8 = sld [smem:[#allocation0]]
  $region38: #{tpu_custom_call.1} parent=0
    _
  %s10 = ssub.s32 1, %s8
  %s11 = scalar_select 0, %s10, %s8
  $region1: #{tpu_custom_call.1} parent=0
    #allocation6 [shape = 'u8[65536]{0}', space=vmem, size = 0x10000, scoped, tag = 'output window, operand 0, single buffered']
    #allocation7 [shape = 's32[1]{0}', space=sflag, size = 0x4, scoped, tag = 'scoped memory for tpu_custom_call.1']
    %12 = vsyncpa [#allocation7], 0
    // Predicated region
    $region2: #{tpu_custom_call.1} parent=1 // pred_check
      _
    $region3: #{tpu_custom_call.1} parent=1 // pred_check_branch
      %14 = sbr.rel (0) target = $region5
    $region4: #{tpu_custom_call.1} parent=1 // pred_region
      _
    $region5: #{tpu_custom_call.1} parent=1 // pred_fallthru
      _
    // Predicated region
    $region6: #{tpu_custom_call.1} parent=1 // pred_check
      _
    $region7: #{tpu_custom_call.1} parent=1 // pred_check_branch
      %16 = sbr.rel (0) target = $region9
    $region8: #{tpu_custom_call.1} parent=1 // pred_region
      _
    $region9: #{tpu_custom_call.1} parent=1 // pred_fallthru
      _
    // Predicated region
    $region10: #{tpu_custom_call.1} parent=1 // pred_check
      _
    $region11: #{tpu_custom_call.1} parent=1 // pred_check_branch
      %18 = sbr.rel (0) target = $region13
    $region12: #{tpu_custom_call.1} parent=1 // pred_region
      _
    $region13: #{tpu_custom_call.1} parent=1 // pred_fallthru
      _
    // Predicated region
    $region14: #{tpu_custom_call.1} parent=1 // pred_check
      _
    $region15: #{tpu_custom_call.1} parent=1 // pred_check_branch
      %20 = sbr.rel (0) target = $region17
    $region16: #{tpu_custom_call.1} parent=1 // pred_region
      _
    $region17: #{tpu_custom_call.1} parent=1 // pred_fallthru
      _
    // Predicated region
    $region18: #{tpu_custom_call.1} parent=1 // pred_check
      _
    $region19: #{tpu_custom_call.1} parent=1 // pred_check_branch
      %22 = sbr.rel (0) target = $region21
    $region20: #{tpu_custom_call.1} parent=1 // pred_region
      _
    $region21: #{tpu_custom_call.1} parent=1 // pred_fallthru
      _
    // Predicated region
    $region22: #{tpu_custom_call.1} parent=1 // pred_check
      _
    $region23: #{tpu_custom_call.1} parent=1 // pred_check_branch
      %24 = sbr.rel (0) target = $region25
    $region24: #{tpu_custom_call.1} parent=1 // pred_region
      _
    $region25: #{tpu_custom_call.1} parent=1 // pred_fallthru
      _
    // Predicated region
    $region26: #{tpu_custom_call.1} parent=1 // pred_check
      _
    $region27: #{tpu_custom_call.1} parent=1 // pred_check_branch
      %26 = sbr.rel (0) target = $region29
    $region28: #{tpu_custom_call.1} parent=1 // pred_region
      _
    $region29: #{tpu_custom_call.1} parent=1 // pred_fallthru
      _
    %v28 = vld [vmem:[%s0] sm:$0xff]
    %v29 = vld [vmem:[%s0 + $0x8] sm:$0xff]
    %v30 = vld [vmem:[%s0 + $0x10] sm:$0xff]
    %v31 = vld [vmem:[%s0 + $0x18] sm:$0xff]
    %v32 = vld [vmem:[%s0 + $0x20] sm:$0xff]
    %v33 = vld [vmem:[%s0 + $0x28] sm:$0xff]
    %v34 = vld [vmem:[%s0 + $0x30] sm:$0xff]
    %v35 = vld [vmem:[%s0 + $0x38] sm:$0xff]
    %v36 = vld [vmem:[%s0 + $0x40] sm:$0xff]
    %v37 = vld [vmem:[%s0 + $0x48] sm:$0xff]
    %v38 = vld [vmem:[%s0 + $0x50] sm:$0xff]
    %v39 = vld [vmem:[%s0 + $0x58] sm:$0xff]
    %v40 = vld [vmem:[%s0 + $0x60] sm:$0xff]
    %v41 = vld [vmem:[%s0 + $0x68] sm:$0xff]
    %v42 = vld [vmem:[%s0 + $0x70] sm:$0xff]
    %v43 = vld [vmem:[%s0 + $0x78] sm:$0xff]
    %s44 = scalar_lea.vmem %s0, 128
    %v45 = vld [vmem:[%s44] sm:$0xff]
    %v46 = vld [vmem:[%s44 + $0x8] sm:$0xff]
    %v47 = vld [vmem:[%s44 + $0x10] sm:$0xff]
    %v48 = vld [vmem:[%s44 + $0x18] sm:$0xff]
    %v49 = vld [vmem:[%s44 + $0x20] sm:$0xff]
    %v50 = vld [vmem:[%s44 + $0x28] sm:$0xff]
    %v51 = vld [vmem:[%s44 + $0x30] sm:$0xff]
    %v52 = vld [vmem:[%s44 + $0x38] sm:$0xff]
    %v53 = vld [vmem:[%s44 + $0x40] sm:$0xff]
    %v54 = vld [vmem:[%s44 + $0x48] sm:$0xff]
    %v55 = vld [vmem:[%s44 + $0x50] sm:$0xff]
    %v56 = vld [vmem:[%s44 + $0x58] sm:$0xff]
    %v57 = vld [vmem:[%s44 + $0x60] sm:$0xff]
    %v58 = vld [vmem:[%s44 + $0x68] sm:$0xff]
    %v59 = vld [vmem:[%s44 + $0x70] sm:$0xff]
    %v60 = vld [vmem:[%s44 + $0x78] sm:$0xff]
    %s61 = scalar_lea.vmem %s0, 256
    %v62 = vld [vmem:[%s61] sm:$0xff]
    %v63 = vld [vmem:[%s61 + $0x8] sm:$0xff]
    %v64 = vld [vmem:[%s61 + $0x10] sm:$0xff]
    %v65 = vld [vmem:[%s61 + $0x18] sm:$0xff]
    %v66 = vld [vmem:[%s61 + $0x20] sm:$0xff]
    %v67 = vld [vmem:[%s61 + $0x28] sm:$0xff]
    %v68 = vld [vmem:[%s61 + $0x30] sm:$0xff]
    %v69 = vld [vmem:[%s61 + $0x38] sm:$0xff]
    %v70 = vld [vmem:[%s61 + $0x40] sm:$0xff]
    %v71 = vld [vmem:[%s61 + $0x48] sm:$0xff]
    %v72 = vld [vmem:[%s61 + $0x50] sm:$0xff]
    %v73 = vld [vmem:[%s61 + $0x58] sm:$0xff]
    %v74 = vld [vmem:[%s61 + $0x60] sm:$0xff]
    %v75 = vld [vmem:[%s61 + $0x68] sm:$0xff]
    %v76 = vld [vmem:[%s61 + $0x70] sm:$0xff]
    %v77 = vld [vmem:[%s61 + $0x78] sm:$0xff]
    %s78 = scalar_lea.vmem %s0, 384
    %v79 = vld [vmem:[%s78] sm:$0xff]
    %v80 = vld [vmem:[%s78 + $0x8] sm:$0xff]
    %v81 = vld [vmem:[%s78 + $0x10] sm:$0xff]
    %v82 = vld [vmem:[%s78 + $0x18] sm:$0xff]
    %v83 = vld [vmem:[%s78 + $0x20] sm:$0xff]
    %v84 = vld [vmem:[%s78 + $0x28] sm:$0xff]
    %v85 = vld [vmem:[%s78 + $0x30] sm:$0xff]
    %v86 = vld [vmem:[%s78 + $0x38] sm:$0xff]
    %v87 = vld [vmem:[%s78 + $0x40] sm:$0xff]
    %v88 = vld [vmem:[%s78 + $0x48] sm:$0xff]
    %v89 = vld [vmem:[%s78 + $0x50] sm:$0xff]
    %v90 = vld [vmem:[%s78 + $0x58] sm:$0xff]
    %v91 = vld [vmem:[%s78 + $0x60] sm:$0xff]
    %v92 = vld [vmem:[%s78 + $0x68] sm:$0xff]
    %v93 = vld [vmem:[%s78 + $0x70] sm:$0xff]
    %v94 = vld [vmem:[%s78 + $0x78] sm:$0xff]
    %vm95 = vcmask 31744
    %v96 = vsel %vm95, %v28, 0.0
    %v97 = vsel %vm95, %v29, 0.0
    %v98 = vadd.f32 %v96, %v97
    %v99 = vsel %vm95, %v30, 0.0
    %v100 = vadd.f32 %v98, %v99
    %v101 = vsel %vm95, %v31, 0.0
    %v102 = vadd.f32 %v100, %v101
    %v103 = vsel %vm95, %v32, 0.0
    %v104 = vadd.f32 %v102, %v103
    %v105 = vsel %vm95, %v33, 0.0
    %v106 = vadd.f32 %v104, %v105
    %v107 = vsel %vm95, %v34, 0.0
    %v108 = vadd.f32 %v106, %v107
    %v109 = vsel %vm95, %v35, 0.0
    %v110 = vadd.f32 %v108, %v109
    %v111 = vsel %vm95, %v36, 0.0
    %v112 = vadd.f32 %v110, %v111
    %v113 = vsel %vm95, %v37, 0.0
    %v114 = vadd.f32 %v112, %v113
    %v115 = vsel %vm95, %v38, 0.0
    %v116 = vadd.f32 %v114, %v115
    %v117 = vsel %vm95, %v39, 0.0
    %v118 = vadd.f32 %v116, %v117
    %v119 = vsel %vm95, %v40, 0.0
    %v120 = vadd.f32 %v118, %v119
    %v121 = vsel %vm95, %v41, 0.0
    %v122 = vadd.f32 %v120, %v121
    %v123 = vsel %vm95, %v42, 0.0
    %v124 = vadd.f32 %v122, %v123
    %v125 = vsel %vm95, %v43, 0.0
    %v126 = vadd.f32 %v124, %v125
    %v127 = vrot.slane %v126, 4
    %v128 = vadd.f32 %v126, %v127
    %v129 = vrot.slane %v128, 2
    %v130 = vadd.f32 %v128, %v129
    %v131 = vrot.slane %v130, 1
    %v132 = vadd.f32 %v130, %v131
    %v133 = vadd.f32 %v132, 0.0
    %v134 = vmul.f32 %v28, %v28
    %v135 = vmul.f32 %v29, %v29
    %v136 = vmul.f32 %v30, %v30
    %v137 = vmul.f32 %v31, %v31
    %v138 = vmul.f32 %v32, %v32
    %v139 = vmul.f32 %v33, %v33
    %v140 = vmul.f32 %v34, %v34
    %v141 = vmul.f32 %v35, %v35
    %v142 = vmul.f32 %v36, %v36
    %v143 = vmul.f32 %v37, %v37
    %v144 = vmul.f32 %v38, %v38
    %v145 = vmul.f32 %v39, %v39
    %v146 = vmul.f32 %v40, %v40
    %v147 = vmul.f32 %v41, %v41
    %v148 = vmul.f32 %v42, %v42
    %v149 = vmul.f32 %v43, %v43
    %v150 = vsel %vm95, %v134, 0.0
    %v151 = vsel %vm95, %v135, 0.0
    %v152 = vadd.f32 %v150, %v151
    %v153 = vsel %vm95, %v136, 0.0
    %v154 = vadd.f32 %v152, %v153
    %v155 = vsel %vm95, %v137, 0.0
    %v156 = vadd.f32 %v154, %v155
    %v157 = vsel %vm95, %v138, 0.0
    %v158 = vadd.f32 %v156, %v157
    %v159 = vsel %vm95, %v139, 0.0
    %v160 = vadd.f32 %v158, %v159
    %v161 = vsel %vm95, %v140, 0.0
    %v162 = vadd.f32 %v160, %v161
    %v163 = vsel %vm95, %v141, 0.0
    %v164 = vadd.f32 %v162, %v163
    %v165 = vsel %vm95, %v142, 0.0
    %v166 = vadd.f32 %v164, %v165
    %v167 = vsel %vm95, %v143, 0.0
    %v168 = vadd.f32 %v166, %v167
    %v169 = vsel %vm95, %v144, 0.0
    %v170 = vadd.f32 %v168, %v169
    %v171 = vsel %vm95, %v145, 0.0
    %v172 = vadd.f32 %v170, %v171
    %v173 = vsel %vm95, %v146, 0.0
    %v174 = vadd.f32 %v172, %v173
    %v175 = vsel %vm95, %v147, 0.0
    %v176 = vadd.f32 %v174, %v175
    %v177 = vsel %vm95, %v148, 0.0
    %v178 = vadd.f32 %v176, %v177
    %v179 = vsel %vm95, %v149, 0.0
    %v180 = vadd.f32 %v178, %v179
    %v181 = vrot.slane %v180, 4
    %v182 = vadd.f32 %v180, %v181
    %v183 = vrot.slane %v182, 2
    %v184 = vadd.f32 %v182, %v183
    %v185 = vrot.slane %v184, 1
    %v186 = vadd.f32 %v184, %v185
    %v187 = vadd.f32 %v186, 0.0
    %v188 = vsel %vm95, %v45, 0.0
    %v189 = vsel %vm95, %v46, 0.0
    %v190 = vadd.f32 %v188, %v189
    %v191 = vsel %vm95, %v47, 0.0
    %v192 = vadd.f32 %v190, %v191
    %v193 = vsel %vm95, %v48, 0.0
    %v194 = vadd.f32 %v192, %v193
    %v195 = vsel %vm95, %v49, 0.0
    %v196 = vadd.f32 %v194, %v195
    %v197 = vsel %vm95, %v50, 0.0
    %v198 = vadd.f32 %v196, %v197
    %v199 = vsel %vm95, %v51, 0.0
    %v200 = vadd.f32 %v198, %v199
    %v201 = vsel %vm95, %v52, 0.0
    %v202 = vadd.f32 %v200, %v201
    %v203 = vsel %vm95, %v53, 0.0
    %v204 = vadd.f32 %v202, %v203
    %v205 = vsel %vm95, %v54, 0.0
    %v206 = vadd.f32 %v204, %v205
    %v207 = vsel %vm95, %v55, 0.0
    %v208 = vadd.f32 %v206, %v207
    %v209 = vsel %vm95, %v56, 0.0
    %v210 = vadd.f32 %v208, %v209
    %v211 = vsel %vm95, %v57, 0.0
    %v212 = vadd.f32 %v210, %v211
    %v213 = vsel %vm95, %v58, 0.0
    %v214 = vadd.f32 %v212, %v213
    %v215 = vsel %vm95, %v59, 0.0
    %v216 = vadd.f32 %v214, %v215
    %v217 = vsel %vm95, %v60, 0.0
    %v218 = vadd.f32 %v216, %v217
    %v219 = vrot.slane %v218, 4
    %v220 = vadd.f32 %v218, %v219
    %v221 = vrot.slane %v220, 2
    %v222 = vadd.f32 %v220, %v221
    %v223 = vrot.slane %v222, 1
    %v224 = vadd.f32 %v222, %v223
    %v225 = vadd.f32 %v133, %v224
    %v226 = vmul.f32 %v45, %v45
    %v227 = vmul.f32 %v46, %v46
    %v228 = vmul.f32 %v47, %v47
    %v229 = vmul.f32 %v48, %v48
    %v230 = vmul.f32 %v49, %v49
    %v231 = vmul.f32 %v50, %v50
    %v232 = vmul.f32 %v51, %v51
    %v233 = vmul.f32 %v52, %v52
    %v234 = vmul.f32 %v53, %v53
    %v235 = vmul.f32 %v54, %v54
    %v236 = vmul.f32 %v55, %v55
    %v237 = vmul.f32 %v56, %v56
    %v238 = vmul.f32 %v57, %v57
    %v239 = vmul.f32 %v58, %v58
    %v240 = vmul.f32 %v59, %v59
    %v241 = vmul.f32 %v60, %v60
    %v242 = vsel %vm95, %v226, 0.0
    %v243 = vsel %vm95, %v227, 0.0
    %v244 = vadd.f32 %v242, %v243
    %v245 = vsel %vm95, %v228, 0.0
    %v246 = vadd.f32 %v244, %v245
    %v247 = vsel %vm95, %v229, 0.0
    %v248 = vadd.f32 %v246, %v247
    %v249 = vsel %vm95, %v230, 0.0
    %v250 = vadd.f32 %v248, %v249
    %v251 = vsel %vm95, %v231, 0.0
    %v252 = vadd.f32 %v250, %v251
    %v253 = vsel %vm95, %v232, 0.0
    %v254 = vadd.f32 %v252, %v253
    %v255 = vsel %vm95, %v233, 0.0
    %v256 = vadd.f32 %v254, %v255
    %v257 = vsel %vm95, %v234, 0.0
    %v258 = vadd.f32 %v256, %v257
    %v259 = vsel %vm95, %v235, 0.0
    %v260 = vadd.f32 %v258, %v259
    %v261 = vsel %vm95, %v236, 0.0
    %v262 = vadd.f32 %v260, %v261
    %v263 = vsel %vm95, %v237, 0.0
    %v264 = vadd.f32 %v262, %v263
    %v265 = vsel %vm95, %v238, 0.0
    %v266 = vadd.f32 %v264, %v265
    %v267 = vsel %vm95, %v239, 0.0
    %v268 = vadd.f32 %v266, %v267
    %v269 = vsel %vm95, %v240, 0.0
    %v270 = vadd.f32 %v268, %v269
    %v271 = vsel %vm95, %v241, 0.0
    %v272 = vadd.f32 %v270, %v271
    %v273 = vrot.slane %v272, 4
    %v274 = vadd.f32 %v272, %v273
    %v275 = vrot.slane %v274, 2
    %v276 = vadd.f32 %v274, %v275
    %v277 = vrot.slane %v276, 1
    %v278 = vadd.f32 %v276, %v277
    %v279 = vadd.f32 %v187, %v278
    %v280 = vsel %vm95, %v62, 0.0
    %v281 = vsel %vm95, %v63, 0.0
    %v282 = vadd.f32 %v280, %v281
    %v283 = vsel %vm95, %v64, 0.0
    %v284 = vadd.f32 %v282, %v283
    %v285 = vsel %vm95, %v65, 0.0
    %v286 = vadd.f32 %v284, %v285
    %v287 = vsel %vm95, %v66, 0.0
    %v288 = vadd.f32 %v286, %v287
    %v289 = vsel %vm95, %v67, 0.0
    %v290 = vadd.f32 %v288, %v289
    %v291 = vsel %vm95, %v68, 0.0
    %v292 = vadd.f32 %v290, %v291
    %v293 = vsel %vm95, %v69, 0.0
    %v294 = vadd.f32 %v292, %v293
    %v295 = vsel %vm95, %v70, 0.0
    %v296 = vadd.f32 %v294, %v295
    %v297 = vsel %vm95, %v71, 0.0
    %v298 = vadd.f32 %v296, %v297
    %v299 = vsel %vm95, %v72, 0.0
    %v300 = vadd.f32 %v298, %v299
    %v301 = vsel %vm95, %v73, 0.0
    %v302 = vadd.f32 %v300, %v301
    %v303 = vsel %vm95, %v74, 0.0
    %v304 = vadd.f32 %v302, %v303
    %v305 = vsel %vm95, %v75, 0.0
    %v306 = vadd.f32 %v304, %v305
    %v307 = vsel %vm95, %v76, 0.0
    %v308 = vadd.f32 %v306, %v307
    %v309 = vsel %vm95, %v77, 0.0
    %v310 = vadd.f32 %v308, %v309
    %v311 = vrot.slane %v310, 4
    %v312 = vadd.f32 %v310, %v311
    %v313 = vrot.slane %v312, 2
    %v314 = vadd.f32 %v312, %v313
    %v315 = vrot.slane %v314, 1
    %v316 = vadd.f32 %v314, %v315
    %v317 = vadd.f32 %v225, %v316
    %v318 = vmul.f32 %v62, %v62
    %v319 = vmul.f32 %v63, %v63
    %v320 = vmul.f32 %v64, %v64
    %v321 = vmul.f32 %v65, %v65
    %v322 = vmul.f32 %v66, %v66
    %v323 = vmul.f32 %v67, %v67
    %v324 = vmul.f32 %v68, %v68
    %v325 = vmul.f32 %v69, %v69
    %v326 = vmul.f32 %v70, %v70
    %v327 = vmul.f32 %v71, %v71
    %v328 = vmul.f32 %v72, %v72
    %v329 = vmul.f32 %v73, %v73
    %v330 = vmul.f32 %v74, %v74
    %v331 = vmul.f32 %v75, %v75
    %v332 = vmul.f32 %v76, %v76
    %v333 = vmul.f32 %v77, %v77
    %v334 = vsel %vm95, %v318, 0.0
    %v335 = vsel %vm95, %v319, 0.0
    %v336 = vadd.f32 %v334, %v335
    %v337 = vsel %vm95, %v320, 0.0
    %v338 = vadd.f32 %v336, %v337
    %v339 = vsel %vm95, %v321, 0.0
    %v340 = vadd.f32 %v338, %v339
    %v341 = vsel %vm95, %v322, 0.0
    %v342 = vadd.f32 %v340, %v341
    %v343 = vsel %vm95, %v323, 0.0
    %v344 = vadd.f32 %v342, %v343
    %v345 = vsel %vm95, %v324, 0.0
    %v346 = vadd.f32 %v344, %v345
    %v347 = vsel %vm95, %v325, 0.0
    %v348 = vadd.f32 %v346, %v347
    %v349 = vsel %vm95, %v326, 0.0
    %v350 = vadd.f32 %v348, %v349
    %v351 = vsel %vm95, %v327, 0.0
    %v352 = vadd.f32 %v350, %v351
    %v353 = vsel %vm95, %v328, 0.0
    %v354 = vadd.f32 %v352, %v353
    %v355 = vsel %vm95, %v329, 0.0
    %v356 = vadd.f32 %v354, %v355
    %v357 = vsel %vm95, %v330, 0.0
    %v358 = vadd.f32 %v356, %v357
    %v359 = vsel %vm95, %v331, 0.0
    %v360 = vadd.f32 %v358, %v359
    %v361 = vsel %vm95, %v332, 0.0
    %v362 = vadd.f32 %v360, %v361
    %v363 = vsel %vm95, %v333, 0.0
    %v364 = vadd.f32 %v362, %v363
    %v365 = vrot.slane %v364, 4
    %v366 = vadd.f32 %v364, %v365
    %v367 = vrot.slane %v366, 2
    %v368 = vadd.f32 %v366, %v367
    %v369 = vrot.slane %v368, 1
    %v370 = vadd.f32 %v368, %v369
    %v371 = vadd.f32 %v279, %v370
    %v372 = vsel %vm95, %v79, 0.0
    %v373 = vsel %vm95, %v80, 0.0
    %v374 = vadd.f32 %v372, %v373
    %v375 = vsel %vm95, %v81, 0.0
    %v376 = vadd.f32 %v374, %v375
    %v377 = vsel %vm95, %v82, 0.0
    %v378 = vadd.f32 %v376, %v377
    %v379 = vsel %vm95, %v83, 0.0
    %v380 = vadd.f32 %v378, %v379
    %v381 = vsel %vm95, %v84, 0.0
    %v382 = vadd.f32 %v380, %v381
    %v383 = vsel %vm95, %v85, 0.0
    %v384 = vadd.f32 %v382, %v383
    %v385 = vsel %vm95, %v86, 0.0
    %v386 = vadd.f32 %v384, %v385
    %v387 = vsel %vm95, %v87, 0.0
    %v388 = vadd.f32 %v386, %v387
    %v389 = vsel %vm95, %v88, 0.0
    %v390 = vadd.f32 %v388, %v389
    %v391 = vsel %vm95, %v89, 0.0
    %v392 = vadd.f32 %v390, %v391
    %v393 = vsel %vm95, %v90, 0.0
    %v394 = vadd.f32 %v392, %v393
    %v395 = vsel %vm95, %v91, 0.0
    %v396 = vadd.f32 %v394, %v395
    %v397 = vsel %vm95, %v92, 0.0
    %v398 = vadd.f32 %v396, %v397
    %v399 = vsel %vm95, %v93, 0.0
    %v400 = vadd.f32 %v398, %v399
    %v401 = vsel %vm95, %v94, 0.0
    %v402 = vadd.f32 %v400, %v401
    %v403 = vrot.slane %v402, 4
    %v404 = vadd.f32 %v402, %v403
    %v405 = vrot.slane %v404, 2
    %v406 = vadd.f32 %v404, %v405
    %v407 = vrot.slane %v406, 1
    %v408 = vadd.f32 %v406, %v407
    %v409 = vadd.f32 %v317, %v408
    %v410 = vmul.f32 %v79, %v79
    %v411 = vmul.f32 %v80, %v80
    %v412 = vmul.f32 %v81, %v81
    %v413 = vmul.f32 %v82, %v82
    %v414 = vmul.f32 %v83, %v83
    %v415 = vmul.f32 %v84, %v84
    %v416 = vmul.f32 %v85, %v85
    %v417 = vmul.f32 %v86, %v86
    %v418 = vmul.f32 %v87, %v87
    %v419 = vmul.f32 %v88, %v88
    %v420 = vmul.f32 %v89, %v89
    %v421 = vmul.f32 %v90, %v90
    %v422 = vmul.f32 %v91, %v91
    %v423 = vmul.f32 %v92, %v92
    %v424 = vmul.f32 %v93, %v93
    %v425 = vmul.f32 %v94, %v94
    %v426 = vsel %vm95, %v410, 0.0
    %v427 = vsel %vm95, %v411, 0.0
    %v428 = vadd.f32 %v426, %v427
    %v429 = vsel %vm95, %v412, 0.0
    %v430 = vadd.f32 %v428, %v429
    %v431 = vsel %vm95, %v413, 0.0
    %v432 = vadd.f32 %v430, %v431
    %v433 = vsel %vm95, %v414, 0.0
    %v434 = vadd.f32 %v432, %v433
    %v435 = vsel %vm95, %v415, 0.0
    %v436 = vadd.f32 %v434, %v435
    %v437 = vsel %vm95, %v416, 0.0
    %v438 = vadd.f32 %v436, %v437
    %v439 = vsel %vm95, %v417, 0.0
    %v440 = vadd.f32 %v438, %v439
    %v441 = vsel %vm95, %v418, 0.0
    %v442 = vadd.f32 %v440, %v441
    %v443 = vsel %vm95, %v419, 0.0
    %v444 = vadd.f32 %v442, %v443
    %v445 = vsel %vm95, %v420, 0.0
    %v446 = vadd.f32 %v444, %v445
    %v447 = vsel %vm95, %v421, 0.0
    %v448 = vadd.f32 %v446, %v447
    %v449 = vsel %vm95, %v422, 0.0
    %v450 = vadd.f32 %v448, %v449
    %v451 = vsel %vm95, %v423, 0.0
    %v452 = vadd.f32 %v450, %v451
    %v453 = vsel %vm95, %v424, 0.0
    %v454 = vadd.f32 %v452, %v453
    %v455 = vsel %vm95, %v425, 0.0
    %v456 = vadd.f32 %v454, %v455
    %v457 = vrot.slane %v456, 4
    %v458 = vadd.f32 %v456, %v457
    %v459 = vrot.slane %v458, 2
    %v460 = vadd.f32 %v458, %v459
    %v461 = vrot.slane %v460, 1
    %v462 = vadd.f32 %v460, %v461
    %v463 = vadd.f32 %v371, %v462
    %v464 = vrcp.pop 512.0
    %v465 = vmul.f32 %v409, %v464
    %v466 = vmul.f32 %v463, %v464
    %v467 = vmul.f32 %v465, %v465
    %v468 = vsub.f32 %v466, %v467
    %v469 = vmax.f32 %v468, 0.0
    %v470 = vld [vmem:[%s1] sm:$0x1]
    %v471 = vadd.f32 %v469, 1e-05
    %v472 = vrsqrt.pop %v471
    %v473 = vmul.f32 %v470, %v472
    %v474 = vld [vmem:[%s2] sm:$0x1]
    %v475 = vmul.f32 %v465, %v473
    %v476 = vsub.f32 %v474, %v475
    %vm477 = vcmask 27648
    %478 = vst.msk [vmem:[#allocation2] sm:$0xf] %vm477, 0
    %479 = vst.msk [vmem:[#allocation2 + $0x4] sm:$0xf] %vm477, 0
    %vm480 = vcmask 24576
    %481 = vst.msk [vmem:[#allocation2 + $0x8] sm:$0x1] %vm480, 0
    %482 = vst.msk [vmem:[#allocation2 + $0x78] sm:$0xf] %vm477, 0
    %483 = vst.msk [vmem:[#allocation2 + $0x7c] sm:$0xf] %vm477, 0
    %484 = vst.msk [vmem:[#allocation2 + $0x80] sm:$0x1] %vm480, 0
    %485 = vst.msk [vmem:[#allocation2 + $0xf0] sm:$0xf] %vm477, 0
    %486 = vst.msk [vmem:[#allocation2 + $0xf4] sm:$0xf] %vm477, 0
    %487 = vst.msk [vmem:[#allocation2 + $0xf8] sm:$0x1] %vm480, 0
    %488 = vst.msk [vmem:[#allocation2 + $0x168] sm:$0xf] %vm477, 0
    %489 = vst.msk [vmem:[#allocation2 + $0x16c] sm:$0xf] %vm477, 0
    %490 = vst.msk [vmem:[#allocation2 + $0x170] sm:$0x1] %vm480, 0
    %491 = vst.msk [vmem:[#allocation2 + $0x1e0] sm:$0xf] %vm477, 0
    %492 = vst.msk [vmem:[#allocation2 + $0x1e4] sm:$0xf] %vm477, 0
    %493 = vst.msk [vmem:[#allocation2 + $0x1e8] sm:$0x1] %vm480, 0
    %494 = vst.msk [vmem:[#allocation2 + $0x258] sm:$0xf] %vm477, 0
    %495 = vst.msk [vmem:[#allocation2 + $0x25c] sm:$0xf] %vm477, 0
    %496 = vst.msk [vmem:[#allocation2 + $0x260] sm:$0x1] %vm480, 0
    %497 = vst.msk [vmem:[#allocation2 + $0x2d0] sm:$0xf] %vm477, 0
    %498 = vst.msk [vmem:[#allocation2 + $0x2d4] sm:$0xf] %vm477, 0
    %499 = vst.msk [vmem:[#allocation2 + $0x2d8] sm:$0x1] %vm480, 0
    %500 = vst.msk [vmem:[#allocation2 + $0x348] sm:$0xf] %vm477, 0
    %501 = vst.msk [vmem:[#allocation2 + $0x34c] sm:$0xf] %vm477, 0
    %502 = vst.msk [vmem:[#allocation2 + $0x350] sm:$0x1] %vm480, 0
    %s503 = scalar_lea.vmem [#allocation2], 108
    %504 = vst.msk [vmem:[%s503] sm:$0xf] %vm477, 0
    %505 = vst.msk [vmem:[%s503 + $0x4] sm:$0xf] %vm477, 0
    %506 = vst.msk [vmem:[%s503 + $0x8] sm:$0x1] %vm480, 0
    %507 = vst.msk [vmem:[%s503 + $0x78] sm:$0xf] %vm477, 0
    %508 = vst.msk [vmem:[%s503 + $0x7c] sm:$0xf] %vm477, 0
    %509 = vst.msk [vmem:[%s503 + $0x80] sm:$0x1] %vm480, 0
    %510 = vst.msk [vmem:[%s503 + $0xf0] sm:$0xf] %vm477, 0
    %511 = vst.msk [vmem:[%s503 + $0xf4] sm:$0xf] %vm477, 0
    %512 = vst.msk [vmem:[%s503 + $0xf8] sm:$0x1] %vm480, 0
    %513 = vst.msk [vmem:[%s503 + $0x168] sm:$0xf] %vm477, 0
    %514 = vst.msk [vmem:[%s503 + $0x16c] sm:$0xf] %vm477, 0
    %515 = vst.msk [vmem:[%s503 + $0x170] sm:$0x1] %vm480, 0
    %516 = vst.msk [vmem:[%s503 + $0x1e0] sm:$0xf] %vm477, 0
    %517 = vst.msk [vmem:[%s503 + $0x1e4] sm:$0xf] %vm477, 0
    %518 = vst.msk [vmem:[%s503 + $0x1e8] sm:$0x1] %vm480, 0
    %519 = vst.msk [vmem:[%s503 + $0x258] sm:$0xf] %vm477, 0
    %520 = vst.msk [vmem:[%s503 + $0x25c] sm:$0xf] %vm477, 0
    %521 = vst.msk [vmem:[%s503 + $0x260] sm:$0x1] %vm480, 0
    %522 = vst.msk [vmem:[%s503 + $0x2d0] sm:$0xf] %vm477, 0
    %523 = vst.msk [vmem:[%s503 + $0x2d4] sm:$0xf] %vm477, 0
    %524 = vst.msk [vmem:[%s503 + $0x2d8] sm:$0x1] %vm480, 0
    %525 = vst.msk [vmem:[%s503 + $0x348] sm:$0xf] %vm477, 0
    %526 = vst.msk [vmem:[%s503 + $0x34c] sm:$0xf] %vm477, 0
    %527 = vst.msk [vmem:[%s503 + $0x350] sm:$0x1] %vm480, 0
    %s528 = scalar_lea.vmem [#allocation2], 12
    %vm529 = vcmask 27651
    %vm530 = vsmask.f32 7950
    %vm531 = vmand %vm529, %vm530
    %v532 = vld [vmem:[%s528] sm:$0x8]
    %v533 = vsel %vm531, 0, %v532
    %534 = vst [vmem:[%s528] sm:$0x8] %v533
    %v535 = vld [vmem:[%s528 + $0xc] sm:$0x8]
    %v536 = vsel %vm531, 0, %v535
    %537 = vst [vmem:[%s528 + $0xc] sm:$0x8] %v536
    %v538 = vld [vmem:[%s528 + $0x18] sm:$0x8]
    %v539 = vsel %vm531, 0, %v538
    %540 = vst [vmem:[%s528 + $0x18] sm:$0x8] %v539
    %v541 = vld [vmem:[%s528 + $0x24] sm:$0x8]
    %v542 = vsel %vm531, 0, %v541
    %543 = vst [vmem:[%s528 + $0x24] sm:$0x8] %v542
    %v544 = vld [vmem:[%s528 + $0x30] sm:$0x8]
    %v545 = vsel %vm531, 0, %v544
    %546 = vst [vmem:[%s528 + $0x30] sm:$0x8] %v545
    %v547 = vld [vmem:[%s528 + $0x3c] sm:$0x8]
    %v548 = vsel %vm531, 0, %v547
    %549 = vst [vmem:[%s528 + $0x3c] sm:$0x8] %v548
    %v550 = vld [vmem:[%s528 + $0x48] sm:$0x8]
    %v551 = vsel %vm531, 0, %v550
    %552 = vst [vmem:[%s528 + $0x48] sm:$0x8] %v551
    %v553 = vld [vmem:[%s528 + $0x54] sm:$0x8]
    %v554 = vsel %vm531, 0, %v553
    %555 = vst [vmem:[%s528 + $0x54] sm:$0x8] %v554
    %v556 = vld [vmem:[%s528 + $0x78] sm:$0x8]
    %v557 = vsel %vm531, 0, %v556
    %558 = vst [vmem:[%s528 + $0x78] sm:$0x8] %v557
    %v559 = vld [vmem:[%s528 + $0x84] sm:$0x8]
    %v560 = vsel %vm531, 0, %v559
    %561 = vst [vmem:[%s528 + $0x84] sm:$0x8] %v560
    %v562 = vld [vmem:[%s528 + $0x90] sm:$0x8]
    %v563 = vsel %vm531, 0, %v562
    %564 = vst [vmem:[%s528 + $0x90] sm:$0x8] %v563
    %v565 = vld [vmem:[%s528 + $0x9c] sm:$0x8]
    %v566 = vsel %vm531, 0, %v565
    %567 = vst [vmem:[%s528 + $0x9c] sm:$0x8] %v566
    %v568 = vld [vmem:[%s528 + $0xa8] sm:$0x8]
    %v569 = vsel %vm531, 0, %v568
    %570 = vst [vmem:[%s528 + $0xa8] sm:$0x8] %v569
    %v571 = vld [vmem:[%s528 + $0xb4] sm:$0x8]
    %v572 = vsel %vm531, 0, %v571
    %573 = vst [vmem:[%s528 + $0xb4] sm:$0x8] %v572
    %v574 = vld [vmem:[%s528 + $0xc0] sm:$0x8]
    %v575 = vsel %vm531, 0, %v574
    %576 = vst [vmem:[%s528 + $0xc0] sm:$0x8] %v575
    %v577 = vld [vmem:[%s528 + $0xcc] sm:$0x8]
    %v578 = vsel %vm531, 0, %v577
    %579 = vst [vmem:[%s528 + $0xcc] sm:$0x8] %v578
    %v580 = vld [vmem:[%s528 + $0xf0] sm:$0x8]
    %v581 = vsel %vm531, 0, %v580
    %582 = vst [vmem:[%s528 + $0xf0] sm:$0x8] %v581
    %v583 = vld [vmem:[%s528 + $0xfc] sm:$0x8]
    %v584 = vsel %vm531, 0, %v583
    %585 = vst [vmem:[%s528 + $0xfc] sm:$0x8] %v584
    %v586 = vld [vmem:[%s528 + $0x108] sm:$0x8]
    %v587 = vsel %vm531, 0, %v586
    %588 = vst [vmem:[%s528 + $0x108] sm:$0x8] %v587
    %v589 = vld [vmem:[%s528 + $0x114] sm:$0x8]
    %v590 = vsel %vm531, 0, %v589
    %591 = vst [vmem:[%s528 + $0x114] sm:$0x8] %v590
    %v592 = vld [vmem:[%s528 + $0x120] sm:$0x8]
    %v593 = vsel %vm531, 0, %v592
    %594 = vst [vmem:[%s528 + $0x120] sm:$0x8] %v593
    %v595 = vld [vmem:[%s528 + $0x12c] sm:$0x8]
    %v596 = vsel %vm531, 0, %v595
    %597 = vst [vmem:[%s528 + $0x12c] sm:$0x8] %v596
    %v598 = vld [vmem:[%s528 + $0x138] sm:$0x8]
    %v599 = vsel %vm531, 0, %v598
    %600 = vst [vmem:[%s528 + $0x138] sm:$0x8] %v599
    %v601 = vld [vmem:[%s528 + $0x144] sm:$0x8]
    %v602 = vsel %vm531, 0, %v601
    %603 = vst [vmem:[%s528 + $0x144] sm:$0x8] %v602
    %v604 = vld [vmem:[%s528 + $0x168] sm:$0x8]
    %v605 = vsel %vm531, 0, %v604
    %606 = vst [vmem:[%s528 + $0x168] sm:$0x8] %v605
    %v607 = vld [vmem:[%s528 + $0x174] sm:$0x8]
    %v608 = vsel %vm531, 0, %v607
    %609 = vst [vmem:[%s528 + $0x174] sm:$0x8] %v608
    %v610 = vld [vmem:[%s528 + $0x180] sm:$0x8]
    %v611 = vsel %vm531, 0, %v610
    %612 = vst [vmem:[%s528 + $0x180] sm:$0x8] %v611
    %v613 = vld [vmem:[%s528 + $0x18c] sm:$0x8]
    %v614 = vsel %vm531, 0, %v613
    %615 = vst [vmem:[%s528 + $0x18c] sm:$0x8] %v614
    %v616 = vld [vmem:[%s528 + $0x198] sm:$0x8]
    %v617 = vsel %vm531, 0, %v616
    %618 = vst [vmem:[%s528 + $0x198] sm:$0x8] %v617
    %v619 = vld [vmem:[%s528 + $0x1a4] sm:$0x8]
    %v620 = vsel %vm531, 0, %v619
    %621 = vst [vmem:[%s528 + $0x1a4] sm:$0x8] %v620
    %v622 = vld [vmem:[%s528 + $0x1b0] sm:$0x8]
    %v623 = vsel %vm531, 0, %v622
    %624 = vst [vmem:[%s528 + $0x1b0] sm:$0x8] %v623
    %v625 = vld [vmem:[%s528 + $0x1bc] sm:$0x8]
    %v626 = vsel %vm531, 0, %v625
    %627 = vst [vmem:[%s528 + $0x1bc] sm:$0x8] %v626
    %v628 = vld [vmem:[%s528 + $0x1e0] sm:$0x8]
    %v629 = vsel %vm531, 0, %v628
    %630 = vst [vmem:[%s528 + $0x1e0] sm:$0x8] %v629
    %v631 = vld [vmem:[%s528 + $0x1ec] sm:$0x8]
    %v632 = vsel %vm531, 0, %v631
    %633 = vst [vmem:[%s528 + $0x1ec] sm:$0x8] %v632
    %v634 = vld [vmem:[%s528 + $0x1f8] sm:$0x8]
    %v635 = vsel %vm531, 0, %v634
    %636 = vst [vmem:[%s528 + $0x1f8] sm:$0x8] %v635
    %v637 = vld [vmem:[%s528 + $0x204] sm:$0x8]
    %v638 = vsel %vm531, 0, %v637
    %639 = vst [vmem:[%s528 + $0x204] sm:$0x8] %v638
    %v640 = vld [vmem:[%s528 + $0x210] sm:$0x8]
    %v641 = vsel %vm531, 0, %v640
    %642 = vst [vmem:[%s528 + $0x210] sm:$0x8] %v641
    %v643 = vld [vmem:[%s528 + $0x21c] sm:$0x8]
    %v644 = vsel %vm531, 0, %v643
    %645 = vst [vmem:[%s528 + $0x21c] sm:$0x8] %v644
    %v646 = vld [vmem:[%s528 + $0x228] sm:$0x8]
    %v647 = vsel %vm531, 0, %v646
    %648 = vst [vmem:[%s528 + $0x228] sm:$0x8] %v647
    %v649 = vld [vmem:[%s528 + $0x234] sm:$0x8]
    %v650 = vsel %vm531, 0, %v649
    %651 = vst [vmem:[%s528 + $0x234] sm:$0x8] %v650
    %v652 = vld [vmem:[%s528 + $0x258] sm:$0x8]
    %v653 = vsel %vm531, 0, %v652
    %654 = vst [vmem:[%s528 + $0x258] sm:$0x8] %v653
    %v655 = vld [vmem:[%s528 + $0x264] sm:$0x8]
    %v656 = vsel %vm531, 0, %v655
    %657 = vst [vmem:[%s528 + $0x264] sm:$0x8] %v656
    %v658 = vld [vmem:[%s528 + $0x270] sm:$0x8]
    %v659 = vsel %vm531, 0, %v658
    %660 = vst [vmem:[%s528 + $0x270] sm:$0x8] %v659
    %v661 = vld [vmem:[%s528 + $0x27c] sm:$0x8]
    %v662 = vsel %vm531, 0, %v661
    %663 = vst [vmem:[%s528 + $0x27c] sm:$0x8] %v662
    %v664 = vld [vmem:[%s528 + $0x288] sm:$0x8]
    %v665 = vsel %vm531, 0, %v664
    %666 = vst [vmem:[%s528 + $0x288] sm:$0x8] %v665
    %v667 = vld [vmem:[%s528 + $0x294] sm:$0x8]
    %v668 = vsel %vm531, 0, %v667
    %669 = vst [vmem:[%s528 + $0x294] sm:$0x8] %v668
    %v670 = vld [vmem:[%s528 + $0x2a0] sm:$0x8]
    %v671 = vsel %vm531, 0, %v670
    %672 = vst [vmem:[%s528 + $0x2a0] sm:$0x8] %v671
    %v673 = vld [vmem:[%s528 + $0x2ac] sm:$0x8]
    %v674 = vsel %vm531, 0, %v673
    %675 = vst [vmem:[%s528 + $0x2ac] sm:$0x8] %v674
    %v676 = vld [vmem:[%s528 + $0x2d0] sm:$0x8]
    %v677 = vsel %vm531, 0, %v676
    %678 = vst [vmem:[%s528 + $0x2d0] sm:$0x8] %v677
    %v679 = vld [vmem:[%s528 + $0x2dc] sm:$0x8]
    %v680 = vsel %vm531, 0, %v679
    %681 = vst [vmem:[%s528 + $0x2dc] sm:$0x8] %v680
    %v682 = vld [vmem:[%s528 + $0x2e8] sm:$0x8]
    %v683 = vsel %vm531, 0, %v682
    %684 = vst [vmem:[%s528 + $0x2e8] sm:$0x8] %v683
    %v685 = vld [vmem:[%s528 + $0x2f4] sm:$0x8]
    %v686 = vsel %vm531, 0, %v685
    %687 = vst [vmem:[%s528 + $0x2f4] sm:$0x8] %v686
    %v688 = vld [vmem:[%s528 + $0x300] sm:$0x8]
    %v689 = vsel %vm531, 0, %v688
    %690 = vst [vmem:[%s528 + $0x300] sm:$0x8] %v689
    %v691 = vld [vmem:[%s528 + $0x30c] sm:$0x8]
    %v692 = vsel %vm531, 0, %v691
    %693 = vst [vmem:[%s528 + $0x30c] sm:$0x8] %v692
    %v694 = vld [vmem:[%s528 + $0x318] sm:$0x8]
    %v695 = vsel %vm531, 0, %v694
    %696 = vst [vmem:[%s528 + $0x318] sm:$0x8] %v695
    %v697 = vld [vmem:[%s528 + $0x324] sm:$0x8]
    %v698 = vsel %vm531, 0, %v697
    %699 = vst [vmem:[%s528 + $0x324] sm:$0x8] %v698
    %v700 = vld [vmem:[%s528 + $0x348] sm:$0x8]
    %v701 = vsel %vm531, 0, %v700
    %702 = vst [vmem:[%s528 + $0x348] sm:$0x8] %v701
    %v703 = vld [vmem:[%s528 + $0x354] sm:$0x8]
    %v704 = vsel %vm531, 0, %v703
    %705 = vst [vmem:[%s528 + $0x354] sm:$0x8] %v704
    %v706 = vld [vmem:[%s528 + $0x360] sm:$0x8]
    %v707 = vsel %vm531, 0, %v706
    %708 = vst [vmem:[%s528 + $0x360] sm:$0x8] %v707
    %v709 = vld [vmem:[%s528 + $0x36c] sm:$0x8]
    %v710 = vsel %vm531, 0, %v709
    %711 = vst [vmem:[%s528 + $0x36c] sm:$0x8] %v710
    %v712 = vld [vmem:[%s528 + $0x378] sm:$0x8]
    %v713 = vsel %vm531, 0, %v712
    %714 = vst [vmem:[%s528 + $0x378] sm:$0x8] %v713
    %v715 = vld [vmem:[%s528 + $0x384] sm:$0x8]
    %v716 = vsel %vm531, 0, %v715
    %717 = vst [vmem:[%s528 + $0x384] sm:$0x8] %v716
    %v718 = vld [vmem:[%s528 + $0x390] sm:$0x8]
    %v719 = vsel %vm531, 0, %v718
    %720 = vst [vmem:[%s528 + $0x390] sm:$0x8] %v719
    %v721 = vld [vmem:[%s528 + $0x39c] sm:$0x8]
    %v722 = vsel %vm531, 0, %v721
    %723 = vst [vmem:[%s528 + $0x39c] sm:$0x8] %v722
    %vm724 = vcmask 24576
    %vm725 = vsmask.f32 256
    %vm726 = vmand %vm724, %vm725
    %v727 = vld [vmem:[%s528 + $0x8] sm:$0x1]
    %v728 = vsel %vm726, 0, %v727
    %729 = vst [vmem:[%s528 + $0x8] sm:$0x1] %v728
    %v730 = vld [vmem:[%s528 + $0x14] sm:$0x1]
    %v731 = vsel %vm726, 0, %v730
    %732 = vst [vmem:[%s528 + $0x14] sm:$0x1] %v731
    %v733 = vld [vmem:[%s528 + $0x20] sm:$0x1]
    %v734 = vsel %vm726, 0, %v733
    %735 = vst [vmem:[%s528 + $0x20] sm:$0x1] %v734
    %v736 = vld [vmem:[%s528 + $0x2c] sm:$0x1]
    %v737 = vsel %vm726, 0, %v736
    %738 = vst [vmem:[%s528 + $0x2c] sm:$0x1] %v737
    %v739 = vld [vmem:[%s528 + $0x38] sm:$0x1]
    %v740 = vsel %vm726, 0, %v739
    %741 = vst [vmem:[%s528 + $0x38] sm:$0x1] %v740
    %v742 = vld [vmem:[%s528 + $0x44] sm:$0x1]
    %v743 = vsel %vm726, 0, %v742
    %744 = vst [vmem:[%s528 + $0x44] sm:$0x1] %v743
    %v745 = vld [vmem:[%s528 + $0x50] sm:$0x1]
    %v746 = vsel %vm726, 0, %v745
    %747 = vst [vmem:[%s528 + $0x50] sm:$0x1] %v746
    %v748 = vld [vmem:[%s528 + $0x5c] sm:$0x1]
    %v749 = vsel %vm726, 0, %v748
    %750 = vst [vmem:[%s528 + $0x5c] sm:$0x1] %v749
    %v751 = vld [vmem:[%s528 + $0x80] sm:$0x1]
    %v752 = vsel %vm726, 0, %v751
    %753 = vst [vmem:[%s528 + $0x80] sm:$0x1] %v752
    %v754 = vld [vmem:[%s528 + $0x8c] sm:$0x1]
    %v755 = vsel %vm726, 0, %v754
    %756 = vst [vmem:[%s528 + $0x8c] sm:$0x1] %v755
    %v757 = vld [vmem:[%s528 + $0x98] sm:$0x1]
    %v758 = vsel %vm726, 0, %v757
    %759 = vst [vmem:[%s528 + $0x98] sm:$0x1] %v758
    %v760 = vld [vmem:[%s528 + $0xa4] sm:$0x1]
    %v761 = vsel %vm726, 0, %v760
    %762 = vst [vmem:[%s528 + $0xa4] sm:$0x1] %v761
    %v763 = vld [vmem:[%s528 + $0xb0] sm:$0x1]
    %v764 = vsel %vm726, 0, %v763
    %765 = vst [vmem:[%s528 + $0xb0] sm:$0x1] %v764
    %v766 = vld [vmem:[%s528 + $0xbc] sm:$0x1]
    %v767 = vsel %vm726, 0, %v766
    %768 = vst [vmem:[%s528 + $0xbc] sm:$0x1] %v767
    %v769 = vld [vmem:[%s528 + $0xc8] sm:$0x1]
    %v770 = vsel %vm726, 0, %v769
    %771 = vst [vmem:[%s528 + $0xc8] sm:$0x1] %v770
    %v772 = vld [vmem:[%s528 + $0xd4] sm:$0x1]
    %v773 = vsel %vm726, 0, %v772
    %774 = vst [vmem:[%s528 + $0xd4] sm:$0x1] %v773
    %v775 = vld [vmem:[%s528 + $0xf8] sm:$0x1]
    %v776 = vsel %vm726, 0, %v775
    %777 = vst [vmem:[%s528 + $0xf8] sm:$0x1] %v776
    %v778 = vld [vmem:[%s528 + $0x104] sm:$0x1]
    %v779 = vsel %vm726, 0, %v778
    %780 = vst [vmem:[%s528 + $0x104] sm:$0x1] %v779
    %v781 = vld [vmem:[%s528 + $0x110] sm:$0x1]
    %v782 = vsel %vm726, 0, %v781
    %783 = vst [vmem:[%s528 + $0x110] sm:$0x1] %v782
    %v784 = vld [vmem:[%s528 + $0x11c] sm:$0x1]
    %v785 = vsel %vm726, 0, %v784
    %786 = vst [vmem:[%s528 + $0x11c] sm:$0x1] %v785
    %v787 = vld [vmem:[%s528 + $0x128] sm:$0x1]
    %v788 = vsel %vm726, 0, %v787
    %789 = vst [vmem:[%s528 + $0x128] sm:$0x1] %v788
    %v790 = vld [vmem:[%s528 + $0x134] sm:$0x1]
    %v791 = vsel %vm726, 0, %v790
    %792 = vst [vmem:[%s528 + $0x134] sm:$0x1] %v791
    %v793 = vld [vmem:[%s528 + $0x140] sm:$0x1]
    %v794 = vsel %vm726, 0, %v793
    %795 = vst [vmem:[%s528 + $0x140] sm:$0x1] %v794
    %v796 = vld [vmem:[%s528 + $0x14c] sm:$0x1]
    %v797 = vsel %vm726, 0, %v796
    %798 = vst [vmem:[%s528 + $0x14c] sm:$0x1] %v797
    %v799 = vld [vmem:[%s528 + $0x170] sm:$0x1]
    %v800 = vsel %vm726, 0, %v799
    %801 = vst [vmem:[%s528 + $0x170] sm:$0x1] %v800
    %v802 = vld [vmem:[%s528 + $0x17c] sm:$0x1]
    %v803 = vsel %vm726, 0, %v802
    %804 = vst [vmem:[%s528 + $0x17c] sm:$0x1] %v803
    %v805 = vld [vmem:[%s528 + $0x188] sm:$0x1]
    %v806 = vsel %vm726, 0, %v805
    %807 = vst [vmem:[%s528 + $0x188] sm:$0x1] %v806
    %v808 = vld [vmem:[%s528 + $0x194] sm:$0x1]
    %v809 = vsel %vm726, 0, %v808
    %810 = vst [vmem:[%s528 + $0x194] sm:$0x1] %v809
    %v811 = vld [vmem:[%s528 + $0x1a0] sm:$0x1]
    %v812 = vsel %vm726, 0, %v811
    %813 = vst [vmem:[%s528 + $0x1a0] sm:$0x1] %v812
    %v814 = vld [vmem:[%s528 + $0x1ac] sm:$0x1]
    %v815 = vsel %vm726, 0, %v814
    %816 = vst [vmem:[%s528 + $0x1ac] sm:$0x1] %v815
    %v817 = vld [vmem:[%s528 + $0x1b8] sm:$0x1]
    %v818 = vsel %vm726, 0, %v817
    %819 = vst [vmem:[%s528 + $0x1b8] sm:$0x1] %v818
    %v820 = vld [vmem:[%s528 + $0x1c4] sm:$0x1]
    %v821 = vsel %vm726, 0, %v820
    %822 = vst [vmem:[%s528 + $0x1c4] sm:$0x1] %v821
    %v823 = vld [vmem:[%s528 + $0x1e8] sm:$0x1]
    %v824 = vsel %vm726, 0, %v823
    %825 = vst [vmem:[%s528 + $0x1e8] sm:$0x1] %v824
    %v826 = vld [vmem:[%s528 + $0x1f4] sm:$0x1]
    %v827 = vsel %vm726, 0, %v826
    %828 = vst [vmem:[%s528 + $0x1f4] sm:$0x1] %v827
    %v829 = vld [vmem:[%s528 + $0x200] sm:$0x1]
    %v830 = vsel %vm726, 0, %v829
    %831 = vst [vmem:[%s528 + $0x200] sm:$0x1] %v830
    %v832 = vld [vmem:[%s528 + $0x20c] sm:$0x1]
    %v833 = vsel %vm726, 0, %v832
    %834 = vst [vmem:[%s528 + $0x20c] sm:$0x1] %v833
    %v835 = vld [vmem:[%s528 + $0x218] sm:$0x1]
    %v836 = vsel %vm726, 0, %v835
    %837 = vst [vmem:[%s528 + $0x218] sm:$0x1] %v836
    %v838 = vld [vmem:[%s528 + $0x224] sm:$0x1]
    %v839 = vsel %vm726, 0, %v838
    %840 = vst [vmem:[%s528 + $0x224] sm:$0x1] %v839
    %v841 = vld [vmem:[%s528 + $0x230] sm:$0x1]
    %v842 = vsel %vm726, 0, %v841
    %843 = vst [vmem:[%s528 + $0x230] sm:$0x1] %v842
    %v844 = vld [vmem:[%s528 + $0x23c] sm:$0x1]
    %v845 = vsel %vm726, 0, %v844
    %846 = vst [vmem:[%s528 + $0x23c] sm:$0x1] %v845
    %v847 = vld [vmem:[%s528 + $0x260] sm:$0x1]
    %v848 = vsel %vm726, 0, %v847
    %849 = vst [vmem:[%s528 + $0x260] sm:$0x1] %v848
    %v850 = vld [vmem:[%s528 + $0x26c] sm:$0x1]
    %v851 = vsel %vm726, 0, %v850
    %852 = vst [vmem:[%s528 + $0x26c] sm:$0x1] %v851
    %v853 = vld [vmem:[%s528 + $0x278] sm:$0x1]
    %v854 = vsel %vm726, 0, %v853
    %855 = vst [vmem:[%s528 + $0x278] sm:$0x1] %v854
    %v856 = vld [vmem:[%s528 + $0x284] sm:$0x1]
    %v857 = vsel %vm726, 0, %v856
    %858 = vst [vmem:[%s528 + $0x284] sm:$0x1] %v857
    %v859 = vld [vmem:[%s528 + $0x290] sm:$0x1]
    %v860 = vsel %vm726, 0, %v859
    %861 = vst [vmem:[%s528 + $0x290] sm:$0x1] %v860
    %v862 = vld [vmem:[%s528 + $0x29c] sm:$0x1]
    %v863 = vsel %vm726, 0, %v862
    %864 = vst [vmem:[%s528 + $0x29c] sm:$0x1] %v863
    %v865 = vld [vmem:[%s528 + $0x2a8] sm:$0x1]
    %v866 = vsel %vm726, 0, %v865
    %867 = vst [vmem:[%s528 + $0x2a8] sm:$0x1] %v866
    %v868 = vld [vmem:[%s528 + $0x2b4] sm:$0x1]
    %v869 = vsel %vm726, 0, %v868
    %870 = vst [vmem:[%s528 + $0x2b4] sm:$0x1] %v869
    %v871 = vld [vmem:[%s528 + $0x2d8] sm:$0x1]
    %v872 = vsel %vm726, 0, %v871
    %873 = vst [vmem:[%s528 + $0x2d8] sm:$0x1] %v872
    %v874 = vld [vmem:[%s528 + $0x2e4] sm:$0x1]
    %v875 = vsel %vm726, 0, %v874
    %876 = vst [vmem:[%s528 + $0x2e4] sm:$0x1] %v875
    %v877 = vld [vmem:[%s528 + $0x2f0] sm:$0x1]
    %v878 = vsel %vm726, 0, %v877
    %879 = vst [vmem:[%s528 + $0x2f0] sm:$0x1] %v878
    %v880 = vld [vmem:[%s528 + $0x2fc] sm:$0x1]
    %v881 = vsel %vm726, 0, %v880
    %882 = vst [vmem:[%s528 + $0x2fc] sm:$0x1] %v881
    %v883 = vld [vmem:[%s528 + $0x308] sm:$0x1]
    %v884 = vsel %vm726, 0, %v883
    %885 = vst [vmem:[%s528 + $0x308] sm:$0x1] %v884
    %v886 = vld [vmem:[%s528 + $0x314] sm:$0x1]
    %v887 = vsel %vm726, 0, %v886
    %888 = vst [vmem:[%s528 + $0x314] sm:$0x1] %v887
    %v889 = vld [vmem:[%s528 + $0x320] sm:$0x1]
    %v890 = vsel %vm726, 0, %v889
    %891 = vst [vmem:[%s528 + $0x320] sm:$0x1] %v890
    %v892 = vld [vmem:[%s528 + $0x32c] sm:$0x1]
    %v893 = vsel %vm726, 0, %v892
    %894 = vst [vmem:[%s528 + $0x32c] sm:$0x1] %v893
    %v895 = vld [vmem:[%s528 + $0x350] sm:$0x1]
    %v896 = vsel %vm726, 0, %v895
    %897 = vst [vmem:[%s528 + $0x350] sm:$0x1] %v896
    %v898 = vld [vmem:[%s528 + $0x35c] sm:$0x1]
    %v899 = vsel %vm726, 0, %v898
    %900 = vst [vmem:[%s528 + $0x35c] sm:$0x1] %v899
    %v901 = vld [vmem:[%s528 + $0x368] sm:$0x1]
    %v902 = vsel %vm726, 0, %v901
    %903 = vst [vmem:[%s528 + $0x368] sm:$0x1] %v902
    %v904 = vld [vmem:[%s528 + $0x374] sm:$0x1]
    %v905 = vsel %vm726, 0, %v904
    %906 = vst [vmem:[%s528 + $0x374] sm:$0x1] %v905
    %v907 = vld [vmem:[%s528 + $0x380] sm:$0x1]
    %v908 = vsel %vm726, 0, %v907
    %909 = vst [vmem:[%s528 + $0x380] sm:$0x1] %v908
    %v910 = vld [vmem:[%s528 + $0x38c] sm:$0x1]
    %v911 = vsel %vm726, 0, %v910
    %912 = vst [vmem:[%s528 + $0x38c] sm:$0x1] %v911
    %v913 = vld [vmem:[%s528 + $0x398] sm:$0x1]
    %v914 = vsel %vm726, 0, %v913
    %915 = vst [vmem:[%s528 + $0x398] sm:$0x1] %v914
    %v916 = vld [vmem:[%s528 + $0x3a4] sm:$0x1]
    %v917 = vsel %vm726, 0, %v916
    %918 = vst [vmem:[%s528 + $0x3a4] sm:$0x1] %v917
    %v920 = vlaneseq
    %v921 = vshrl.u32 %v920, 7
    %v922 = vsub.s32 0, %v921
    %v923 = vrot.slane %v473, %v922
    %v925 = vmul.f32 %v28, %v923
    %v926 = vmul.f32 %v29, %v923
    %v927 = vmul.f32 %v30, %v923
    %v928 = vmul.f32 %v31, %v923
    %v929 = vmul.f32 %v32, %v923
    %v930 = vmul.f32 %v33, %v923
    %v931 = vmul.f32 %v34, %v923
    %v932 = vmul.f32 %v35, %v923
    %v933 = vmul.f32 %v36, %v923
    %v934 = vmul.f32 %v37, %v923
    %v935 = vmul.f32 %v38, %v923
    %v936 = vmul.f32 %v39, %v923
    %v937 = vmul.f32 %v40, %v923
    %v938 = vmul.f32 %v41, %v923
    %v939 = vmul.f32 %v42, %v923
    %v940 = vmul.f32 %v43, %v923
    %v942 = vlaneseq
    %v943 = vshrl.u32 %v942, 7
    %v944 = vsub.s32 0, %v943
    %v945 = vrot.slane %v476, %v944
    %v947 = vadd.f32 %v925, %v945
    %v948 = vadd.f32 %v926, %v945
    %v949 = vadd.f32 %v927, %v945
    %v950 = vadd.f32 %v928, %v945
    %v951 = vadd.f32 %v929, %v945
    %v952 = vadd.f32 %v930, %v945
    %v953 = vadd.f32 %v931, %v945
    %v954 = vadd.f32 %v932, %v945
    %v955 = vadd.f32 %v933, %v945
    %v956 = vadd.f32 %v934, %v945
    %v957 = vadd.f32 %v935, %v945
    %v958 = vadd.f32 %v936, %v945
    %v959 = vadd.f32 %v937, %v945
    %v960 = vadd.f32 %v938, %v945
    %v961 = vadd.f32 %v939, %v945
    %v962 = vadd.f32 %v940, %v945
    %vm963 = vcmp.gt.f32.partialorder %v947, 0.0
    %vm964 = vcmp.gt.f32.partialorder %v948, 0.0
    %vm965 = vcmp.gt.f32.partialorder %v949, 0.0
    %vm966 = vcmp.gt.f32.partialorder %v950, 0.0
    %vm967 = vcmp.gt.f32.partialorder %v951, 0.0
    %vm968 = vcmp.gt.f32.partialorder %v952, 0.0
    %vm969 = vcmp.gt.f32.partialorder %v953, 0.0
    %vm970 = vcmp.gt.f32.partialorder %v954, 0.0
    %vm971 = vcmp.gt.f32.partialorder %v955, 0.0
    %vm972 = vcmp.gt.f32.partialorder %v956, 0.0
    %vm973 = vcmp.gt.f32.partialorder %v957, 0.0
    %vm974 = vcmp.gt.f32.partialorder %v958, 0.0
    %vm975 = vcmp.gt.f32.partialorder %v959, 0.0
    %vm976 = vcmp.gt.f32.partialorder %v960, 0.0
    %vm977 = vcmp.gt.f32.partialorder %v961, 0.0
    %vm978 = vcmp.gt.f32.partialorder %v962, 0.0
    %v979 = vmul.f32 %v947, 0.1
    %v980 = vmul.f32 %v948, 0.1
    %v981 = vmul.f32 %v949, 0.1
    %v982 = vmul.f32 %v950, 0.1
    %v983 = vmul.f32 %v951, 0.1
    %v984 = vmul.f32 %v952, 0.1
    %v985 = vmul.f32 %v953, 0.1
    %v986 = vmul.f32 %v954, 0.1
    %v987 = vmul.f32 %v955, 0.1
    %v988 = vmul.f32 %v956, 0.1
    %v989 = vmul.f32 %v957, 0.1
    %v990 = vmul.f32 %v958, 0.1
    %v991 = vmul.f32 %v959, 0.1
    %v992 = vmul.f32 %v960, 0.1
    %v993 = vmul.f32 %v961, 0.1
    %v994 = vmul.f32 %v962, 0.1
    %v995 = vsel %vm963, %v947, %v979
    %v996 = vsel %vm964, %v948, %v980
    %v997 = vsel %vm965, %v949, %v981
    %v998 = vsel %vm966, %v950, %v982
    %v999 = vsel %vm967, %v951, %v983
    %v1000 = vsel %vm968, %v952, %v984
    %v1001 = vsel %vm969, %v953, %v985
    %v1002 = vsel %vm970, %v954, %v986
    %v1003 = vsel %vm971, %v955, %v987
    %v1004 = vsel %vm972, %v956, %v988
    %v1005 = vsel %vm973, %v957, %v989
    %v1006 = vsel %vm974, %v958, %v990
    %v1007 = vsel %vm975, %v959, %v991
    %v1008 = vsel %vm976, %v960, %v992
    %v1009 = vsel %vm977, %v961, %v993
    %v1010 = vsel %vm978, %v962, %v994
    %v1011 = vpack.c.bf16 %v995, %v995
    %v1012 = vpack.c.bf16 %v996, %v996
    %v1013 = vpack.c.bf16 %v997, %v997
    %v1014 = vpack.c.bf16 %v998, %v998
    %v1015 = vpack.c.bf16 %v999, %v999
    %v1016 = vpack.c.bf16 %v1000, %v1000
    %v1017 = vpack.c.bf16 %v1001, %v1001
    %v1018 = vpack.c.bf16 %v1002, %v1002
    %v1019 = vpack.c.bf16 %v1003, %v1003
    %v1020 = vpack.c.bf16 %v1004, %v1004
    %v1021 = vpack.c.bf16 %v1005, %v1005
    %v1022 = vpack.c.bf16 %v1006, %v1006
    %v1023 = vpack.c.bf16 %v1007, %v1007
    %v1024 = vpack.c.bf16 %v1008, %v1008
    %v1025 = vpack.c.bf16 %v1009, %v1009
    %v1026 = vpack.c.bf16 %v1010, %v1010
    %1027 = vst.msk [vmem:[%s528 + $0x4] sm:$0xf] %vm477, %v1011
    %1028 = vst.msk [vmem:[%s528 + $0x10] sm:$0xf] %vm477, %v1012
    %1029 = vst.msk [vmem:[%s528 + $0x1c] sm:$0xf] %vm477, %v1013
    %1030 = vst.msk [vmem:[%s528 + $0x28] sm:$0xf] %vm477, %v1014
    %1031 = vst.msk [vmem:[%s528 + $0x34] sm:$0xf] %vm477, %v1015
    %1032 = vst.msk [vmem:[%s528 + $0x40] sm:$0xf] %vm477, %v1016
    %1033 = vst.msk [vmem:[%s528 + $0x4c] sm:$0xf] %vm477, %v1017
    %1034 = vst.msk [vmem:[%s528 + $0x58] sm:$0xf] %vm477, %v1018
    %1035 = vst.msk [vmem:[%s528 + $0x7c] sm:$0xf] %vm477, %v1019
    %1036 = vst.msk [vmem:[%s528 + $0x88] sm:$0xf] %vm477, %v1020
    %1037 = vst.msk [vmem:[%s528 + $0x94] sm:$0xf] %vm477, %v1021
    %1038 = vst.msk [vmem:[%s528 + $0xa0] sm:$0xf] %vm477, %v1022
    %1039 = vst.msk [vmem:[%s528 + $0xac] sm:$0xf] %vm477, %v1023
    %1040 = vst.msk [vmem:[%s528 + $0xb8] sm:$0xf] %vm477, %v1024
    %1041 = vst.msk [vmem:[%s528 + $0xc4] sm:$0xf] %vm477, %v1025
    %1042 = vst.msk [vmem:[%s528 + $0xd0] sm:$0xf] %vm477, %v1026
    %v1043 = vadd.f32 %v28, 0.0
    %v1044 = vadd.f32 %v29, 0.0
    %v1045 = vadd.f32 %v30, 0.0
    %v1046 = vadd.f32 %v31, 0.0
    %v1047 = vadd.f32 %v32, 0.0
    %v1048 = vadd.f32 %v33, 0.0
    %v1049 = vadd.f32 %v34, 0.0
    %v1050 = vadd.f32 %v35, 0.0
    %v1051 = vadd.f32 %v36, 0.0
    %v1052 = vadd.f32 %v37, 0.0
    %v1053 = vadd.f32 %v38, 0.0
    %v1054 = vadd.f32 %v39, 0.0
    %v1055 = vadd.f32 %v40, 0.0
    %v1056 = vadd.f32 %v41, 0.0
    %v1057 = vadd.f32 %v42, 0.0
    %v1058 = vadd.f32 %v43, 0.0
    %v1059 = vmul.f32 %v45, %v923
    %v1060 = vmul.f32 %v46, %v923
    %v1061 = vmul.f32 %v47, %v923
    %v1062 = vmul.f32 %v48, %v923
    %v1063 = vmul.f32 %v49, %v923
    %v1064 = vmul.f32 %v50, %v923
    %v1065 = vmul.f32 %v51, %v923
    %v1066 = vmul.f32 %v52, %v923
    %v1067 = vmul.f32 %v53, %v923
    %v1068 = vmul.f32 %v54, %v923
    %v1069 = vmul.f32 %v55, %v923
    %v1070 = vmul.f32 %v56, %v923
    %v1071 = vmul.f32 %v57, %v923
    %v1072 = vmul.f32 %v58, %v923
    %v1073 = vmul.f32 %v59, %v923
    %v1074 = vmul.f32 %v60, %v923
    %v1075 = vadd.f32 %v1059, %v945
    %v1076 = vadd.f32 %v1060, %v945
    %v1077 = vadd.f32 %v1061, %v945
    %v1078 = vadd.f32 %v1062, %v945
    %v1079 = vadd.f32 %v1063, %v945
    %v1080 = vadd.f32 %v1064, %v945
    %v1081 = vadd.f32 %v1065, %v945
    %v1082 = vadd.f32 %v1066, %v945
    %v1083 = vadd.f32 %v1067, %v945
    %v1084 = vadd.f32 %v1068, %v945
    %v1085 = vadd.f32 %v1069, %v945
    %v1086 = vadd.f32 %v1070, %v945
    %v1087 = vadd.f32 %v1071, %v945
    %v1088 = vadd.f32 %v1072, %v945
    %v1089 = vadd.f32 %v1073, %v945
    %v1090 = vadd.f32 %v1074, %v945
    %vm1091 = vcmp.gt.f32.partialorder %v1075, 0.0
    %vm1092 = vcmp.gt.f32.partialorder %v1076, 0.0
    %vm1093 = vcmp.gt.f32.partialorder %v1077, 0.0
    %vm1094 = vcmp.gt.f32.partialorder %v1078, 0.0
    %vm1095 = vcmp.gt.f32.partialorder %v1079, 0.0
    %vm1096 = vcmp.gt.f32.partialorder %v1080, 0.0
    %vm1097 = vcmp.gt.f32.partialorder %v1081, 0.0
    %vm1098 = vcmp.gt.f32.partialorder %v1082, 0.0
    %vm1099 = vcmp.gt.f32.partialorder %v1083, 0.0
    %vm1100 = vcmp.gt.f32.partialorder %v1084, 0.0
    %vm1101 = vcmp.gt.f32.partialorder %v1085, 0.0
    %vm1102 = vcmp.gt.f32.partialorder %v1086, 0.0
    %vm1103 = vcmp.gt.f32.partialorder %v1087, 0.0
    %vm1104 = vcmp.gt.f32.partialorder %v1088, 0.0
    %vm1105 = vcmp.gt.f32.partialorder %v1089, 0.0
    %vm1106 = vcmp.gt.f32.partialorder %v1090, 0.0
    %v1107 = vmul.f32 %v1075, 0.1
    %v1108 = vmul.f32 %v1076, 0.1
    %v1109 = vmul.f32 %v1077, 0.1
    %v1110 = vmul.f32 %v1078, 0.1
    %v1111 = vmul.f32 %v1079, 0.1
    %v1112 = vmul.f32 %v1080, 0.1
    %v1113 = vmul.f32 %v1081, 0.1
    %v1114 = vmul.f32 %v1082, 0.1
    %v1115 = vmul.f32 %v1083, 0.1
    %v1116 = vmul.f32 %v1084, 0.1
    %v1117 = vmul.f32 %v1085, 0.1
    %v1118 = vmul.f32 %v1086, 0.1
    %v1119 = vmul.f32 %v1087, 0.1
    %v1120 = vmul.f32 %v1088, 0.1
    %v1121 = vmul.f32 %v1089, 0.1
    %v1122 = vmul.f32 %v1090, 0.1
    %v1123 = vsel %vm1091, %v1075, %v1107
    %v1124 = vsel %vm1092, %v1076, %v1108
    %v1125 = vsel %vm1093, %v1077, %v1109
    %v1126 = vsel %vm1094, %v1078, %v1110
    %v1127 = vsel %vm1095, %v1079, %v1111
    %v1128 = vsel %vm1096, %v1080, %v1112
    %v1129 = vsel %vm1097, %v1081, %v1113
    %v1130 = vsel %vm1098, %v1082, %v1114
    %v1131 = vsel %vm1099, %v1083, %v1115
    %v1132 = vsel %vm1100, %v1084, %v1116
    %v1133 = vsel %vm1101, %v1085, %v1117
    %v1134 = vsel %vm1102, %v1086, %v1118
    %v1135 = vsel %vm1103, %v1087, %v1119
    %v1136 = vsel %vm1104, %v1088, %v1120
    %v1137 = vsel %vm1105, %v1089, %v1121
    %v1138 = vsel %vm1106, %v1090, %v1122
    %v1139 = vpack.c.bf16 %v1123, %v1123
    %v1140 = vpack.c.bf16 %v1124, %v1124
    %v1141 = vpack.c.bf16 %v1125, %v1125
    %v1142 = vpack.c.bf16 %v1126, %v1126
    %v1143 = vpack.c.bf16 %v1127, %v1127
    %v1144 = vpack.c.bf16 %v1128, %v1128
    %v1145 = vpack.c.bf16 %v1129, %v1129
    %v1146 = vpack.c.bf16 %v1130, %v1130
    %v1147 = vpack.c.bf16 %v1131, %v1131
    %v1148 = vpack.c.bf16 %v1132, %v1132
    %v1149 = vpack.c.bf16 %v1133, %v1133
    %v1150 = vpack.c.bf16 %v1134, %v1134
    %v1151 = vpack.c.bf16 %v1135, %v1135
    %v1152 = vpack.c.bf16 %v1136, %v1136
    %v1153 = vpack.c.bf16 %v1137, %v1137
    %v1154 = vpack.c.bf16 %v1138, %v1138
    %s1155 = scalar_lea.vmem [#allocation2], 252
    %1156 = vst.msk [vmem:[%s1155 + $0x4] sm:$0xf] %vm477, %v1139
    %1157 = vst.msk [vmem:[%s1155 + $0x10] sm:$0xf] %vm477, %v1140
    %1158 = vst.msk [vmem:[%s1155 + $0x1c] sm:$0xf] %vm477, %v1141
    %1159 = vst.msk [vmem:[%s1155 + $0x28] sm:$0xf] %vm477, %v1142
    %1160 = vst.msk [vmem:[%s1155 + $0x34] sm:$0xf] %vm477, %v1143
    %1161 = vst.msk [vmem:[%s1155 + $0x40] sm:$0xf] %vm477, %v1144
    %1162 = vst.msk [vmem:[%s1155 + $0x4c] sm:$0xf] %vm477, %v1145
    %1163 = vst.msk [vmem:[%s1155 + $0x58] sm:$0xf] %vm477, %v1146
    %1164 = vst.msk [vmem:[%s1155 + $0x7c] sm:$0xf] %vm477, %v1147
    %1165 = vst.msk [vmem:[%s1155 + $0x88] sm:$0xf] %vm477, %v1148
    %1166 = vst.msk [vmem:[%s1155 + $0x94] sm:$0xf] %vm477, %v1149
    %1167 = vst.msk [vmem:[%s1155 + $0xa0] sm:$0xf] %vm477, %v1150
    %1168 = vst.msk [vmem:[%s1155 + $0xac] sm:$0xf] %vm477, %v1151
    %1169 = vst.msk [vmem:[%s1155 + $0xb8] sm:$0xf] %vm477, %v1152
    %1170 = vst.msk [vmem:[%s1155 + $0xc4] sm:$0xf] %vm477, %v1153
    %1171 = vst.msk [vmem:[%s1155 + $0xd0] sm:$0xf] %vm477, %v1154
    %v1172 = vadd.f32 %v1043, %v45
    %v1173 = vadd.f32 %v1044, %v46
    %v1174 = vadd.f32 %v1045, %v47
    %v1175 = vadd.f32 %v1046, %v48
    %v1176 = vadd.f32 %v1047, %v49
    %v1177 = vadd.f32 %v1048, %v50
    %v1178 = vadd.f32 %v1049, %v51
    %v1179 = vadd.f32 %v1050, %v52
    %v1180 = vadd.f32 %v1051, %v53
    %v1181 = vadd.f32 %v1052, %v54
    %v1182 = vadd.f32 %v1053, %v55
    %v1183 = vadd.f32 %v1054, %v56
    %v1184 = vadd.f32 %v1055, %v57
    %v1185 = vadd.f32 %v1056, %v58
    %v1186 = vadd.f32 %v1057, %v59
    %v1187 = vadd.f32 %v1058, %v60
    %v1188 = vmul.f32 %v62, %v923
    %v1189 = vmul.f32 %v63, %v923
    %v1190 = vmul.f32 %v64, %v923
    %v1191 = vmul.f32 %v65, %v923
    %v1192 = vmul.f32 %v66, %v923
    %v1193 = vmul.f32 %v67, %v923
    %v1194 = vmul.f32 %v68, %v923
    %v1195 = vmul.f32 %v69, %v923
    %v1196 = vmul.f32 %v70, %v923
    %v1197 = vmul.f32 %v71, %v923
    %v1198 = vmul.f32 %v72, %v923
    %v1199 = vmul.f32 %v73, %v923
    %v1200 = vmul.f32 %v74, %v923
    %v1201 = vmul.f32 %v75, %v923
    %v1202 = vmul.f32 %v76, %v923
    %v1203 = vmul.f32 %v77, %v923
    %v1204 = vadd.f32 %v1188, %v945
    %v1205 = vadd.f32 %v1189, %v945
    %v1206 = vadd.f32 %v1190, %v945
    %v1207 = vadd.f32 %v1191, %v945
    %v1208 = vadd.f32 %v1192, %v945
    %v1209 = vadd.f32 %v1193, %v945
    %v1210 = vadd.f32 %v1194, %v945
    %v1211 = vadd.f32 %v1195, %v945
    %v1212 = vadd.f32 %v1196, %v945
    %v1213 = vadd.f32 %v1197, %v945
    %v1214 = vadd.f32 %v1198, %v945
    %v1215 = vadd.f32 %v1199, %v945
    %v1216 = vadd.f32 %v1200, %v945
    %v1217 = vadd.f32 %v1201, %v945
    %v1218 = vadd.f32 %v1202, %v945
    %v1219 = vadd.f32 %v1203, %v945
    %vm1220 = vcmp.gt.f32.partialorder %v1204, 0.0
    %vm1221 = vcmp.gt.f32.partialorder %v1205, 0.0
    %vm1222 = vcmp.gt.f32.partialorder %v1206, 0.0
    %vm1223 = vcmp.gt.f32.partialorder %v1207, 0.0
    %vm1224 = vcmp.gt.f32.partialorder %v1208, 0.0
    %vm1225 = vcmp.gt.f32.partialorder %v1209, 0.0
    %vm1226 = vcmp.gt.f32.partialorder %v1210, 0.0
    %vm1227 = vcmp.gt.f32.partialorder %v1211, 0.0
    %vm1228 = vcmp.gt.f32.partialorder %v1212, 0.0
    %vm1229 = vcmp.gt.f32.partialorder %v1213, 0.0
    %vm1230 = vcmp.gt.f32.partialorder %v1214, 0.0
    %vm1231 = vcmp.gt.f32.partialorder %v1215, 0.0
    %vm1232 = vcmp.gt.f32.partialorder %v1216, 0.0
    %vm1233 = vcmp.gt.f32.partialorder %v1217, 0.0
    %vm1234 = vcmp.gt.f32.partialorder %v1218, 0.0
    %vm1235 = vcmp.gt.f32.partialorder %v1219, 0.0
    %v1236 = vmul.f32 %v1204, 0.1
    %v1237 = vmul.f32 %v1205, 0.1
    %v1238 = vmul.f32 %v1206, 0.1
    %v1239 = vmul.f32 %v1207, 0.1
    %v1240 = vmul.f32 %v1208, 0.1
    %v1241 = vmul.f32 %v1209, 0.1
    %v1242 = vmul.f32 %v1210, 0.1
    %v1243 = vmul.f32 %v1211, 0.1
    %v1244 = vmul.f32 %v1212, 0.1
    %v1245 = vmul.f32 %v1213, 0.1
    %v1246 = vmul.f32 %v1214, 0.1
    %v1247 = vmul.f32 %v1215, 0.1
    %v1248 = vmul.f32 %v1216, 0.1
    %v1249 = vmul.f32 %v1217, 0.1
    %v1250 = vmul.f32 %v1218, 0.1
    %v1251 = vmul.f32 %v1219, 0.1
    %v1252 = vsel %vm1220, %v1204, %v1236
    %v1253 = vsel %vm1221, %v1205, %v1237
    %v1254 = vsel %vm1222, %v1206, %v1238
    %v1255 = vsel %vm1223, %v1207, %v1239
    %v1256 = vsel %vm1224, %v1208, %v1240
    %v1257 = vsel %vm1225, %v1209, %v1241
    %v1258 = vsel %vm1226, %v1210, %v1242
    %v1259 = vsel %vm1227, %v1211, %v1243
    %v1260 = vsel %vm1228, %v1212, %v1244
    %v1261 = vsel %vm1229, %v1213, %v1245
    %v1262 = vsel %vm1230, %v1214, %v1246
    %v1263 = vsel %vm1231, %v1215, %v1247
    %v1264 = vsel %vm1232, %v1216, %v1248
    %v1265 = vsel %vm1233, %v1217, %v1249
    %v1266 = vsel %vm1234, %v1218, %v1250
    %v1267 = vsel %vm1235, %v1219, %v1251
    %v1268 = vpack.c.bf16 %v1252, %v1252
    %v1269 = vpack.c.bf16 %v1253, %v1253
    %v1270 = vpack.c.bf16 %v1254, %v1254
    %v1271 = vpack.c.bf16 %v1255, %v1255
    %v1272 = vpack.c.bf16 %v1256, %v1256
    %v1273 = vpack.c.bf16 %v1257, %v1257
    %v1274 = vpack.c.bf16 %v1258, %v1258
    %v1275 = vpack.c.bf16 %v1259, %v1259
    %v1276 = vpack.c.bf16 %v1260, %v1260
    %v1277 = vpack.c.bf16 %v1261, %v1261
    %v1278 = vpack.c.bf16 %v1262, %v1262
    %v1279 = vpack.c.bf16 %v1263, %v1263
    %v1280 = vpack.c.bf16 %v1264, %v1264
    %v1281 = vpack.c.bf16 %v1265, %v1265
    %v1282 = vpack.c.bf16 %v1266, %v1266
    %v1283 = vpack.c.bf16 %v1267, %v1267
    %s1284 = scalar_lea.vmem [#allocation2], 492
    %1285 = vst.msk [vmem:[%s1284 + $0x4] sm:$0xf] %vm477, %v1268
    %1286 = vst.msk [vmem:[%s1284 + $0x10] sm:$0xf] %vm477, %v1269
    %1287 = vst.msk [vmem:[%s1284 + $0x1c] sm:$0xf] %vm477, %v1270
    %1288 = vst.msk [vmem:[%s1284 + $0x28] sm:$0xf] %vm477, %v1271
    %1289 = vst.msk [vmem:[%s1284 + $0x34] sm:$0xf] %vm477, %v1272
    %1290 = vst.msk [vmem:[%s1284 + $0x40] sm:$0xf] %vm477, %v1273
    %1291 = vst.msk [vmem:[%s1284 + $0x4c] sm:$0xf] %vm477, %v1274
    %1292 = vst.msk [vmem:[%s1284 + $0x58] sm:$0xf] %vm477, %v1275
    %1293 = vst.msk [vmem:[%s1284 + $0x7c] sm:$0xf] %vm477, %v1276
    %1294 = vst.msk [vmem:[%s1284 + $0x88] sm:$0xf] %vm477, %v1277
    %1295 = vst.msk [vmem:[%s1284 + $0x94] sm:$0xf] %vm477, %v1278
    %1296 = vst.msk [vmem:[%s1284 + $0xa0] sm:$0xf] %vm477, %v1279
    %1297 = vst.msk [vmem:[%s1284 + $0xac] sm:$0xf] %vm477, %v1280
    %1298 = vst.msk [vmem:[%s1284 + $0xb8] sm:$0xf] %vm477, %v1281
    %1299 = vst.msk [vmem:[%s1284 + $0xc4] sm:$0xf] %vm477, %v1282
    %1300 = vst.msk [vmem:[%s1284 + $0xd0] sm:$0xf] %vm477, %v1283
    %v1301 = vadd.f32 %v1172, %v62
    %v1302 = vadd.f32 %v1173, %v63
    %v1303 = vadd.f32 %v1174, %v64
    %v1304 = vadd.f32 %v1175, %v65
    %v1305 = vadd.f32 %v1176, %v66
    %v1306 = vadd.f32 %v1177, %v67
    %v1307 = vadd.f32 %v1178, %v68
    %v1308 = vadd.f32 %v1179, %v69
    %v1309 = vadd.f32 %v1180, %v70
    %v1310 = vadd.f32 %v1181, %v71
    %v1311 = vadd.f32 %v1182, %v72
    %v1312 = vadd.f32 %v1183, %v73
    %v1313 = vadd.f32 %v1184, %v74
    %v1314 = vadd.f32 %v1185, %v75
    %v1315 = vadd.f32 %v1186, %v76
    %v1316 = vadd.f32 %v1187, %v77
    %v1317 = vmul.f32 %v79, %v923
    %v1318 = vmul.f32 %v80, %v923
    %v1319 = vmul.f32 %v81, %v923
    %v1320 = vmul.f32 %v82, %v923
    %v1321 = vmul.f32 %v83, %v923
    %v1322 = vmul.f32 %v84, %v923
    %v1323 = vmul.f32 %v85, %v923
    %v1324 = vmul.f32 %v86, %v923
    %v1325 = vmul.f32 %v87, %v923
    %v1326 = vmul.f32 %v88, %v923
    %v1327 = vmul.f32 %v89, %v923
    %v1328 = vmul.f32 %v90, %v923
    %v1329 = vmul.f32 %v91, %v923
    %v1330 = vmul.f32 %v92, %v923
    %v1331 = vmul.f32 %v93, %v923
    %v1332 = vmul.f32 %v94, %v923
    %v1333 = vadd.f32 %v1317, %v945
    %v1334 = vadd.f32 %v1318, %v945
    %v1335 = vadd.f32 %v1319, %v945
    %v1336 = vadd.f32 %v1320, %v945
    %v1337 = vadd.f32 %v1321, %v945
    %v1338 = vadd.f32 %v1322, %v945
    %v1339 = vadd.f32 %v1323, %v945
    %v1340 = vadd.f32 %v1324, %v945
    %v1341 = vadd.f32 %v1325, %v945
    %v1342 = vadd.f32 %v1326, %v945
    %v1343 = vadd.f32 %v1327, %v945
    %v1344 = vadd.f32 %v1328, %v945
    %v1345 = vadd.f32 %v1329, %v945
    %v1346 = vadd.f32 %v1330, %v945
    %v1347 = vadd.f32 %v1331, %v945
    %v1348 = vadd.f32 %v1332, %v945
    %vm1349 = vcmp.gt.f32.partialorder %v1333, 0.0
    %vm1350 = vcmp.gt.f32.partialorder %v1334, 0.0
    %vm1351 = vcmp.gt.f32.partialorder %v1335, 0.0
    %vm1352 = vcmp.gt.f32.partialorder %v1336, 0.0
    %vm1353 = vcmp.gt.f32.partialorder %v1337, 0.0
    %vm1354 = vcmp.gt.f32.partialorder %v1338, 0.0
    %vm1355 = vcmp.gt.f32.partialorder %v1339, 0.0
    %vm1356 = vcmp.gt.f32.partialorder %v1340, 0.0
    %vm1357 = vcmp.gt.f32.partialorder %v1341, 0.0
    %vm1358 = vcmp.gt.f32.partialorder %v1342, 0.0
    %vm1359 = vcmp.gt.f32.partialorder %v1343, 0.0
    %vm1360 = vcmp.gt.f32.partialorder %v1344, 0.0
    %vm1361 = vcmp.gt.f32.partialorder %v1345, 0.0
    %vm1362 = vcmp.gt.f32.partialorder %v1346, 0.0
    %vm1363 = vcmp.gt.f32.partialorder %v1347, 0.0
    %vm1364 = vcmp.gt.f32.partialorder %v1348, 0.0
    %v1365 = vmul.f32 %v1333, 0.1
    %v1366 = vmul.f32 %v1334, 0.1
    %v1367 = vmul.f32 %v1335, 0.1
    %v1368 = vmul.f32 %v1336, 0.1
    %v1369 = vmul.f32 %v1337, 0.1
    %v1370 = vmul.f32 %v1338, 0.1
    %v1371 = vmul.f32 %v1339, 0.1
    %v1372 = vmul.f32 %v1340, 0.1
    %v1373 = vmul.f32 %v1341, 0.1
    %v1374 = vmul.f32 %v1342, 0.1
    %v1375 = vmul.f32 %v1343, 0.1
    %v1376 = vmul.f32 %v1344, 0.1
    %v1377 = vmul.f32 %v1345, 0.1
    %v1378 = vmul.f32 %v1346, 0.1
    %v1379 = vmul.f32 %v1347, 0.1
    %v1380 = vmul.f32 %v1348, 0.1
    %v1381 = vsel %vm1349, %v1333, %v1365
    %v1382 = vsel %vm1350, %v1334, %v1366
    %v1383 = vsel %vm1351, %v1335, %v1367
    %v1384 = vsel %vm1352, %v1336, %v1368
    %v1385 = vsel %vm1353, %v1337, %v1369
    %v1386 = vsel %vm1354, %v1338, %v1370
    %v1387 = vsel %vm1355, %v1339, %v1371
    %v1388 = vsel %vm1356, %v1340, %v1372
    %v1389 = vsel %vm1357, %v1341, %v1373
    %v1390 = vsel %vm1358, %v1342, %v1374
    %v1391 = vsel %vm1359, %v1343, %v1375
    %v1392 = vsel %vm1360, %v1344, %v1376
    %v1393 = vsel %vm1361, %v1345, %v1377
    %v1394 = vsel %vm1362, %v1346, %v1378
    %v1395 = vsel %vm1363, %v1347, %v1379
    %v1396 = vsel %vm1364, %v1348, %v1380
    %v1397 = vpack.c.bf16 %v1381, %v1381
    %v1398 = vpack.c.bf16 %v1382, %v1382
    %v1399 = vpack.c.bf16 %v1383, %v1383
    %v1400 = vpack.c.bf16 %v1384, %v1384
    %v1401 = vpack.c.bf16 %v1385, %v1385
    %v1402 = vpack.c.bf16 %v1386, %v1386
    %v1403 = vpack.c.bf16 %v1387, %v1387
    %v1404 = vpack.c.bf16 %v1388, %v1388
    %v1405 = vpack.c.bf16 %v1389, %v1389
    %v1406 = vpack.c.bf16 %v1390, %v1390
    %v1407 = vpack.c.bf16 %v1391, %v1391
    %v1408 = vpack.c.bf16 %v1392, %v1392
    %v1409 = vpack.c.bf16 %v1393, %v1393
    %v1410 = vpack.c.bf16 %v1394, %v1394
    %v1411 = vpack.c.bf16 %v1395, %v1395
    %v1412 = vpack.c.bf16 %v1396, %v1396
    %s1413 = scalar_lea.vmem [#allocation2], 732
    %1414 = vst.msk [vmem:[%s1413 + $0x4] sm:$0xf] %vm477, %v1397
    %1415 = vst.msk [vmem:[%s1413 + $0x10] sm:$0xf] %vm477, %v1398
    %1416 = vst.msk [vmem:[%s1413 + $0x1c] sm:$0xf] %vm477, %v1399
    %1417 = vst.msk [vmem:[%s1413 + $0x28] sm:$0xf] %vm477, %v1400
    %1418 = vst.msk [vmem:[%s1413 + $0x34] sm:$0xf] %vm477, %v1401
    %1419 = vst.msk [vmem:[%s1413 + $0x40] sm:$0xf] %vm477, %v1402
    %1420 = vst.msk [vmem:[%s1413 + $0x4c] sm:$0xf] %vm477, %v1403
    %1421 = vst.msk [vmem:[%s1413 + $0x58] sm:$0xf] %vm477, %v1404
    %1422 = vst.msk [vmem:[%s1413 + $0x7c] sm:$0xf] %vm477, %v1405
    %1423 = vst.msk [vmem:[%s1413 + $0x88] sm:$0xf] %vm477, %v1406
    %1424 = vst.msk [vmem:[%s1413 + $0x94] sm:$0xf] %vm477, %v1407
    %1425 = vst.msk [vmem:[%s1413 + $0xa0] sm:$0xf] %vm477, %v1408
    %1426 = vst.msk [vmem:[%s1413 + $0xac] sm:$0xf] %vm477, %v1409
    %1427 = vst.msk [vmem:[%s1413 + $0xb8] sm:$0xf] %vm477, %v1410
    %1428 = vst.msk [vmem:[%s1413 + $0xc4] sm:$0xf] %vm477, %v1411
    %1429 = vst.msk [vmem:[%s1413 + $0xd0] sm:$0xf] %vm477, %v1412
    %v1430 = vadd.f32 %v1301, %v79
    %v1431 = vadd.f32 %v1302, %v80
    %v1432 = vadd.f32 %v1303, %v81
    %v1433 = vadd.f32 %v1304, %v82
    %v1434 = vadd.f32 %v1305, %v83
    %v1435 = vadd.f32 %v1306, %v84
    %v1436 = vadd.f32 %v1307, %v85
    %v1437 = vadd.f32 %v1308, %v86
    %v1438 = vadd.f32 %v1309, %v87
    %v1439 = vadd.f32 %v1310, %v88
    %v1440 = vadd.f32 %v1311, %v89
    %v1441 = vadd.f32 %v1312, %v90
    %v1442 = vadd.f32 %v1313, %v91
    %v1443 = vadd.f32 %v1314, %v92
    %v1444 = vadd.f32 %v1315, %v93
    %v1445 = vadd.f32 %v1316, %v94
    %v1446 = vmul.f32 %v1430, 0.25
    %v1447 = vmul.f32 %v1431, 0.25
    %v1448 = vmul.f32 %v1432, 0.25
    %v1449 = vmul.f32 %v1433, 0.25
    %v1450 = vmul.f32 %v1434, 0.25
    %v1451 = vmul.f32 %v1435, 0.25
    %v1452 = vmul.f32 %v1436, 0.25
    %v1453 = vmul.f32 %v1437, 0.25
    %v1454 = vmul.f32 %v1438, 0.25
    %v1455 = vmul.f32 %v1439, 0.25
    %v1456 = vmul.f32 %v1440, 0.25
    %v1457 = vmul.f32 %v1441, 0.25
    %v1458 = vmul.f32 %v1442, 0.25
    %v1459 = vmul.f32 %v1443, 0.25
    %v1460 = vmul.f32 %v1444, 0.25
    %v1461 = vmul.f32 %v1445, 0.25
    %s1462 = scalar_lea.vmem [#allocation2], 720
    %v1463 = vld [vmem:[%s1462] sm:$0x8]
    %v1464 = vld [vmem:[%s1462 + $0x4] sm:$0xf]
    %v1465 = vld [vmem:[%s1462 + $0xc] sm:$0x8]
    %v1466 = vld [vmem:[%s1462 + $0x10] sm:$0xf]
    %v1467 = vld [vmem:[%s1462 + $0x18] sm:$0x8]
    %v1468 = vld [vmem:[%s1462 + $0x1c] sm:$0xf]
    %v1469 = vld [vmem:[%s1462 + $0x24] sm:$0x8]
    %v1470 = vld [vmem:[%s1462 + $0x28] sm:$0xf]
    %v1471 = vld [vmem:[%s1462 + $0x30] sm:$0x8]
    %v1472 = vld [vmem:[%s1462 + $0x34] sm:$0xf]
    %v1473 = vld [vmem:[%s1462 + $0x3c] sm:$0x8]
    %v1474 = vld [vmem:[%s1462 + $0x40] sm:$0xf]
    %v1475 = vld [vmem:[%s1462 + $0x48] sm:$0x8]
    %v1476 = vld [vmem:[%s1462 + $0x4c] sm:$0xf]
    %v1477 = vld [vmem:[%s1462 + $0x54] sm:$0x8]
    %v1478 = vld [vmem:[%s1462 + $0x58] sm:$0xf]
    %v1479 = vld [vmem:[%s1462 + $0x78] sm:$0x8]
    %v1480 = vld [vmem:[%s1462 + $0x7c] sm:$0xf]
    %v1481 = vld [vmem:[%s1462 + $0x84] sm:$0x8]
    %v1482 = vld [vmem:[%s1462 + $0x88] sm:$0xf]
    %v1483 = vld [vmem:[%s1462 + $0x90] sm:$0x8]
    %v1484 = vld [vmem:[%s1462 + $0x94] sm:$0xf]
    %v1485 = vld [vmem:[%s1462 + $0x9c] sm:$0x8]
    %v1486 = vld [vmem:[%s1462 + $0xa0] sm:$0xf]
    %v1487 = vld [vmem:[%s1462 + $0xa8] sm:$0x8]
    %v1488 = vld [vmem:[%s1462 + $0xac] sm:$0xf]
    %v1489 = vld [vmem:[%s1462 + $0xb4] sm:$0x8]
    %v1490 = vld [vmem:[%s1462 + $0xb8] sm:$0xf]
    %v1491 = vld [vmem:[%s1462 + $0xc0] sm:$0x8]
    %v1492 = vld [vmem:[%s1462 + $0xc4] sm:$0xf]
    %v1493 = vld [vmem:[%s1462 + $0xcc] sm:$0x8]
    %v1494 = vld [vmem:[%s1462 + $0xd0] sm:$0xf]
    %vm1495 = vsmask.f32 4368
    %vm1496 = vmor %vm725, %vm1495
    %v1498 = vshrl.u32 %v1463, 16
    %v1500 = vrot.slane %v1498, 7
    %v1501 = vrot.slane %v1500, 4
    %v1503 = vshrl.u32 %v1464, 16
    %v1505 = vrot.slane %v1503, 7
    %v1506 = vshll.u32 %v1464, 16
    %v1508 = vor.u32 %v1505, %v1506
    %v1509 = vsel %vm1496, %v1501, %v1508
    %v1511 = vshrl.u32 %v1465, 16
    %v1513 = vrot.slane %v1511, 7
    %v1514 = vrot.slane %v1513, 4
    %v1516 = vshrl.u32 %v1466, 16
    %v1518 = vrot.slane %v1516, 7
    %v1519 = vshll.u32 %v1466, 16
    %v1521 = vor.u32 %v1518, %v1519
    %v1522 = vsel %vm1496, %v1514, %v1521
    %v1524 = vshrl.u32 %v1467, 16
    %v1526 = vrot.slane %v1524, 7
    %v1527 = vrot.slane %v1526, 4
    %v1529 = vshrl.u32 %v1468, 16
    %v1531 = vrot.slane %v1529, 7
    %v1532 = vshll.u32 %v1468, 16
    %v1534 = vor.u32 %v1531, %v1532
    %v1535 = vsel %vm1496, %v1527, %v1534
    %v1537 = vshrl.u32 %v1469, 16
    %v1539 = vrot.slane %v1537, 7
    %v1540 = vrot.slane %v1539, 4
    %v1542 = vshrl.u32 %v1470, 16
    %v1544 = vrot.slane %v1542, 7
    %v1545 = vshll.u32 %v1470, 16
    %v1547 = vor.u32 %v1544, %v1545
    %v1548 = vsel %vm1496, %v1540, %v1547
    %v1550 = vshrl.u32 %v1471, 16
    %v1552 = vrot.slane %v1550, 7
    %v1553 = vrot.slane %v1552, 4
    %v1555 = vshrl.u32 %v1472, 16
    %v1557 = vrot.slane %v1555, 7
    %v1558 = vshll.u32 %v1472, 16
    %v1560 = vor.u32 %v1557, %v1558
    %v1561 = vsel %vm1496, %v1553, %v1560
    %v1563 = vshrl.u32 %v1473, 16
    %v1565 = vrot.slane %v1563, 7
    %v1566 = vrot.slane %v1565, 4
    %v1568 = vshrl.u32 %v1474, 16
    %v1570 = vrot.slane %v1568, 7
    %v1571 = vshll.u32 %v1474, 16
    %v1573 = vor.u32 %v1570, %v1571
    %v1574 = vsel %vm1496, %v1566, %v1573
    %v1576 = vshrl.u32 %v1475, 16
    %v1578 = vrot.slane %v1576, 7
    %v1579 = vrot.slane %v1578, 4
    %v1581 = vshrl.u32 %v1476, 16
    %v1583 = vrot.slane %v1581, 7
    %v1584 = vshll.u32 %v1476, 16
    %v1586 = vor.u32 %v1583, %v1584
    %v1587 = vsel %vm1496, %v1579, %v1586
    %v1589 = vshrl.u32 %v1477, 16
    %v1591 = vrot.slane %v1589, 7
    %v1592 = vrot.slane %v1591, 4
    %v1594 = vshrl.u32 %v1478, 16
    %v1596 = vrot.slane %v1594, 7
    %v1597 = vshll.u32 %v1478, 16
    %v1599 = vor.u32 %v1596, %v1597
    %v1600 = vsel %vm1496, %v1592, %v1599
    %v1602 = vshrl.u32 %v1479, 16
    %v1604 = vrot.slane %v1602, 7
    %v1605 = vrot.slane %v1604, 4
    %v1607 = vshrl.u32 %v1480, 16
    %v1609 = vrot.slane %v1607, 7
    %v1610 = vshll.u32 %v1480, 16
    %v1612 = vor.u32 %v1609, %v1610
    %v1613 = vsel %vm1496, %v1605, %v1612
    %v1615 = vshrl.u32 %v1481, 16
    %v1617 = vrot.slane %v1615, 7
    %v1618 = vrot.slane %v1617, 4
    %v1620 = vshrl.u32 %v1482, 16
    %v1622 = vrot.slane %v1620, 7
    %v1623 = vshll.u32 %v1482, 16
    %v1625 = vor.u32 %v1622, %v1623
    %v1626 = vsel %vm1496, %v1618, %v1625
    %v1628 = vshrl.u32 %v1483, 16
    %v1630 = vrot.slane %v1628, 7
    %v1631 = vrot.slane %v1630, 4
    %v1633 = vshrl.u32 %v1484, 16
    %v1635 = vrot.slane %v1633, 7
    %v1636 = vshll.u32 %v1484, 16
    %v1638 = vor.u32 %v1635, %v1636
    %v1639 = vsel %vm1496, %v1631, %v1638
    %v1641 = vshrl.u32 %v1485, 16
    %v1643 = vrot.slane %v1641, 7
    %v1644 = vrot.slane %v1643, 4
    %v1646 = vshrl.u32 %v1486, 16
    %v1648 = vrot.slane %v1646, 7
    %v1649 = vshll.u32 %v1486, 16
    %v1651 = vor.u32 %v1648, %v1649
    %v1652 = vsel %vm1496, %v1644, %v1651
    %v1654 = vshrl.u32 %v1487, 16
    %v1656 = vrot.slane %v1654, 7
    %v1657 = vrot.slane %v1656, 4
    %v1659 = vshrl.u32 %v1488, 16
    %v1661 = vrot.slane %v1659, 7
    %v1662 = vshll.u32 %v1488, 16
    %v1664 = vor.u32 %v1661, %v1662
    %v1665 = vsel %vm1496, %v1657, %v1664
    %v1667 = vshrl.u32 %v1489, 16
    %v1669 = vrot.slane %v1667, 7
    %v1670 = vrot.slane %v1669, 4
    %v1672 = vshrl.u32 %v1490, 16
    %v1674 = vrot.slane %v1672, 7
    %v1675 = vshll.u32 %v1490, 16
    %v1677 = vor.u32 %v1674, %v1675
    %v1678 = vsel %vm1496, %v1670, %v1677
    %v1680 = vshrl.u32 %v1491, 16
    %v1682 = vrot.slane %v1680, 7
    %v1683 = vrot.slane %v1682, 4
    %v1685 = vshrl.u32 %v1492, 16
    %v1687 = vrot.slane %v1685, 7
    %v1688 = vshll.u32 %v1492, 16
    %v1690 = vor.u32 %v1687, %v1688
    %v1691 = vsel %vm1496, %v1683, %v1690
    %v1693 = vshrl.u32 %v1493, 16
    %v1695 = vrot.slane %v1693, 7
    %v1696 = vrot.slane %v1695, 4
    %v1698 = vshrl.u32 %v1494, 16
    %v1700 = vrot.slane %v1698, 7
    %v1701 = vshll.u32 %v1494, 16
    %v1703 = vor.u32 %v1700, %v1701
    %v1704 = vsel %vm1496, %v1696, %v1703
    %1721 = vst.msk [vmem:[#allocation3] sm:$0xf] %vm477, %v1509
    %1722 = vst.msk [vmem:[#allocation3 + $0x4] sm:$0xf] %vm477, %v1522
    %1723 = vst.msk [vmem:[#allocation3 + $0x8] sm:$0xf] %vm477, %v1535
    %1724 = vst.msk [vmem:[#allocation3 + $0xc] sm:$0xf] %vm477, %v1548
    %1725 = vst.msk [vmem:[#allocation3 + $0x10] sm:$0xf] %vm477, %v1561
    %1726 = vst.msk [vmem:[#allocation3 + $0x14] sm:$0xf] %vm477, %v1574
    %1727 = vst.msk [vmem:[#allocation3 + $0x18] sm:$0xf] %vm477, %v1587
    %1728 = vst.msk [vmem:[#allocation3 + $0x1c] sm:$0xf] %vm477, %v1600
    %1729 = vst.msk [vmem:[#allocation3 + $0x20] sm:$0xf] %vm477, %v1613
    %1730 = vst.msk [vmem:[#allocation3 + $0x24] sm:$0xf] %vm477, %v1626
    %1731 = vst.msk [vmem:[#allocation3 + $0x28] sm:$0xf] %vm477, %v1639
    %1732 = vst.msk [vmem:[#allocation3 + $0x2c] sm:$0xf] %vm477, %v1652
    %1733 = vst.msk [vmem:[#allocation3 + $0x30] sm:$0xf] %vm477, %v1665
    %1734 = vst.msk [vmem:[#allocation3 + $0x34] sm:$0xf] %vm477, %v1678
    %1735 = vst.msk [vmem:[#allocation3 + $0x38] sm:$0xf] %vm477, %v1691
    %1736 = vst.msk [vmem:[#allocation3 + $0x3c] sm:$0xf] %vm477, %v1704
    %s1737 = scalar_lea.vmem [#allocation2], 480
    %v1738 = vld [vmem:[%s1737 + $0x4] sm:$0xf]
    %v1739 = vld [vmem:[%s1737 + $0x10] sm:$0xf]
    %v1740 = vld [vmem:[%s1737 + $0x1c] sm:$0xf]
    %v1741 = vld [vmem:[%s1737 + $0x28] sm:$0xf]
    %v1742 = vld [vmem:[%s1737 + $0x34] sm:$0xf]
    %v1743 = vld [vmem:[%s1737 + $0x40] sm:$0xf]
    %v1744 = vld [vmem:[%s1737 + $0x4c] sm:$0xf]
    %v1745 = vld [vmem:[%s1737 + $0x58] sm:$0xf]
    %v1746 = vld [vmem:[%s1737 + $0x7c] sm:$0xf]
    %v1747 = vld [vmem:[%s1737 + $0x88] sm:$0xf]
    %v1748 = vld [vmem:[%s1737 + $0x94] sm:$0xf]
    %v1749 = vld [vmem:[%s1737 + $0xa0] sm:$0xf]
    %v1750 = vld [vmem:[%s1737 + $0xac] sm:$0xf]
    %v1751 = vld [vmem:[%s1737 + $0xb8] sm:$0xf]
    %v1752 = vld [vmem:[%s1737 + $0xc4] sm:$0xf]
    %v1753 = vld [vmem:[%s1737 + $0xd0] sm:$0xf]
    %1770 = vrot.lane.b32.xlu0 %v1738, 4
    %v1771 = vpop.permute.xlu0 %1770
    %1772 = vrot.lane.b32.xlu0 %v1739, 4
    %v1773 = vpop.permute.xlu0 %1772
    %1774 = vrot.lane.b32.xlu0 %v1740, 4
    %v1775 = vpop.permute.xlu0 %1774
    %1776 = vrot.lane.b32.xlu0 %v1741, 4
    %v1777 = vpop.permute.xlu0 %1776
    %1778 = vrot.lane.b32.xlu0 %v1742, 4
    %v1779 = vpop.permute.xlu0 %1778
    %1780 = vrot.lane.b32.xlu0 %v1743, 4
    %v1781 = vpop.permute.xlu0 %1780
    %1782 = vrot.lane.b32.xlu0 %v1744, 4
    %v1783 = vpop.permute.xlu0 %1782
    %1784 = vrot.lane.b32.xlu0 %v1745, 4
    %v1785 = vpop.permute.xlu0 %1784
    %1786 = vrot.lane.b32.xlu0 %v1746, 4
    %v1787 = vpop.permute.xlu0 %1786
    %1788 = vrot.lane.b32.xlu0 %v1747, 4
    %v1789 = vpop.permute.xlu0 %1788
    %1790 = vrot.lane.b32.xlu0 %v1748, 4
    %v1791 = vpop.permute.xlu0 %1790
    %1792 = vrot.lane.b32.xlu0 %v1749, 4
    %v1793 = vpop.permute.xlu0 %1792
    %1794 = vrot.lane.b32.xlu0 %v1750, 4
    %v1795 = vpop.permute.xlu0 %1794
    %1796 = vrot.lane.b32.xlu0 %v1751, 4
    %v1797 = vpop.permute.xlu0 %1796
    %1798 = vrot.lane.b32.xlu0 %v1752, 4
    %v1799 = vpop.permute.xlu0 %1798
    %1800 = vrot.lane.b32.xlu0 %v1753, 4
    %v1801 = vpop.permute.xlu0 %1800
    %vm1818 = vcmask 60448
    %1819 = vst.msk [vmem:[#allocation3] sm:$0xf] %vm1818, %v1771
    %1820 = vst.msk [vmem:[#allocation3 + $0x4] sm:$0xf] %vm1818, %v1773
    %1821 = vst.msk [vmem:[#allocation3 + $0x8] sm:$0xf] %vm1818, %v1775
    %1822 = vst.msk [vmem:[#allocation3 + $0xc] sm:$0xf] %vm1818, %v1777
    %1823 = vst.msk [vmem:[#allocation3 + $0x10] sm:$0xf] %vm1818, %v1779
    %1824 = vst.msk [vmem:[#allocation3 + $0x14] sm:$0xf] %vm1818, %v1781
    %1825 = vst.msk [vmem:[#allocation3 + $0x18] sm:$0xf] %vm1818, %v1783
    %1826 = vst.msk [vmem:[#allocation3 + $0x1c] sm:$0xf] %vm1818, %v1785
    %1827 = vst.msk [vmem:[#allocation3 + $0x20] sm:$0xf] %vm1818, %v1787
    %1828 = vst.msk [vmem:[#allocation3 + $0x24] sm:$0xf] %vm1818, %v1789
    %1829 = vst.msk [vmem:[#allocation3 + $0x28] sm:$0xf] %vm1818, %v1791
    %1830 = vst.msk [vmem:[#allocation3 + $0x2c] sm:$0xf] %vm1818, %v1793
    %1831 = vst.msk [vmem:[#allocation3 + $0x30] sm:$0xf] %vm1818, %v1795
    %1832 = vst.msk [vmem:[#allocation3 + $0x34] sm:$0xf] %vm1818, %v1797
    %1833 = vst.msk [vmem:[#allocation3 + $0x38] sm:$0xf] %vm1818, %v1799
    %1834 = vst.msk [vmem:[#allocation3 + $0x3c] sm:$0xf] %vm1818, %v1801
    %v1835 = vld [vmem:[%s1462 + $0x4] sm:$0xf]
    %v1836 = vld [vmem:[%s1462 + $0x10] sm:$0xf]
    %v1837 = vld [vmem:[%s1462 + $0x1c] sm:$0xf]
    %v1838 = vld [vmem:[%s1462 + $0x28] sm:$0xf]
    %v1839 = vld [vmem:[%s1462 + $0x34] sm:$0xf]
    %v1840 = vld [vmem:[%s1462 + $0x40] sm:$0xf]
    %v1841 = vld [vmem:[%s1462 + $0x4c] sm:$0xf]
    %v1842 = vld [vmem:[%s1462 + $0x58] sm:$0xf]
    %v1843 = vld [vmem:[%s1462 + $0x7c] sm:$0xf]
    %v1844 = vld [vmem:[%s1462 + $0x88] sm:$0xf]
    %v1845 = vld [vmem:[%s1462 + $0x94] sm:$0xf]
    %v1846 = vld [vmem:[%s1462 + $0xa0] sm:$0xf]
    %v1847 = vld [vmem:[%s1462 + $0xac] sm:$0xf]
    %v1848 = vld [vmem:[%s1462 + $0xb8] sm:$0xf]
    %v1849 = vld [vmem:[%s1462 + $0xc4] sm:$0xf]
    %v1850 = vld [vmem:[%s1462 + $0xd0] sm:$0xf]
    %1867 = vrot.lane.b32.xlu0 %v1835, 8
    %v1868 = vpop.permute.xlu0 %1867
    %1869 = vrot.lane.b32.xlu0 %v1836, 8
    %v1870 = vpop.permute.xlu0 %1869
    %1871 = vrot.lane.b32.xlu0 %v1837, 8
    %v1872 = vpop.permute.xlu0 %1871
    %1873 = vrot.lane.b32.xlu0 %v1838, 8
    %v1874 = vpop.permute.xlu0 %1873
    %1875 = vrot.lane.b32.xlu0 %v1839, 8
    %v1876 = vpop.permute.xlu0 %1875
    %1877 = vrot.lane.b32.xlu0 %v1840, 8
    %v1878 = vpop.permute.xlu0 %1877
    %1879 = vrot.lane.b32.xlu0 %v1841, 8
    %v1880 = vpop.permute.xlu0 %1879
    %1881 = vrot.lane.b32.xlu0 %v1842, 8
    %v1882 = vpop.permute.xlu0 %1881
    %1883 = vrot.lane.b32.xlu0 %v1843, 8
    %v1884 = vpop.permute.xlu0 %1883
    %1885 = vrot.lane.b32.xlu0 %v1844, 8
    %v1886 = vpop.permute.xlu0 %1885
    %1887 = vrot.lane.b32.xlu0 %v1845, 8
    %v1888 = vpop.permute.xlu0 %1887
    %1889 = vrot.lane.b32.xlu0 %v1846, 8
    %v1890 = vpop.permute.xlu0 %1889
    %1891 = vrot.lane.b32.xlu0 %v1847, 8
    %v1892 = vpop.permute.xlu0 %1891
    %1893 = vrot.lane.b32.xlu0 %v1848, 8
    %v1894 = vpop.permute.xlu0 %1893
    %1895 = vrot.lane.b32.xlu0 %v1849, 8
    %v1896 = vpop.permute.xlu0 %1895
    %1897 = vrot.lane.b32.xlu0 %v1850, 8
    %v1898 = vpop.permute.xlu0 %1897
    %vm1915 = vcmask 93248
    %1916 = vst.msk [vmem:[#allocation3] sm:$0xf] %vm1915, %v1868
    %1917 = vst.msk [vmem:[#allocation3 + $0x4] sm:$0xf] %vm1915, %v1870
    %1918 = vst.msk [vmem:[#allocation3 + $0x8] sm:$0xf] %vm1915, %v1872
    %1919 = vst.msk [vmem:[#allocation3 + $0xc] sm:$0xf] %vm1915, %v1874
    %1920 = vst.msk [vmem:[#allocation3 + $0x10] sm:$0xf] %vm1915, %v1876
    %1921 = vst.msk [vmem:[#allocation3 + $0x14] sm:$0xf] %vm1915, %v1878
    %1922 = vst.msk [vmem:[#allocation3 + $0x18] sm:$0xf] %vm1915, %v1880
    %1923 = vst.msk [vmem:[#allocation3 + $0x1c] sm:$0xf] %vm1915, %v1882
    %1924 = vst.msk [vmem:[#allocation3 + $0x20] sm:$0xf] %vm1915, %v1884
    %1925 = vst.msk [vmem:[#allocation3 + $0x24] sm:$0xf] %vm1915, %v1886
    %1926 = vst.msk [vmem:[#allocation3 + $0x28] sm:$0xf] %vm1915, %v1888
    %1927 = vst.msk [vmem:[#allocation3 + $0x2c] sm:$0xf] %vm1915, %v1890
    %1928 = vst.msk [vmem:[#allocation3 + $0x30] sm:$0xf] %vm1915, %v1892
    %1929 = vst.msk [vmem:[#allocation3 + $0x34] sm:$0xf] %vm1915, %v1894
    %1930 = vst.msk [vmem:[#allocation3 + $0x38] sm:$0xf] %vm1915, %v1896
    %1931 = vst.msk [vmem:[#allocation3 + $0x3c] sm:$0xf] %vm1915, %v1898
    %v1932 = vld [vmem:[%s1155] sm:$0x8]
    %v1933 = vld [vmem:[%s1155 + $0x4] sm:$0xf]
    %v1934 = vld [vmem:[%s1155 + $0xc] sm:$0x8]
    %v1935 = vld [vmem:[%s1155 + $0x10] sm:$0xf]
    %v1936 = vld [vmem:[%s1155 + $0x18] sm:$0x8]
    %v1937 = vld [vmem:[%s1155 + $0x1c] sm:$0xf]
    %v1938 = vld [vmem:[%s1155 + $0x24] sm:$0x8]
    %v1939 = vld [vmem:[%s1155 + $0x28] sm:$0xf]
    %v1940 = vld [vmem:[%s1155 + $0x30] sm:$0x8]
    %v1941 = vld [vmem:[%s1155 + $0x34] sm:$0xf]
    %v1942 = vld [vmem:[%s1155 + $0x3c] sm:$0x8]
    %v1943 = vld [vmem:[%s1155 + $0x40] sm:$0xf]
    %v1944 = vld [vmem:[%s1155 + $0x48] sm:$0x8]
    %v1945 = vld [vmem:[%s1155 + $0x4c] sm:$0xf]
    %v1946 = vld [vmem:[%s1155 + $0x54] sm:$0x8]
    %v1947 = vld [vmem:[%s1155 + $0x58] sm:$0xf]
    %v1948 = vld [vmem:[%s1155 + $0x78] sm:$0x8]
    %v1949 = vld [vmem:[%s1155 + $0x7c] sm:$0xf]
    %v1950 = vld [vmem:[%s1155 + $0x84] sm:$0x8]
    %v1951 = vld [vmem:[%s1155 + $0x88] sm:$0xf]
    %v1952 = vld [vmem:[%s1155 + $0x90] sm:$0x8]
    %v1953 = vld [vmem:[%s1155 + $0x94] sm:$0xf]
    %v1954 = vld [vmem:[%s1155 + $0x9c] sm:$0x8]
    %v1955 = vld [vmem:[%s1155 + $0xa0] sm:$0xf]
    %v1956 = vld [vmem:[%s1155 + $0xa8] sm:$0x8]
    %v1957 = vld [vmem:[%s1155 + $0xac] sm:$0xf]
    %v1958 = vld [vmem:[%s1155 + $0xb4] sm:$0x8]
    %v1959 = vld [vmem:[%s1155 + $0xb8] sm:$0xf]
    %v1960 = vld [vmem:[%s1155 + $0xc0] sm:$0x8]
    %v1961 = vld [vmem:[%s1155 + $0xc4] sm:$0xf]
    %v1962 = vld [vmem:[%s1155 + $0xcc] sm:$0x8]
    %v1963 = vld [vmem:[%s1155 + $0xd0] sm:$0xf]
    %v1965 = vshrl.u32 %v1932, 16
    %v1967 = vrot.slane %v1965, 7
    %v1968 = vrot.slane %v1967, 4
    %v1970 = vshrl.u32 %v1933, 16
    %v1972 = vrot.slane %v1970, 7
    %v1973 = vshll.u32 %v1933, 16
    %v1975 = vor.u32 %v1972, %v1973
    %v1976 = vsel %vm1496, %v1968, %v1975
    %v1978 = vshrl.u32 %v1934, 16
    %v1980 = vrot.slane %v1978, 7
    %v1981 = vrot.slane %v1980, 4
    %v1983 = vshrl.u32 %v1935, 16
    %v1985 = vrot.slane %v1983, 7
    %v1986 = vshll.u32 %v1935, 16
    %v1988 = vor.u32 %v1985, %v1986
    %v1989 = vsel %vm1496, %v1981, %v1988
    %v1991 = vshrl.u32 %v1936, 16
    %v1993 = vrot.slane %v1991, 7
    %v1994 = vrot.slane %v1993, 4
    %v1996 = vshrl.u32 %v1937, 16
    %v1998 = vrot.slane %v1996, 7
    %v1999 = vshll.u32 %v1937, 16
    %v2001 = vor.u32 %v1998, %v1999
    %v2002 = vsel %vm1496, %v1994, %v2001
    %v2004 = vshrl.u32 %v1938, 16
    %v2006 = vrot.slane %v2004, 7
    %v2007 = vrot.slane %v2006, 4
    %v2009 = vshrl.u32 %v1939, 16
    %v2011 = vrot.slane %v2009, 7
    %v2012 = vshll.u32 %v1939, 16
    %v2014 = vor.u32 %v2011, %v2012
    %v2015 = vsel %vm1496, %v2007, %v2014
    %v2017 = vshrl.u32 %v1940, 16
    %v2019 = vrot.slane %v2017, 7
    %v2020 = vrot.slane %v2019, 4
    %v2022 = vshrl.u32 %v1941, 16
    %v2024 = vrot.slane %v2022, 7
    %v2025 = vshll.u32 %v1941, 16
    %v2027 = vor.u32 %v2024, %v2025
    %v2028 = vsel %vm1496, %v2020, %v2027
    %v2030 = vshrl.u32 %v1942, 16
    %v2032 = vrot.slane %v2030, 7
    %v2033 = vrot.slane %v2032, 4
    %v2035 = vshrl.u32 %v1943, 16
    %v2037 = vrot.slane %v2035, 7
    %v2038 = vshll.u32 %v1943, 16
    %v2040 = vor.u32 %v2037, %v2038
    %v2041 = vsel %vm1496, %v2033, %v2040
    %v2043 = vshrl.u32 %v1944, 16
    %v2045 = vrot.slane %v2043, 7
    %v2046 = vrot.slane %v2045, 4
    %v2048 = vshrl.u32 %v1945, 16
    %v2050 = vrot.slane %v2048, 7
    %v2051 = vshll.u32 %v1945, 16
    %v2053 = vor.u32 %v2050, %v2051
    %v2054 = vsel %vm1496, %v2046, %v2053
    %v2056 = vshrl.u32 %v1946, 16
    %v2058 = vrot.slane %v2056, 7
    %v2059 = vrot.slane %v2058, 4
    %v2061 = vshrl.u32 %v1947, 16
    %v2063 = vrot.slane %v2061, 7
    %v2064 = vshll.u32 %v1947, 16
    %v2066 = vor.u32 %v2063, %v2064
    %v2067 = vsel %vm1496, %v2059, %v2066
    %v2069 = vshrl.u32 %v1948, 16
    %v2071 = vrot.slane %v2069, 7
    %v2072 = vrot.slane %v2071, 4
    %v2074 = vshrl.u32 %v1949, 16
    %v2076 = vrot.slane %v2074, 7
    %v2077 = vshll.u32 %v1949, 16
    %v2079 = vor.u32 %v2076, %v2077
    %v2080 = vsel %vm1496, %v2072, %v2079
    %v2082 = vshrl.u32 %v1950, 16
    %v2084 = vrot.slane %v2082, 7
    %v2085 = vrot.slane %v2084, 4
    %v2087 = vshrl.u32 %v1951, 16
    %v2089 = vrot.slane %v2087, 7
    %v2090 = vshll.u32 %v1951, 16
    %v2092 = vor.u32 %v2089, %v2090
    %v2093 = vsel %vm1496, %v2085, %v2092
    %v2095 = vshrl.u32 %v1952, 16
    %v2097 = vrot.slane %v2095, 7
    %v2098 = vrot.slane %v2097, 4
    %v2100 = vshrl.u32 %v1953, 16
    %v2102 = vrot.slane %v2100, 7
    %v2103 = vshll.u32 %v1953, 16
    %v2105 = vor.u32 %v2102, %v2103
    %v2106 = vsel %vm1496, %v2098, %v2105
    %v2108 = vshrl.u32 %v1954, 16
    %v2110 = vrot.slane %v2108, 7
    %v2111 = vrot.slane %v2110, 4
    %v2113 = vshrl.u32 %v1955, 16
    %v2115 = vrot.slane %v2113, 7
    %v2116 = vshll.u32 %v1955, 16
    %v2118 = vor.u32 %v2115, %v2116
    %v2119 = vsel %vm1496, %v2111, %v2118
    %v2121 = vshrl.u32 %v1956, 16
    %v2123 = vrot.slane %v2121, 7
    %v2124 = vrot.slane %v2123, 4
    %v2126 = vshrl.u32 %v1957, 16
    %v2128 = vrot.slane %v2126, 7
    %v2129 = vshll.u32 %v1957, 16
    %v2131 = vor.u32 %v2128, %v2129
    %v2132 = vsel %vm1496, %v2124, %v2131
    %v2134 = vshrl.u32 %v1958, 16
    %v2136 = vrot.slane %v2134, 7
    %v2137 = vrot.slane %v2136, 4
    %v2139 = vshrl.u32 %v1959, 16
    %v2141 = vrot.slane %v2139, 7
    %v2142 = vshll.u32 %v1959, 16
    %v2144 = vor.u32 %v2141, %v2142
    %v2145 = vsel %vm1496, %v2137, %v2144
    %v2147 = vshrl.u32 %v1960, 16
    %v2149 = vrot.slane %v2147, 7
    %v2150 = vrot.slane %v2149, 4
    %v2152 = vshrl.u32 %v1961, 16
    %v2154 = vrot.slane %v2152, 7
    %v2155 = vshll.u32 %v1961, 16
    %v2157 = vor.u32 %v2154, %v2155
    %v2158 = vsel %vm1496, %v2150, %v2157
    %v2160 = vshrl.u32 %v1962, 16
    %v2162 = vrot.slane %v2160, 7
    %v2163 = vrot.slane %v2162, 4
    %v2165 = vshrl.u32 %v1963, 16
    %v2167 = vrot.slane %v2165, 7
    %v2168 = vshll.u32 %v1963, 16
    %v2170 = vor.u32 %v2167, %v2168
    %v2171 = vsel %vm1496, %v2163, %v2170
    %2172 = vrot.lane.b32.xlu0 %v1976, 12
    %v2173 = vpop.permute.xlu0 %2172
    %2174 = vrot.lane.b32.xlu0 %v1989, 12
    %v2175 = vpop.permute.xlu0 %2174
    %2176 = vrot.lane.b32.xlu0 %v2002, 12
    %v2177 = vpop.permute.xlu0 %2176
    %2178 = vrot.lane.b32.xlu0 %v2015, 12
    %v2179 = vpop.permute.xlu0 %2178
    %2180 = vrot.lane.b32.xlu0 %v2028, 12
    %v2181 = vpop.permute.xlu0 %2180
    %2182 = vrot.lane.b32.xlu0 %v2041, 12
    %v2183 = vpop.permute.xlu0 %2182
    %2184 = vrot.lane.b32.xlu0 %v2054, 12
    %v2185 = vpop.permute.xlu0 %2184
    %2186 = vrot.lane.b32.xlu0 %v2067, 12
    %v2187 = vpop.permute.xlu0 %2186
    %2188 = vrot.lane.b32.xlu0 %v2080, 12
    %v2189 = vpop.permute.xlu0 %2188
    %2190 = vrot.lane.b32.xlu0 %v2093, 12
    %v2191 = vpop.permute.xlu0 %2190
    %2192 = vrot.lane.b32.xlu0 %v2106, 12
    %v2193 = vpop.permute.xlu0 %2192
    %2194 = vrot.lane.b32.xlu0 %v2119, 12
    %v2195 = vpop.permute.xlu0 %2194
    %2196 = vrot.lane.b32.xlu0 %v2132, 12
    %v2197 = vpop.permute.xlu0 %2196
    %2198 = vrot.lane.b32.xlu0 %v2145, 12
    %v2199 = vpop.permute.xlu0 %2198
    %2200 = vrot.lane.b32.xlu0 %v2158, 12
    %v2201 = vpop.permute.xlu0 %2200
    %2202 = vrot.lane.b32.xlu0 %v2171, 12
    %v2203 = vpop.permute.xlu0 %2202
    %vm2220 = vcmask 126048
    %2221 = vst.msk [vmem:[#allocation3] sm:$0xf] %vm2220, %v2173
    %2222 = vst.msk [vmem:[#allocation3 + $0x4] sm:$0xf] %vm2220, %v2175
    %2223 = vst.msk [vmem:[#allocation3 + $0x8] sm:$0xf] %vm2220, %v2177
    %2224 = vst.msk [vmem:[#allocation3 + $0xc] sm:$0xf] %vm2220, %v2179
    %2225 = vst.msk [vmem:[#allocation3 + $0x10] sm:$0xf] %vm2220, %v2181
    %2226 = vst.msk [vmem:[#allocation3 + $0x14] sm:$0xf] %vm2220, %v2183
    %2227 = vst.msk [vmem:[#allocation3 + $0x18] sm:$0xf] %vm2220, %v2185
    %2228 = vst.msk [vmem:[#allocation3 + $0x1c] sm:$0xf] %vm2220, %v2187
    %2229 = vst.msk [vmem:[#allocation3 + $0x20] sm:$0xf] %vm2220, %v2189
    %2230 = vst.msk [vmem:[#allocation3 + $0x24] sm:$0xf] %vm2220, %v2191
    %2231 = vst.msk [vmem:[#allocation3 + $0x28] sm:$0xf] %vm2220, %v2193
    %2232 = vst.msk [vmem:[#allocation3 + $0x2c] sm:$0xf] %vm2220, %v2195
    %2233 = vst.msk [vmem:[#allocation3 + $0x30] sm:$0xf] %vm2220, %v2197
    %2234 = vst.msk [vmem:[#allocation3 + $0x34] sm:$0xf] %vm2220, %v2199
    %2235 = vst.msk [vmem:[#allocation3 + $0x38] sm:$0xf] %vm2220, %v2201
    %2236 = vst.msk [vmem:[#allocation3 + $0x3c] sm:$0xf] %vm2220, %v2203
    %v2237 = vld [vmem:[%s528 + $0x4] sm:$0xf]
    %v2238 = vld [vmem:[%s528 + $0x10] sm:$0xf]
    %v2239 = vld [vmem:[%s528 + $0x1c] sm:$0xf]
    %v2240 = vld [vmem:[%s528 + $0x28] sm:$0xf]
    %v2241 = vld [vmem:[%s528 + $0x34] sm:$0xf]
    %v2242 = vld [vmem:[%s528 + $0x40] sm:$0xf]
    %v2243 = vld [vmem:[%s528 + $0x4c] sm:$0xf]
    %v2244 = vld [vmem:[%s528 + $0x58] sm:$0xf]
    %v2245 = vld [vmem:[%s528 + $0x7c] sm:$0xf]
    %v2246 = vld [vmem:[%s528 + $0x88] sm:$0xf]
    %v2247 = vld [vmem:[%s528 + $0x94] sm:$0xf]
    %v2248 = vld [vmem:[%s528 + $0xa0] sm:$0xf]
    %v2249 = vld [vmem:[%s528 + $0xac] sm:$0xf]
    %v2250 = vld [vmem:[%s528 + $0xb8] sm:$0xf]
    %v2251 = vld [vmem:[%s528 + $0xc4] sm:$0xf]
    %v2252 = vld [vmem:[%s528 + $0xd0] sm:$0xf]
    %2269 = vrot.lane.b32.xlu0 %v2237, 16
    %v2270 = vpop.permute.xlu0 %2269
    %2271 = vrot.lane.b32.xlu0 %v2238, 16
    %v2272 = vpop.permute.xlu0 %2271
    %2273 = vrot.lane.b32.xlu0 %v2239, 16
    %v2274 = vpop.permute.xlu0 %2273
    %2275 = vrot.lane.b32.xlu0 %v2240, 16
    %v2276 = vpop.permute.xlu0 %2275
    %2277 = vrot.lane.b32.xlu0 %v2241, 16
    %v2278 = vpop.permute.xlu0 %2277
    %2279 = vrot.lane.b32.xlu0 %v2242, 16
    %v2280 = vpop.permute.xlu0 %2279
    %2281 = vrot.lane.b32.xlu0 %v2243, 16
    %v2282 = vpop.permute.xlu0 %2281
    %2283 = vrot.lane.b32.xlu0 %v2244, 16
    %v2284 = vpop.permute.xlu0 %2283
    %2285 = vrot.lane.b32.xlu0 %v2245, 16
    %v2286 = vpop.permute.xlu0 %2285
    %2287 = vrot.lane.b32.xlu0 %v2246, 16
    %v2288 = vpop.permute.xlu0 %2287
    %2289 = vrot.lane.b32.xlu0 %v2247, 16
    %v2290 = vpop.permute.xlu0 %2289
    %2291 = vrot.lane.b32.xlu0 %v2248, 16
    %v2292 = vpop.permute.xlu0 %2291
    %2293 = vrot.lane.b32.xlu0 %v2249, 16
    %v2294 = vpop.permute.xlu0 %2293
    %2295 = vrot.lane.b32.xlu0 %v2250, 16
    %v2296 = vpop.permute.xlu0 %2295
    %2297 = vrot.lane.b32.xlu0 %v2251, 16
    %v2298 = vpop.permute.xlu0 %2297
    %2299 = vrot.lane.b32.xlu0 %v2252, 16
    %v2300 = vpop.permute.xlu0 %2299
    %vm2317 = vcmask 158848
    %2318 = vst.msk [vmem:[#allocation3] sm:$0xf] %vm2317, %v2270
    %2319 = vst.msk [vmem:[#allocation3 + $0x4] sm:$0xf] %vm2317, %v2272
    %2320 = vst.msk [vmem:[#allocation3 + $0x8] sm:$0xf] %vm2317, %v2274
    %2321 = vst.msk [vmem:[#allocation3 + $0xc] sm:$0xf] %vm2317, %v2276
    %2322 = vst.msk [vmem:[#allocation3 + $0x10] sm:$0xf] %vm2317, %v2278
    %2323 = vst.msk [vmem:[#allocation3 + $0x14] sm:$0xf] %vm2317, %v2280
    %2324 = vst.msk [vmem:[#allocation3 + $0x18] sm:$0xf] %vm2317, %v2282
    %2325 = vst.msk [vmem:[#allocation3 + $0x1c] sm:$0xf] %vm2317, %v2284
    %2326 = vst.msk [vmem:[#allocation3 + $0x20] sm:$0xf] %vm2317, %v2286
    %2327 = vst.msk [vmem:[#allocation3 + $0x24] sm:$0xf] %vm2317, %v2288
    %2328 = vst.msk [vmem:[#allocation3 + $0x28] sm:$0xf] %vm2317, %v2290
    %2329 = vst.msk [vmem:[#allocation3 + $0x2c] sm:$0xf] %vm2317, %v2292
    %2330 = vst.msk [vmem:[#allocation3 + $0x30] sm:$0xf] %vm2317, %v2294
    %2331 = vst.msk [vmem:[#allocation3 + $0x34] sm:$0xf] %vm2317, %v2296
    %2332 = vst.msk [vmem:[#allocation3 + $0x38] sm:$0xf] %vm2317, %v2298
    %2333 = vst.msk [vmem:[#allocation3 + $0x3c] sm:$0xf] %vm2317, %v2300
    %v2334 = vld [vmem:[%s1155 + $0x4] sm:$0xf]
    %v2335 = vld [vmem:[%s1155 + $0x10] sm:$0xf]
    %v2336 = vld [vmem:[%s1155 + $0x1c] sm:$0xf]
    %v2337 = vld [vmem:[%s1155 + $0x28] sm:$0xf]
    %v2338 = vld [vmem:[%s1155 + $0x34] sm:$0xf]
    %v2339 = vld [vmem:[%s1155 + $0x40] sm:$0xf]
    %v2340 = vld [vmem:[%s1155 + $0x4c] sm:$0xf]
    %v2341 = vld [vmem:[%s1155 + $0x58] sm:$0xf]
    %v2342 = vld [vmem:[%s1155 + $0x7c] sm:$0xf]
    %v2343 = vld [vmem:[%s1155 + $0x88] sm:$0xf]
    %v2344 = vld [vmem:[%s1155 + $0x94] sm:$0xf]
    %v2345 = vld [vmem:[%s1155 + $0xa0] sm:$0xf]
    %v2346 = vld [vmem:[%s1155 + $0xac] sm:$0xf]
    %v2347 = vld [vmem:[%s1155 + $0xb8] sm:$0xf]
    %v2348 = vld [vmem:[%s1155 + $0xc4] sm:$0xf]
    %v2349 = vld [vmem:[%s1155 + $0xd0] sm:$0xf]
    %2366 = vrot.lane.b32.xlu0 %v2334, 20
    %v2367 = vpop.permute.xlu0 %2366
    %2368 = vrot.lane.b32.xlu0 %v2335, 20
    %v2369 = vpop.permute.xlu0 %2368
    %2370 = vrot.lane.b32.xlu0 %v2336, 20
    %v2371 = vpop.permute.xlu0 %2370
    %2372 = vrot.lane.b32.xlu0 %v2337, 20
    %v2373 = vpop.permute.xlu0 %2372
    %2374 = vrot.lane.b32.xlu0 %v2338, 20
    %v2375 = vpop.permute.xlu0 %2374
    %2376 = vrot.lane.b32.xlu0 %v2339, 20
    %v2377 = vpop.permute.xlu0 %2376
    %2378 = vrot.lane.b32.xlu0 %v2340, 20
    %v2379 = vpop.permute.xlu0 %2378
    %2380 = vrot.lane.b32.xlu0 %v2341, 20
    %v2381 = vpop.permute.xlu0 %2380
    %2382 = vrot.lane.b32.xlu0 %v2342, 20
    %v2383 = vpop.permute.xlu0 %2382
    %2384 = vrot.lane.b32.xlu0 %v2343, 20
    %v2385 = vpop.permute.xlu0 %2384
    %2386 = vrot.lane.b32.xlu0 %v2344, 20
    %v2387 = vpop.permute.xlu0 %2386
    %2388 = vrot.lane.b32.xlu0 %v2345, 20
    %v2389 = vpop.permute.xlu0 %2388
    %2390 = vrot.lane.b32.xlu0 %v2346, 20
    %v2391 = vpop.permute.xlu0 %2390
    %2392 = vrot.lane.b32.xlu0 %v2347, 20
    %v2393 = vpop.permute.xlu0 %2392
    %2394 = vrot.lane.b32.xlu0 %v2348, 20
    %v2395 = vpop.permute.xlu0 %2394
    %2396 = vrot.lane.b32.xlu0 %v2349, 20
    %v2397 = vpop.permute.xlu0 %2396
    %vm2414 = vcmask 191648
    %2415 = vst.msk [vmem:[#allocation3] sm:$0xf] %vm2414, %v2367
    %2416 = vst.msk [vmem:[#allocation3 + $0x4] sm:$0xf] %vm2414, %v2369
    %2417 = vst.msk [vmem:[#allocation3 + $0x8] sm:$0xf] %vm2414, %v2371
    %2418 = vst.msk [vmem:[#allocation3 + $0xc] sm:$0xf] %vm2414, %v2373
    %2419 = vst.msk [vmem:[#allocation3 + $0x10] sm:$0xf] %vm2414, %v2375
    %2420 = vst.msk [vmem:[#allocation3 + $0x14] sm:$0xf] %vm2414, %v2377
    %2421 = vst.msk [vmem:[#allocation3 + $0x18] sm:$0xf] %vm2414, %v2379
    %2422 = vst.msk [vmem:[#allocation3 + $0x1c] sm:$0xf] %vm2414, %v2381
    %2423 = vst.msk [vmem:[#allocation3 + $0x20] sm:$0xf] %vm2414, %v2383
    %2424 = vst.msk [vmem:[#allocation3 + $0x24] sm:$0xf] %vm2414, %v2385
    %2425 = vst.msk [vmem:[#allocation3 + $0x28] sm:$0xf] %vm2414, %v2387
    %2426 = vst.msk [vmem:[#allocation3 + $0x2c] sm:$0xf] %vm2414, %v2389
    %2427 = vst.msk [vmem:[#allocation3 + $0x30] sm:$0xf] %vm2414, %v2391
    %2428 = vst.msk [vmem:[#allocation3 + $0x34] sm:$0xf] %vm2414, %v2393
    %2429 = vst.msk [vmem:[#allocation3 + $0x38] sm:$0xf] %vm2414, %v2395
    %2430 = vst.msk [vmem:[#allocation3 + $0x3c] sm:$0xf] %vm2414, %v2397
    %v2431 = vld [vmem:[%s1413] sm:$0x8]
    %v2432 = vld [vmem:[%s1413 + $0x4] sm:$0xf]
    %v2433 = vld [vmem:[%s1413 + $0xc] sm:$0x8]
    %v2434 = vld [vmem:[%s1413 + $0x10] sm:$0xf]
    %v2435 = vld [vmem:[%s1413 + $0x18] sm:$0x8]
    %v2436 = vld [vmem:[%s1413 + $0x1c] sm:$0xf]
    %v2437 = vld [vmem:[%s1413 + $0x24] sm:$0x8]
    %v2438 = vld [vmem:[%s1413 + $0x28] sm:$0xf]
    %v2439 = vld [vmem:[%s1413 + $0x30] sm:$0x8]
    %v2440 = vld [vmem:[%s1413 + $0x34] sm:$0xf]
    %v2441 = vld [vmem:[%s1413 + $0x3c] sm:$0x8]
    %v2442 = vld [vmem:[%s1413 + $0x40] sm:$0xf]
    %v2443 = vld [vmem:[%s1413 + $0x48] sm:$0x8]
    %v2444 = vld [vmem:[%s1413 + $0x4c] sm:$0xf]
    %v2445 = vld [vmem:[%s1413 + $0x54] sm:$0x8]
    %v2446 = vld [vmem:[%s1413 + $0x58] sm:$0xf]
    %v2447 = vld [vmem:[%s1413 + $0x78] sm:$0x8]
    %v2448 = vld [vmem:[%s1413 + $0x7c] sm:$0xf]
    %v2449 = vld [vmem:[%s1413 + $0x84] sm:$0x8]
    %v2450 = vld [vmem:[%s1413 + $0x88] sm:$0xf]
    %v2451 = vld [vmem:[%s1413 + $0x90] sm:$0x8]
    %v2452 = vld [vmem:[%s1413 + $0x94] sm:$0xf]
    %v2453 = vld [vmem:[%s1413 + $0x9c] sm:$0x8]
    %v2454 = vld [vmem:[%s1413 + $0xa0] sm:$0xf]
    %v2455 = vld [vmem:[%s1413 + $0xa8] sm:$0x8]
    %v2456 = vld [vmem:[%s1413 + $0xac] sm:$0xf]
    %v2457 = vld [vmem:[%s1413 + $0xb4] sm:$0x8]
    %v2458 = vld [vmem:[%s1413 + $0xb8] sm:$0xf]
    %v2459 = vld [vmem:[%s1413 + $0xc0] sm:$0x8]
    %v2460 = vld [vmem:[%s1413 + $0xc4] sm:$0xf]
    %v2461 = vld [vmem:[%s1413 + $0xcc] sm:$0x8]
    %v2462 = vld [vmem:[%s1413 + $0xd0] sm:$0xf]
    %v2464 = vshrl.u32 %v2431, 16
    %v2466 = vrot.slane %v2464, 7
    %v2467 = vrot.slane %v2466, 4
    %v2469 = vshrl.u32 %v2432, 16
    %v2471 = vrot.slane %v2469, 7
    %v2472 = vshll.u32 %v2432, 16
    %v2474 = vor.u32 %v2471, %v2472
    %v2475 = vsel %vm1496, %v2467, %v2474
    %v2477 = vshrl.u32 %v2433, 16
    %v2479 = vrot.slane %v2477, 7
    %v2480 = vrot.slane %v2479, 4
    %v2482 = vshrl.u32 %v2434, 16
    %v2484 = vrot.slane %v2482, 7
    %v2485 = vshll.u32 %v2434, 16
    %v2487 = vor.u32 %v2484, %v2485
    %v2488 = vsel %vm1496, %v2480, %v2487
    %v2490 = vshrl.u32 %v2435, 16
    %v2492 = vrot.slane %v2490, 7
    %v2493 = vrot.slane %v2492, 4
    %v2495 = vshrl.u32 %v2436, 16
    %v2497 = vrot.slane %v2495, 7
    %v2498 = vshll.u32 %v2436, 16
    %v2500 = vor.u32 %v2497, %v2498
    %v2501 = vsel %vm1496, %v2493, %v2500
    %v2503 = vshrl.u32 %v2437, 16
    %v2505 = vrot.slane %v2503, 7
    %v2506 = vrot.slane %v2505, 4
    %v2508 = vshrl.u32 %v2438, 16
    %v2510 = vrot.slane %v2508, 7
    %v2511 = vshll.u32 %v2438, 16
    %v2513 = vor.u32 %v2510, %v2511
    %v2514 = vsel %vm1496, %v2506, %v2513
    %v2516 = vshrl.u32 %v2439, 16
    %v2518 = vrot.slane %v2516, 7
    %v2519 = vrot.slane %v2518, 4
    %v2521 = vshrl.u32 %v2440, 16
    %v2523 = vrot.slane %v2521, 7
    %v2524 = vshll.u32 %v2440, 16
    %v2526 = vor.u32 %v2523, %v2524
    %v2527 = vsel %vm1496, %v2519, %v2526
    %v2529 = vshrl.u32 %v2441, 16
    %v2531 = vrot.slane %v2529, 7
    %v2532 = vrot.slane %v2531, 4
    %v2534 = vshrl.u32 %v2442, 16
    %v2536 = vrot.slane %v2534, 7
    %v2537 = vshll.u32 %v2442, 16
    %v2539 = vor.u32 %v2536, %v2537
    %v2540 = vsel %vm1496, %v2532, %v2539
    %v2542 = vshrl.u32 %v2443, 16
    %v2544 = vrot.slane %v2542, 7
    %v2545 = vrot.slane %v2544, 4
    %v2547 = vshrl.u32 %v2444, 16
    %v2549 = vrot.slane %v2547, 7
    %v2550 = vshll.u32 %v2444, 16
    %v2552 = vor.u32 %v2549, %v2550
    %v2553 = vsel %vm1496, %v2545, %v2552
    %v2555 = vshrl.u32 %v2445, 16
    %v2557 = vrot.slane %v2555, 7
    %v2558 = vrot.slane %v2557, 4
    %v2560 = vshrl.u32 %v2446, 16
    %v2562 = vrot.slane %v2560, 7
    %v2563 = vshll.u32 %v2446, 16
    %v2565 = vor.u32 %v2562, %v2563
    %v2566 = vsel %vm1496, %v2558, %v2565
    %v2568 = vshrl.u32 %v2447, 16
    %v2570 = vrot.slane %v2568, 7
    %v2571 = vrot.slane %v2570, 4
    %v2573 = vshrl.u32 %v2448, 16
    %v2575 = vrot.slane %v2573, 7
    %v2576 = vshll.u32 %v2448, 16
    %v2578 = vor.u32 %v2575, %v2576
    %v2579 = vsel %vm1496, %v2571, %v2578
    %v2581 = vshrl.u32 %v2449, 16
    %v2583 = vrot.slane %v2581, 7
    %v2584 = vrot.slane %v2583, 4
    %v2586 = vshrl.u32 %v2450, 16
    %v2588 = vrot.slane %v2586, 7
    %v2589 = vshll.u32 %v2450, 16
    %v2591 = vor.u32 %v2588, %v2589
    %v2592 = vsel %vm1496, %v2584, %v2591
    %v2594 = vshrl.u32 %v2451, 16
    %v2596 = vrot.slane %v2594, 7
    %v2597 = vrot.slane %v2596, 4
    %v2599 = vshrl.u32 %v2452, 16
    %v2601 = vrot.slane %v2599, 7
    %v2602 = vshll.u32 %v2452, 16
    %v2604 = vor.u32 %v2601, %v2602
    %v2605 = vsel %vm1496, %v2597, %v2604
    %v2607 = vshrl.u32 %v2453, 16
    %v2609 = vrot.slane %v2607, 7
    %v2610 = vrot.slane %v2609, 4
    %v2612 = vshrl.u32 %v2454, 16
    %v2614 = vrot.slane %v2612, 7
    %v2615 = vshll.u32 %v2454, 16
    %v2617 = vor.u32 %v2614, %v2615
    %v2618 = vsel %vm1496, %v2610, %v2617
    %v2620 = vshrl.u32 %v2455, 16
    %v2622 = vrot.slane %v2620, 7
    %v2623 = vrot.slane %v2622, 4
    %v2625 = vshrl.u32 %v2456, 16
    %v2627 = vrot.slane %v2625, 7
    %v2628 = vshll.u32 %v2456, 16
    %v2630 = vor.u32 %v2627, %v2628
    %v2631 = vsel %vm1496, %v2623, %v2630
    %v2633 = vshrl.u32 %v2457, 16
    %v2635 = vrot.slane %v2633, 7
    %v2636 = vrot.slane %v2635, 4
    %v2638 = vshrl.u32 %v2458, 16
    %v2640 = vrot.slane %v2638, 7
    %v2641 = vshll.u32 %v2458, 16
    %v2643 = vor.u32 %v2640, %v2641
    %v2644 = vsel %vm1496, %v2636, %v2643
    %v2646 = vshrl.u32 %v2459, 16
    %v2648 = vrot.slane %v2646, 7
    %v2649 = vrot.slane %v2648, 4
    %v2651 = vshrl.u32 %v2460, 16
    %v2653 = vrot.slane %v2651, 7
    %v2654 = vshll.u32 %v2460, 16
    %v2656 = vor.u32 %v2653, %v2654
    %v2657 = vsel %vm1496, %v2649, %v2656
    %v2659 = vshrl.u32 %v2461, 16
    %v2661 = vrot.slane %v2659, 7
    %v2662 = vrot.slane %v2661, 4
    %v2664 = vshrl.u32 %v2462, 16
    %v2666 = vrot.slane %v2664, 7
    %v2667 = vshll.u32 %v2462, 16
    %v2669 = vor.u32 %v2666, %v2667
    %v2670 = vsel %vm1496, %v2662, %v2669
    %2671 = vrot.lane.b32.xlu0 %v2475, 24
    %v2672 = vpop.permute.xlu0 %2671
    %2673 = vrot.lane.b32.xlu0 %v2488, 24
    %v2674 = vpop.permute.xlu0 %2673
    %2675 = vrot.lane.b32.xlu0 %v2501, 24
    %v2676 = vpop.permute.xlu0 %2675
    %2677 = vrot.lane.b32.xlu0 %v2514, 24
    %v2678 = vpop.permute.xlu0 %2677
    %2679 = vrot.lane.b32.xlu0 %v2527, 24
    %v2680 = vpop.permute.xlu0 %2679
    %2681 = vrot.lane.b32.xlu0 %v2540, 24
    %v2682 = vpop.permute.xlu0 %2681
    %2683 = vrot.lane.b32.xlu0 %v2553, 24
    %v2684 = vpop.permute.xlu0 %2683
    %2685 = vrot.lane.b32.xlu0 %v2566, 24
    %v2686 = vpop.permute.xlu0 %2685
    %2687 = vrot.lane.b32.xlu0 %v2579, 24
    %v2688 = vpop.permute.xlu0 %2687
    %2689 = vrot.lane.b32.xlu0 %v2592, 24
    %v2690 = vpop.permute.xlu0 %2689
    %2691 = vrot.lane.b32.xlu0 %v2605, 24
    %v2692 = vpop.permute.xlu0 %2691
    %2693 = vrot.lane.b32.xlu0 %v2618, 24
    %v2694 = vpop.permute.xlu0 %2693
    %2695 = vrot.lane.b32.xlu0 %v2631, 24
    %v2696 = vpop.permute.xlu0 %2695
    %2697 = vrot.lane.b32.xlu0 %v2644, 24
    %v2698 = vpop.permute.xlu0 %2697
    %2699 = vrot.lane.b32.xlu0 %v2657, 24
    %v2700 = vpop.permute.xlu0 %2699
    %2701 = vrot.lane.b32.xlu0 %v2670, 24
    %v2702 = vpop.permute.xlu0 %2701
    %vm2719 = vcmask 224448
    %2720 = vst.msk [vmem:[#allocation3] sm:$0xf] %vm2719, %v2672
    %2721 = vst.msk [vmem:[#allocation3 + $0x4] sm:$0xf] %vm2719, %v2674
    %2722 = vst.msk [vmem:[#allocation3 + $0x8] sm:$0xf] %vm2719, %v2676
    %2723 = vst.msk [vmem:[#allocation3 + $0xc] sm:$0xf] %vm2719, %v2678
    %2724 = vst.msk [vmem:[#allocation3 + $0x10] sm:$0xf] %vm2719, %v2680
    %2725 = vst.msk [vmem:[#allocation3 + $0x14] sm:$0xf] %vm2719, %v2682
    %2726 = vst.msk [vmem:[#allocation3 + $0x18] sm:$0xf] %vm2719, %v2684
    %2727 = vst.msk [vmem:[#allocation3 + $0x1c] sm:$0xf] %vm2719, %v2686
    %2728 = vst.msk [vmem:[#allocation3 + $0x20] sm:$0xf] %vm2719, %v2688
    %2729 = vst.msk [vmem:[#allocation3 + $0x24] sm:$0xf] %vm2719, %v2690
    %2730 = vst.msk [vmem:[#allocation3 + $0x28] sm:$0xf] %vm2719, %v2692
    %2731 = vst.msk [vmem:[#allocation3 + $0x2c] sm:$0xf] %vm2719, %v2694
    %2732 = vst.msk [vmem:[#allocation3 + $0x30] sm:$0xf] %vm2719, %v2696
    %2733 = vst.msk [vmem:[#allocation3 + $0x34] sm:$0xf] %vm2719, %v2698
    %2734 = vst.msk [vmem:[#allocation3 + $0x38] sm:$0xf] %vm2719, %v2700
    %2735 = vst.msk [vmem:[#allocation3 + $0x3c] sm:$0xf] %vm2719, %v2702
    %v2736 = vld [vmem:[%s1284 + $0x4] sm:$0xf]
    %v2737 = vld [vmem:[%s1284 + $0x10] sm:$0xf]
    %v2738 = vld [vmem:[%s1284 + $0x1c] sm:$0xf]
    %v2739 = vld [vmem:[%s1284 + $0x28] sm:$0xf]
    %v2740 = vld [vmem:[%s1284 + $0x34] sm:$0xf]
    %v2741 = vld [vmem:[%s1284 + $0x40] sm:$0xf]
    %v2742 = vld [vmem:[%s1284 + $0x4c] sm:$0xf]
    %v2743 = vld [vmem:[%s1284 + $0x58] sm:$0xf]
    %v2744 = vld [vmem:[%s1284 + $0x7c] sm:$0xf]
    %v2745 = vld [vmem:[%s1284 + $0x88] sm:$0xf]
    %v2746 = vld [vmem:[%s1284 + $0x94] sm:$0xf]
    %v2747 = vld [vmem:[%s1284 + $0xa0] sm:$0xf]
    %v2748 = vld [vmem:[%s1284 + $0xac] sm:$0xf]
    %v2749 = vld [vmem:[%s1284 + $0xb8] sm:$0xf]
    %v2750 = vld [vmem:[%s1284 + $0xc4] sm:$0xf]
    %v2751 = vld [vmem:[%s1284 + $0xd0] sm:$0xf]
    %2768 = vrot.lane.b32.xlu0 %v2736, 28
    %v2769 = vpop.permute.xlu0 %2768
    %2770 = vrot.lane.b32.xlu0 %v2737, 28
    %v2771 = vpop.permute.xlu0 %2770
    %2772 = vrot.lane.b32.xlu0 %v2738, 28
    %v2773 = vpop.permute.xlu0 %2772
    %2774 = vrot.lane.b32.xlu0 %v2739, 28
    %v2775 = vpop.permute.xlu0 %2774
    %2776 = vrot.lane.b32.xlu0 %v2740, 28
    %v2777 = vpop.permute.xlu0 %2776
    %2778 = vrot.lane.b32.xlu0 %v2741, 28
    %v2779 = vpop.permute.xlu0 %2778
    %2780 = vrot.lane.b32.xlu0 %v2742, 28
    %v2781 = vpop.permute.xlu0 %2780
    %2782 = vrot.lane.b32.xlu0 %v2743, 28
    %v2783 = vpop.permute.xlu0 %2782
    %2784 = vrot.lane.b32.xlu0 %v2744, 28
    %v2785 = vpop.permute.xlu0 %2784
    %2786 = vrot.lane.b32.xlu0 %v2745, 28
    %v2787 = vpop.permute.xlu0 %2786
    %2788 = vrot.lane.b32.xlu0 %v2746, 28
    %v2789 = vpop.permute.xlu0 %2788
    %2790 = vrot.lane.b32.xlu0 %v2747, 28
    %v2791 = vpop.permute.xlu0 %2790
    %2792 = vrot.lane.b32.xlu0 %v2748, 28
    %v2793 = vpop.permute.xlu0 %2792
    %2794 = vrot.lane.b32.xlu0 %v2749, 28
    %v2795 = vpop.permute.xlu0 %2794
    %2796 = vrot.lane.b32.xlu0 %v2750, 28
    %v2797 = vpop.permute.xlu0 %2796
    %2798 = vrot.lane.b32.xlu0 %v2751, 28
    %v2799 = vpop.permute.xlu0 %2798
    %vm2816 = vcmask 257248
    %2817 = vst.msk [vmem:[#allocation3] sm:$0xf] %vm2816, %v2769
    %2818 = vst.msk [vmem:[#allocation3 + $0x4] sm:$0xf] %vm2816, %v2771
    %2819 = vst.msk [vmem:[#allocation3 + $0x8] sm:$0xf] %vm2816, %v2773
    %2820 = vst.msk [vmem:[#allocation3 + $0xc] sm:$0xf] %vm2816, %v2775
    %2821 = vst.msk [vmem:[#allocation3 + $0x10] sm:$0xf] %vm2816, %v2777
    %2822 = vst.msk [vmem:[#allocation3 + $0x14] sm:$0xf] %vm2816, %v2779
    %2823 = vst.msk [vmem:[#allocation3 + $0x18] sm:$0xf] %vm2816, %v2781
    %2824 = vst.msk [vmem:[#allocation3 + $0x1c] sm:$0xf] %vm2816, %v2783
    %2825 = vst.msk [vmem:[#allocation3 + $0x20] sm:$0xf] %vm2816, %v2785
    %2826 = vst.msk [vmem:[#allocation3 + $0x24] sm:$0xf] %vm2816, %v2787
    %2827 = vst.msk [vmem:[#allocation3 + $0x28] sm:$0xf] %vm2816, %v2789
    %2828 = vst.msk [vmem:[#allocation3 + $0x2c] sm:$0xf] %vm2816, %v2791
    %2829 = vst.msk [vmem:[#allocation3 + $0x30] sm:$0xf] %vm2816, %v2793
    %2830 = vst.msk [vmem:[#allocation3 + $0x34] sm:$0xf] %vm2816, %v2795
    %2831 = vst.msk [vmem:[#allocation3 + $0x38] sm:$0xf] %vm2816, %v2797
    %2832 = vst.msk [vmem:[#allocation3 + $0x3c] sm:$0xf] %vm2816, %v2799
    %v2833 = vld [vmem:[%s1413 + $0x4] sm:$0xf]
    %v2834 = vld [vmem:[%s1413 + $0x10] sm:$0xf]
    %v2835 = vld [vmem:[%s1413 + $0x1c] sm:$0xf]
    %v2836 = vld [vmem:[%s1413 + $0x28] sm:$0xf]
    %v2837 = vld [vmem:[%s1413 + $0x34] sm:$0xf]
    %v2838 = vld [vmem:[%s1413 + $0x40] sm:$0xf]
    %v2839 = vld [vmem:[%s1413 + $0x4c] sm:$0xf]
    %v2840 = vld [vmem:[%s1413 + $0x58] sm:$0xf]
    %v2841 = vld [vmem:[%s1413 + $0x7c] sm:$0xf]
    %v2842 = vld [vmem:[%s1413 + $0x88] sm:$0xf]
    %v2843 = vld [vmem:[%s1413 + $0x94] sm:$0xf]
    %v2844 = vld [vmem:[%s1413 + $0xa0] sm:$0xf]
    %v2845 = vld [vmem:[%s1413 + $0xac] sm:$0xf]
    %v2846 = vld [vmem:[%s1413 + $0xb8] sm:$0xf]
    %v2847 = vld [vmem:[%s1413 + $0xc4] sm:$0xf]
    %v2848 = vld [vmem:[%s1413 + $0xd0] sm:$0xf]
    %2865 = vrot.lane.b32.xlu0 %v2833, 32
    %v2866 = vpop.permute.xlu0 %2865
    %2867 = vrot.lane.b32.xlu0 %v2834, 32
    %v2868 = vpop.permute.xlu0 %2867
    %2869 = vrot.lane.b32.xlu0 %v2835, 32
    %v2870 = vpop.permute.xlu0 %2869
    %2871 = vrot.lane.b32.xlu0 %v2836, 32
    %v2872 = vpop.permute.xlu0 %2871
    %2873 = vrot.lane.b32.xlu0 %v2837, 32
    %v2874 = vpop.permute.xlu0 %2873
    %2875 = vrot.lane.b32.xlu0 %v2838, 32
    %v2876 = vpop.permute.xlu0 %2875
    %2877 = vrot.lane.b32.xlu0 %v2839, 32
    %v2878 = vpop.permute.xlu0 %2877
    %2879 = vrot.lane.b32.xlu0 %v2840, 32
    %v2880 = vpop.permute.xlu0 %2879
    %2881 = vrot.lane.b32.xlu0 %v2841, 32
    %v2882 = vpop.permute.xlu0 %2881
    %2883 = vrot.lane.b32.xlu0 %v2842, 32
    %v2884 = vpop.permute.xlu0 %2883
    %2885 = vrot.lane.b32.xlu0 %v2843, 32
    %v2886 = vpop.permute.xlu0 %2885
    %2887 = vrot.lane.b32.xlu0 %v2844, 32
    %v2888 = vpop.permute.xlu0 %2887
    %2889 = vrot.lane.b32.xlu0 %v2845, 32
    %v2890 = vpop.permute.xlu0 %2889
    %2891 = vrot.lane.b32.xlu0 %v2846, 32
    %v2892 = vpop.permute.xlu0 %2891
    %2893 = vrot.lane.b32.xlu0 %v2847, 32
    %v2894 = vpop.permute.xlu0 %2893
    %2895 = vrot.lane.b32.xlu0 %v2848, 32
    %v2896 = vpop.permute.xlu0 %2895
    %vm2913 = vcmask 290048
    %2914 = vst.msk [vmem:[#allocation3] sm:$0xf] %vm2913, %v2866
    %2915 = vst.msk [vmem:[#allocation3 + $0x4] sm:$0xf] %vm2913, %v2868
    %2916 = vst.msk [vmem:[#allocation3 + $0x8] sm:$0xf] %vm2913, %v2870
    %2917 = vst.msk [vmem:[#allocation3 + $0xc] sm:$0xf] %vm2913, %v2872
    %2918 = vst.msk [vmem:[#allocation3 + $0x10] sm:$0xf] %vm2913, %v2874
    %2919 = vst.msk [vmem:[#allocation3 + $0x14] sm:$0xf] %vm2913, %v2876
    %2920 = vst.msk [vmem:[#allocation3 + $0x18] sm:$0xf] %vm2913, %v2878
    %2921 = vst.msk [vmem:[#allocation3 + $0x1c] sm:$0xf] %vm2913, %v2880
    %2922 = vst.msk [vmem:[#allocation3 + $0x20] sm:$0xf] %vm2913, %v2882
    %2923 = vst.msk [vmem:[#allocation3 + $0x24] sm:$0xf] %vm2913, %v2884
    %2924 = vst.msk [vmem:[#allocation3 + $0x28] sm:$0xf] %vm2913, %v2886
    %2925 = vst.msk [vmem:[#allocation3 + $0x2c] sm:$0xf] %vm2913, %v2888
    %2926 = vst.msk [vmem:[#allocation3 + $0x30] sm:$0xf] %vm2913, %v2890
    %2927 = vst.msk [vmem:[#allocation3 + $0x34] sm:$0xf] %vm2913, %v2892
    %2928 = vst.msk [vmem:[#allocation3 + $0x38] sm:$0xf] %vm2913, %v2894
    %2929 = vst.msk [vmem:[#allocation3 + $0x3c] sm:$0xf] %vm2913, %v2896
    %v2930 = vld [vmem:[#allocation3] sm:$0xf]
    %v2931 = vld [vmem:[#allocation3 + $0x4] sm:$0xf]
    %v2932 = vld [vmem:[#allocation3 + $0x8] sm:$0xf]
    %v2933 = vld [vmem:[#allocation3 + $0xc] sm:$0xf]
    %v2934 = vld [vmem:[#allocation3 + $0x10] sm:$0xf]
    %v2935 = vld [vmem:[#allocation3 + $0x14] sm:$0xf]
    %v2936 = vld [vmem:[#allocation3 + $0x18] sm:$0xf]
    %v2937 = vld [vmem:[#allocation3 + $0x1c] sm:$0xf]
    %v2938 = vld [vmem:[#allocation3 + $0x20] sm:$0xf]
    %v2939 = vld [vmem:[#allocation3 + $0x24] sm:$0xf]
    %v2940 = vld [vmem:[#allocation3 + $0x28] sm:$0xf]
    %v2941 = vld [vmem:[#allocation3 + $0x2c] sm:$0xf]
    %v2942 = vld [vmem:[#allocation3 + $0x30] sm:$0xf]
    %v2943 = vld [vmem:[#allocation3 + $0x34] sm:$0xf]
    %v2944 = vld [vmem:[#allocation3 + $0x38] sm:$0xf]
    %v2945 = vld [vmem:[#allocation3 + $0x3c] sm:$0xf]
    %v2946 = vld [vmem:[%s5] sm:$0xf]
    %v2947 = vld [vmem:[%s5 + $0x4] sm:$0xf]
    %v2948 = vld [vmem:[%s5 + $0x8] sm:$0xf]
    %v2949 = vld [vmem:[%s5 + $0xc] sm:$0xf]
    %v2950 = vld [vmem:[%s5 + $0x10] sm:$0x3]
    %v2967 = vunpack.c.l.b16 %v2930
    %v2968 = vunpack.c.l.b16 %v2931
    %v2969 = vunpack.c.l.b16 %v2932
    %v2970 = vunpack.c.l.b16 %v2933
    %v2971 = vunpack.c.l.b16 %v2934
    %v2972 = vunpack.c.l.b16 %v2935
    %v2973 = vunpack.c.l.b16 %v2936
    %v2974 = vunpack.c.l.b16 %v2937
    %v2975 = vunpack.c.l.b16 %v2938
    %v2976 = vunpack.c.l.b16 %v2939
    %v2977 = vunpack.c.l.b16 %v2940
    %v2978 = vunpack.c.l.b16 %v2941
    %v2979 = vunpack.c.l.b16 %v2942
    %v2980 = vunpack.c.l.b16 %v2943
    %v2981 = vunpack.c.l.b16 %v2944
    %v2982 = vunpack.c.l.b16 %v2945
    %v2983 = vpack.c.b16 %v2968, %v2967
    %v2984 = vpack.c.b16 %v2970, %v2969
    %v2985 = vpack.c.b16 %v2972, %v2971
    %v2986 = vpack.c.b16 %v2974, %v2973
    %v2987 = vpack.c.b16 %v2976, %v2975
    %v2988 = vpack.c.b16 %v2978, %v2977
    %v2989 = vpack.c.b16 %v2980, %v2979
    %v2990 = vpack.c.b16 %v2982, %v2981
    %v2996 = vunpack.c.l.b16 %v2946
    %v2997 = vunpack.c.l.b16 %v2947
    %v2998 = vunpack.c.l.b16 %v2948
    %v2999 = vunpack.c.l.b16 %v2949
    %v3000 = vunpack.c.l.b16 %v2950
    %v3001 = vpack.c.b16 %v2997, %v2996
    %v3002 = vpack.c.b16 %v2999, %v2998
    %v3003 = vpack.c.b16 %v3000, %v3000
    %vm3006 = vcmask 293888
    %v3008 = vsel %vm3006, %v2983, 0
    %v3011 = vsel %vm3006, %v2984, 0
    %v3014 = vsel %vm3006, %v2985, 0
    %v3017 = vsel %vm3006, %v2986, 0
    %v3020 = vsel %vm3006, %v2987, 0
    %v3023 = vsel %vm3006, %v2988, 0
    %v3026 = vsel %vm3006, %v2989, 0
    %v3029 = vsel %vm3006, %v2990, 0
    %vm3031 = vcmask 1041408
    %v3033 = vsel %vm3031, %v3003, 0
    %3035 = vmatprep.subr.bf16.mxu0 0
    %3036 = vmatpush1.bf16.msra.mxu0 0
    %3037 = vmatprep.subr.bf16.mxu0 0
    %3038 = vmatpush1.bf16.msra.mxu0 0
    %3039 = vmatprep.subr.bf16.mxu0 0
    %3040 = vmatpush1.bf16.msra.mxu0 0
    %3041 = vmatprep.subr.bf16.mxu0 0
    %3042 = vmatpush1.bf16.msra.mxu0 0
    %3043 = vmatprep.subr.bf16.mxu0 0
    %3044 = vmatpush1.bf16.msra.mxu0 0
    %3045 = vmatprep.subr.bf16.mxu0 0
    %3046 = vmatpush1.bf16.msra.mxu0 %v3033
    %3047 = vmatprep.subr.bf16.mxu0 0
    %3048 = vmatpush1.bf16.msra.mxu0 %v3002
    %3049 = vmatprep.subr.bf16.mxu0 0
    %3050 = vmatpush1.bf16.msra.mxu0 %v3001
    %3051 = vmatprep.subr.bf16.mxu0 0
    %3052 = vmatpush2.bf16.msra.mxu0 0
    %3053 = vmatprep.subr.bf16.mxu0 0
    %3054 = vmatpush2.bf16.msra.mxu0 0
    %3055 = vmatprep.subr.bf16.mxu0 0
    %3056 = vmatpush2.bf16.msra.mxu0 0
    %3057 = vmatprep.subr.bf16.mxu0 0
    %3058 = vmatpush2.bf16.msra.mxu0 0
    %3059 = vmatprep.subr.bf16.mxu0 0
    %3060 = vmatpush2.bf16.msra.mxu0 0
    %3061 = vmatprep.subr.bf16.mxu0 0
    %3062 = vmatpush2.bf16.msra.mxu0 0
    %3063 = vmatprep.subr.bf16.mxu0 0
    %3064 = vmatpush2.bf16.msra.mxu0 0
    %3065 = vmatprep.subr.bf16.mxu0 0
    %3066 = vmatpush2.bf16.msra.mxu0 0
    %3067 = vmatprep.mubr.bf16.mxu0 0
    %3068 = vmatmul.mubr.bf16.gmra.mxu0 %v3008
    %v3069 = vpop.f32.mrf.mxu0
    %v3070 = vadd.f32 0.0, %v3069
    %v3071 = vpop.f32.mrf.mxu0
    %v3072 = vpop.f32.mrf.mxu0
    %v3073 = vadd.f32 0.0, %v3072
    %v3074 = vpop.f32.mrf.mxu0
    %3075 = vmatprep.mubr.bf16.mxu0 0
    %3076 = vmatmul.mubr.bf16.gmra.mxu0 %v3011
    %v3077 = vpop.f32.mrf.mxu0
    %v3078 = vadd.f32 0.0, %v3077
    %v3079 = vpop.f32.mrf.mxu0
    %v3080 = vpop.f32.mrf.mxu0
    %v3081 = vadd.f32 0.0, %v3080
    %v3082 = vpop.f32.mrf.mxu0
    %3083 = vmatprep.mubr.bf16.mxu0 0
    %3084 = vmatmul.mubr.bf16.gmra.mxu0 %v3014
    %v3085 = vpop.f32.mrf.mxu0
    %v3086 = vadd.f32 0.0, %v3085
    %v3087 = vpop.f32.mrf.mxu0
    %v3088 = vpop.f32.mrf.mxu0
    %v3089 = vadd.f32 0.0, %v3088
    %v3090 = vpop.f32.mrf.mxu0
    %3091 = vmatprep.mubr.bf16.mxu0 0
    %3092 = vmatmul.mubr.bf16.gmra.mxu0 %v3017
    %v3093 = vpop.f32.mrf.mxu0
    %v3094 = vadd.f32 0.0, %v3093
    %v3095 = vpop.f32.mrf.mxu0
    %v3096 = vpop.f32.mrf.mxu0
    %v3097 = vadd.f32 0.0, %v3096
    %v3098 = vpop.f32.mrf.mxu0
    %3099 = vmatprep.mubr.bf16.mxu0 0
    %3100 = vmatmul.mubr.bf16.gmra.mxu0 %v3020
    %v3101 = vpop.f32.mrf.mxu0
    %v3102 = vadd.f32 0.0, %v3101
    %v3103 = vpop.f32.mrf.mxu0
    %v3104 = vpop.f32.mrf.mxu0
    %v3105 = vadd.f32 0.0, %v3104
    %v3106 = vpop.f32.mrf.mxu0
    %3107 = vmatprep.mubr.bf16.mxu0 0
    %3108 = vmatmul.mubr.bf16.gmra.mxu0 %v3023
    %v3109 = vpop.f32.mrf.mxu0
    %v3110 = vadd.f32 0.0, %v3109
    %v3111 = vpop.f32.mrf.mxu0
    %v3112 = vpop.f32.mrf.mxu0
    %v3113 = vadd.f32 0.0, %v3112
    %v3114 = vpop.f32.mrf.mxu0
    %3115 = vmatprep.mubr.bf16.mxu0 0
    %3116 = vmatmul.mubr.bf16.gmra.mxu0 %v3026
    %v3117 = vpop.f32.mrf.mxu0
    %v3118 = vadd.f32 0.0, %v3117
    %v3119 = vpop.f32.mrf.mxu0
    %v3120 = vpop.f32.mrf.mxu0
    %v3121 = vadd.f32 0.0, %v3120
    %v3122 = vpop.f32.mrf.mxu0
    %3123 = vmatprep.mubr.bf16.mxu0 0
    %3124 = vmatmul.mubr.bf16.gmra.mxu0 %v3029
    %v3125 = vpop.f32.mrf.mxu0
    %v3126 = vadd.f32 0.0, %v3125
    %v3127 = vpop.f32.mrf.mxu0
    %v3128 = vpop.f32.mrf.mxu0
    %v3129 = vadd.f32 0.0, %v3128
    %v3130 = vpop.f32.mrf.mxu0
    %3131 = vdwg.mxu0
    %vm3132 = vcmask 64512
    %v3133 = vsel %vm3132, %v3070, 0.0
    %v3134 = vsel %vm3132, %v3073, 0.0
    %v3135 = vadd.f32 %v3133, %v3134
    %v3136 = vsel %vm3132, %v3078, 0.0
    %v3137 = vadd.f32 %v3135, %v3136
    %v3138 = vsel %vm3132, %v3081, 0.0
    %v3139 = vadd.f32 %v3137, %v3138
    %v3140 = vsel %vm3132, %v3086, 0.0
    %v3141 = vadd.f32 %v3139, %v3140
    %v3142 = vsel %vm3132, %v3089, 0.0
    %v3143 = vadd.f32 %v3141, %v3142
    %v3144 = vsel %vm3132, %v3094, 0.0
    %v3145 = vadd.f32 %v3143, %v3144
    %v3146 = vsel %vm3132, %v3097, 0.0
    %v3147 = vadd.f32 %v3145, %v3146
    %v3148 = vsel %vm3132, %v3102, 0.0
    %v3149 = vadd.f32 %v3147, %v3148
    %v3150 = vsel %vm3132, %v3105, 0.0
    %v3151 = vadd.f32 %v3149, %v3150
    %v3152 = vsel %vm3132, %v3110, 0.0
    %v3153 = vadd.f32 %v3151, %v3152
    %v3154 = vsel %vm3132, %v3113, 0.0
    %v3155 = vadd.f32 %v3153, %v3154
    %v3156 = vsel %vm3132, %v3118, 0.0
    %v3157 = vadd.f32 %v3155, %v3156
    %v3158 = vsel %vm3132, %v3121, 0.0
    %v3159 = vadd.f32 %v3157, %v3158
    %v3160 = vsel %vm3132, %v3126, 0.0
    %v3161 = vadd.f32 %v3159, %v3160
    %v3162 = vsel %vm3132, %v3129, 0.0
    %v3163 = vadd.f32 %v3161, %v3162
    %v3164 = vrot.slane %v3163, 4
    %v3165 = vadd.f32 %v3163, %v3164
    %v3166 = vrot.slane %v3165, 2
    %v3167 = vadd.f32 %v3165, %v3166
    %v3168 = vrot.slane %v3167, 1
    %v3169 = vadd.f32 %v3167, %v3168
    %v3170 = vrcp.pop 128.0
    %v3171 = vmul.f32 %v3169, %v3170
    %v3172 = vmul.f32 %v3070, %v3070
    %v3173 = vmul.f32 %v3073, %v3073
    %v3174 = vmul.f32 %v3078, %v3078
    %v3175 = vmul.f32 %v3081, %v3081
    %v3176 = vmul.f32 %v3086, %v3086
    %v3177 = vmul.f32 %v3089, %v3089
    %v3178 = vmul.f32 %v3094, %v3094
    %v3179 = vmul.f32 %v3097, %v3097
    %v3180 = vmul.f32 %v3102, %v3102
    %v3181 = vmul.f32 %v3105, %v3105
    %v3182 = vmul.f32 %v3110, %v3110
    %v3183 = vmul.f32 %v3113, %v3113
    %v3184 = vmul.f32 %v3118, %v3118
    %v3185 = vmul.f32 %v3121, %v3121
    %v3186 = vmul.f32 %v3126, %v3126
    %v3187 = vmul.f32 %v3129, %v3129
    %v3188 = vsel %vm3132, %v3172, 0.0
    %v3189 = vsel %vm3132, %v3173, 0.0
    %v3190 = vadd.f32 %v3188, %v3189
    %v3191 = vsel %vm3132, %v3174, 0.0
    %v3192 = vadd.f32 %v3190, %v3191
    %v3193 = vsel %vm3132, %v3175, 0.0
    %v3194 = vadd.f32 %v3192, %v3193
    %v3195 = vsel %vm3132, %v3176, 0.0
    %v3196 = vadd.f32 %v3194, %v3195
    %v3197 = vsel %vm3132, %v3177, 0.0
    %v3198 = vadd.f32 %v3196, %v3197
    %v3199 = vsel %vm3132, %v3178, 0.0
    %v3200 = vadd.f32 %v3198, %v3199
    %v3201 = vsel %vm3132, %v3179, 0.0
    %v3202 = vadd.f32 %v3200, %v3201
    %v3203 = vsel %vm3132, %v3180, 0.0
    %v3204 = vadd.f32 %v3202, %v3203
    %v3205 = vsel %vm3132, %v3181, 0.0
    %v3206 = vadd.f32 %v3204, %v3205
    %v3207 = vsel %vm3132, %v3182, 0.0
    %v3208 = vadd.f32 %v3206, %v3207
    %v3209 = vsel %vm3132, %v3183, 0.0
    %v3210 = vadd.f32 %v3208, %v3209
    %v3211 = vsel %vm3132, %v3184, 0.0
    %v3212 = vadd.f32 %v3210, %v3211
    %v3213 = vsel %vm3132, %v3185, 0.0
    %v3214 = vadd.f32 %v3212, %v3213
    %v3215 = vsel %vm3132, %v3186, 0.0
    %v3216 = vadd.f32 %v3214, %v3215
    %v3217 = vsel %vm3132, %v3187, 0.0
    %v3218 = vadd.f32 %v3216, %v3217
    %v3219 = vrot.slane %v3218, 4
    %v3220 = vadd.f32 %v3218, %v3219
    %v3221 = vrot.slane %v3220, 2
    %v3222 = vadd.f32 %v3220, %v3221
    %v3223 = vrot.slane %v3222, 1
    %v3224 = vadd.f32 %v3222, %v3223
    %v3225 = vmul.f32 %v3224, %v3170
    %v3226 = vmul.f32 %v3171, %v3171
    %v3227 = vsub.f32 %v3225, %v3226
    %v3228 = vmax.f32 %v3227, 0.0
    %v3229 = vld [vmem:[%s3] sm:$0x1]
    %v3230 = vadd.f32 %v3228, 1e-05
    %v3231 = vrsqrt.pop %v3230
    %v3232 = vmul.f32 %v3229, %v3231
    %v3233 = vld [vmem:[%s4] sm:$0x1]
    %v3234 = vmul.f32 %v3171, %v3232
    %v3235 = vsub.f32 %v3233, %v3234
    %v3237 = vlaneseq
    %v3238 = vshrl.u32 %v3237, 7
    %v3239 = vsub.s32 0, %v3238
    %v3240 = vrot.slane %v3232, %v3239
    %v3242 = vmul.f32 %v3070, %v3240
    %v3243 = vmul.f32 %v3073, %v3240
    %v3244 = vmul.f32 %v3078, %v3240
    %v3245 = vmul.f32 %v3081, %v3240
    %v3246 = vmul.f32 %v3086, %v3240
    %v3247 = vmul.f32 %v3089, %v3240
    %v3248 = vmul.f32 %v3094, %v3240
    %v3249 = vmul.f32 %v3097, %v3240
    %v3250 = vmul.f32 %v3102, %v3240
    %v3251 = vmul.f32 %v3105, %v3240
    %v3252 = vmul.f32 %v3110, %v3240
    %v3253 = vmul.f32 %v3113, %v3240
    %v3254 = vmul.f32 %v3118, %v3240
    %v3255 = vmul.f32 %v3121, %v3240
    %v3256 = vmul.f32 %v3126, %v3240
    %v3257 = vmul.f32 %v3129, %v3240
    %v3259 = vlaneseq
    %v3260 = vshrl.u32 %v3259, 7
    %v3261 = vsub.s32 0, %v3260
    %v3262 = vrot.slane %v3235, %v3261
    %v3264 = vadd.f32 %v3242, %v3262
    %v3265 = vadd.f32 %v3243, %v3262
    %v3266 = vadd.f32 %v3244, %v3262
    %v3267 = vadd.f32 %v3245, %v3262
    %v3268 = vadd.f32 %v3246, %v3262
    %v3269 = vadd.f32 %v3247, %v3262
    %v3270 = vadd.f32 %v3248, %v3262
    %v3271 = vadd.f32 %v3249, %v3262
    %v3272 = vadd.f32 %v3250, %v3262
    %v3273 = vadd.f32 %v3251, %v3262
    %v3274 = vadd.f32 %v3252, %v3262
    %v3275 = vadd.f32 %v3253, %v3262
    %v3276 = vadd.f32 %v3254, %v3262
    %v3277 = vadd.f32 %v3255, %v3262
    %v3278 = vadd.f32 %v3256, %v3262
    %v3279 = vadd.f32 %v3257, %v3262
    %vm3280 = vcmp.gt.f32.partialorder %v3264, 0.0
    %vm3281 = vcmp.gt.f32.partialorder %v3265, 0.0
    %vm3282 = vcmp.gt.f32.partialorder %v3266, 0.0
    %vm3283 = vcmp.gt.f32.partialorder %v3267, 0.0
    %vm3284 = vcmp.gt.f32.partialorder %v3268, 0.0
    %vm3285 = vcmp.gt.f32.partialorder %v3269, 0.0
    %vm3286 = vcmp.gt.f32.partialorder %v3270, 0.0
    %vm3287 = vcmp.gt.f32.partialorder %v3271, 0.0
    %vm3288 = vcmp.gt.f32.partialorder %v3272, 0.0
    %vm3289 = vcmp.gt.f32.partialorder %v3273, 0.0
    %vm3290 = vcmp.gt.f32.partialorder %v3274, 0.0
    %vm3291 = vcmp.gt.f32.partialorder %v3275, 0.0
    %vm3292 = vcmp.gt.f32.partialorder %v3276, 0.0
    %vm3293 = vcmp.gt.f32.partialorder %v3277, 0.0
    %vm3294 = vcmp.gt.f32.partialorder %v3278, 0.0
    %vm3295 = vcmp.gt.f32.partialorder %v3279, 0.0
    %v3296 = vmul.f32 %v3264, 0.1
    %v3297 = vmul.f32 %v3265, 0.1
    %v3298 = vmul.f32 %v3266, 0.1
    %v3299 = vmul.f32 %v3267, 0.1
    %v3300 = vmul.f32 %v3268, 0.1
    %v3301 = vmul.f32 %v3269, 0.1
    %v3302 = vmul.f32 %v3270, 0.1
    %v3303 = vmul.f32 %v3271, 0.1
    %v3304 = vmul.f32 %v3272, 0.1
    %v3305 = vmul.f32 %v3273, 0.1
    %v3306 = vmul.f32 %v3274, 0.1
    %v3307 = vmul.f32 %v3275, 0.1
    %v3308 = vmul.f32 %v3276, 0.1
    %v3309 = vmul.f32 %v3277, 0.1
    %v3310 = vmul.f32 %v3278, 0.1
    %v3311 = vmul.f32 %v3279, 0.1
    %v3312 = vsel %vm3280, %v3264, %v3296
    %v3313 = vsel %vm3281, %v3265, %v3297
    %v3314 = vsel %vm3282, %v3266, %v3298
    %v3315 = vsel %vm3283, %v3267, %v3299
    %v3316 = vsel %vm3284, %v3268, %v3300
    %v3317 = vsel %vm3285, %v3269, %v3301
    %v3318 = vsel %vm3286, %v3270, %v3302
    %v3319 = vsel %vm3287, %v3271, %v3303
    %v3320 = vsel %vm3288, %v3272, %v3304
    %v3321 = vsel %vm3289, %v3273, %v3305
    %v3322 = vsel %vm3290, %v3274, %v3306
    %v3323 = vsel %vm3291, %v3275, %v3307
    %v3324 = vsel %vm3292, %v3276, %v3308
    %v3325 = vsel %vm3293, %v3277, %v3309
    %v3326 = vsel %vm3294, %v3278, %v3310
    %v3327 = vsel %vm3295, %v3279, %v3311
    %vm3328 = vcmask 60416
    %3329 = vst.msk [vmem:[#allocation4] sm:$0xf] %vm3328, 0
    %3330 = vst.msk [vmem:[#allocation4 + $0x4] sm:$0xf] %vm3328, 0
    %vm3331 = vcmask 57344
    %3332 = vst.msk [vmem:[#allocation4 + $0x8] sm:$0x1] %vm3331, 0
    %3333 = vst.msk [vmem:[#allocation4 + $0x78] sm:$0xf] %vm3328, 0
    %3334 = vst.msk [vmem:[#allocation4 + $0x7c] sm:$0xf] %vm3328, 0
    %3335 = vst.msk [vmem:[#allocation4 + $0x80] sm:$0x1] %vm3331, 0
    %s3336 = scalar_lea.vmem [#allocation4], 108
    %3337 = vst.msk [vmem:[%s3336] sm:$0xf] %vm3328, 0
    %3338 = vst.msk [vmem:[%s3336 + $0x4] sm:$0xf] %vm3328, 0
    %3339 = vst.msk [vmem:[%s3336 + $0x8] sm:$0x1] %vm3331, 0
    %3340 = vst.msk [vmem:[%s3336 + $0x78] sm:$0xf] %vm3328, 0
    %3341 = vst.msk [vmem:[%s3336 + $0x7c] sm:$0xf] %vm3328, 0
    %3342 = vst.msk [vmem:[%s3336 + $0x80] sm:$0x1] %vm3331, 0
    %s3343 = scalar_lea.vmem [#allocation4], 12
    %vm3344 = vcmask 60419
    %vm3345 = vmand %vm3344, %vm530
    %v3346 = vld [vmem:[%s3343] sm:$0x8]
    %v3347 = vsel %vm3345, 0, %v3346
    %3348 = vst [vmem:[%s3343] sm:$0x8] %v3347
    %v3349 = vld [vmem:[%s3343 + $0xc] sm:$0x8]
    %v3350 = vsel %vm3345, 0, %v3349
    %3351 = vst [vmem:[%s3343 + $0xc] sm:$0x8] %v3350
    %v3352 = vld [vmem:[%s3343 + $0x18] sm:$0x8]
    %v3353 = vsel %vm3345, 0, %v3352
    %3354 = vst [vmem:[%s3343 + $0x18] sm:$0x8] %v3353
    %v3355 = vld [vmem:[%s3343 + $0x24] sm:$0x8]
    %v3356 = vsel %vm3345, 0, %v3355
    %3357 = vst [vmem:[%s3343 + $0x24] sm:$0x8] %v3356
    %v3358 = vld [vmem:[%s3343 + $0x30] sm:$0x8]
    %v3359 = vsel %vm3345, 0, %v3358
    %3360 = vst [vmem:[%s3343 + $0x30] sm:$0x8] %v3359
    %v3361 = vld [vmem:[%s3343 + $0x3c] sm:$0x8]
    %v3362 = vsel %vm3345, 0, %v3361
    %3363 = vst [vmem:[%s3343 + $0x3c] sm:$0x8] %v3362
    %v3364 = vld [vmem:[%s3343 + $0x48] sm:$0x8]
    %v3365 = vsel %vm3345, 0, %v3364
    %3366 = vst [vmem:[%s3343 + $0x48] sm:$0x8] %v3365
    %v3367 = vld [vmem:[%s3343 + $0x54] sm:$0x8]
    %v3368 = vsel %vm3345, 0, %v3367
    %3369 = vst [vmem:[%s3343 + $0x54] sm:$0x8] %v3368
    %v3370 = vld [vmem:[%s3343 + $0x78] sm:$0x8]
    %v3371 = vsel %vm3345, 0, %v3370
    %3372 = vst [vmem:[%s3343 + $0x78] sm:$0x8] %v3371
    %v3373 = vld [vmem:[%s3343 + $0x84] sm:$0x8]
    %v3374 = vsel %vm3345, 0, %v3373
    %3375 = vst [vmem:[%s3343 + $0x84] sm:$0x8] %v3374
    %v3376 = vld [vmem:[%s3343 + $0x90] sm:$0x8]
    %v3377 = vsel %vm3345, 0, %v3376
    %3378 = vst [vmem:[%s3343 + $0x90] sm:$0x8] %v3377
    %v3379 = vld [vmem:[%s3343 + $0x9c] sm:$0x8]
    %v3380 = vsel %vm3345, 0, %v3379
    %3381 = vst [vmem:[%s3343 + $0x9c] sm:$0x8] %v3380
    %v3382 = vld [vmem:[%s3343 + $0xa8] sm:$0x8]
    %v3383 = vsel %vm3345, 0, %v3382
    %3384 = vst [vmem:[%s3343 + $0xa8] sm:$0x8] %v3383
    %v3385 = vld [vmem:[%s3343 + $0xb4] sm:$0x8]
    %v3386 = vsel %vm3345, 0, %v3385
    %3387 = vst [vmem:[%s3343 + $0xb4] sm:$0x8] %v3386
    %v3388 = vld [vmem:[%s3343 + $0xc0] sm:$0x8]
    %v3389 = vsel %vm3345, 0, %v3388
    %3390 = vst [vmem:[%s3343 + $0xc0] sm:$0x8] %v3389
    %v3391 = vld [vmem:[%s3343 + $0xcc] sm:$0x8]
    %v3392 = vsel %vm3345, 0, %v3391
    %3393 = vst [vmem:[%s3343 + $0xcc] sm:$0x8] %v3392
    %vm3394 = vcmask 57344
    %vm3395 = vmand %vm3394, %vm725
    %v3396 = vld [vmem:[%s3343 + $0x8] sm:$0x1]
    %v3397 = vsel %vm3395, 0, %v3396
    %3398 = vst [vmem:[%s3343 + $0x8] sm:$0x1] %v3397
    %v3399 = vld [vmem:[%s3343 + $0x14] sm:$0x1]
    %v3400 = vsel %vm3395, 0, %v3399
    %3401 = vst [vmem:[%s3343 + $0x14] sm:$0x1] %v3400
    %v3402 = vld [vmem:[%s3343 + $0x20] sm:$0x1]
    %v3403 = vsel %vm3395, 0, %v3402
    %3404 = vst [vmem:[%s3343 + $0x20] sm:$0x1] %v3403
    %v3405 = vld [vmem:[%s3343 + $0x2c] sm:$0x1]
    %v3406 = vsel %vm3395, 0, %v3405
    %3407 = vst [vmem:[%s3343 + $0x2c] sm:$0x1] %v3406
    %v3408 = vld [vmem:[%s3343 + $0x38] sm:$0x1]
    %v3409 = vsel %vm3395, 0, %v3408
    %3410 = vst [vmem:[%s3343 + $0x38] sm:$0x1] %v3409
    %v3411 = vld [vmem:[%s3343 + $0x44] sm:$0x1]
    %v3412 = vsel %vm3395, 0, %v3411
    %3413 = vst [vmem:[%s3343 + $0x44] sm:$0x1] %v3412
    %v3414 = vld [vmem:[%s3343 + $0x50] sm:$0x1]
    %v3415 = vsel %vm3395, 0, %v3414
    %3416 = vst [vmem:[%s3343 + $0x50] sm:$0x1] %v3415
    %v3417 = vld [vmem:[%s3343 + $0x5c] sm:$0x1]
    %v3418 = vsel %vm3395, 0, %v3417
    %3419 = vst [vmem:[%s3343 + $0x5c] sm:$0x1] %v3418
    %v3420 = vld [vmem:[%s3343 + $0x80] sm:$0x1]
    %v3421 = vsel %vm3395, 0, %v3420
    %3422 = vst [vmem:[%s3343 + $0x80] sm:$0x1] %v3421
    %v3423 = vld [vmem:[%s3343 + $0x8c] sm:$0x1]
    %v3424 = vsel %vm3395, 0, %v3423
    %3425 = vst [vmem:[%s3343 + $0x8c] sm:$0x1] %v3424
    %v3426 = vld [vmem:[%s3343 + $0x98] sm:$0x1]
    %v3427 = vsel %vm3395, 0, %v3426
    %3428 = vst [vmem:[%s3343 + $0x98] sm:$0x1] %v3427
    %v3429 = vld [vmem:[%s3343 + $0xa4] sm:$0x1]
    %v3430 = vsel %vm3395, 0, %v3429
    %3431 = vst [vmem:[%s3343 + $0xa4] sm:$0x1] %v3430
    %v3432 = vld [vmem:[%s3343 + $0xb0] sm:$0x1]
    %v3433 = vsel %vm3395, 0, %v3432
    %3434 = vst [vmem:[%s3343 + $0xb0] sm:$0x1] %v3433
    %v3435 = vld [vmem:[%s3343 + $0xbc] sm:$0x1]
    %v3436 = vsel %vm3395, 0, %v3435
    %3437 = vst [vmem:[%s3343 + $0xbc] sm:$0x1] %v3436
    %v3438 = vld [vmem:[%s3343 + $0xc8] sm:$0x1]
    %v3439 = vsel %vm3395, 0, %v3438
    %3440 = vst [vmem:[%s3343 + $0xc8] sm:$0x1] %v3439
    %v3441 = vld [vmem:[%s3343 + $0xd4] sm:$0x1]
    %v3442 = vsel %vm3395, 0, %v3441
    %3443 = vst [vmem:[%s3343 + $0xd4] sm:$0x1] %v3442
    %v3444 = vpack.c.bf16 %v3312, %v3312
    %v3445 = vpack.c.bf16 %v3313, %v3313
    %v3446 = vpack.c.bf16 %v3314, %v3314
    %v3447 = vpack.c.bf16 %v3315, %v3315
    %v3448 = vpack.c.bf16 %v3316, %v3316
    %v3449 = vpack.c.bf16 %v3317, %v3317
    %v3450 = vpack.c.bf16 %v3318, %v3318
    %v3451 = vpack.c.bf16 %v3319, %v3319
    %v3452 = vpack.c.bf16 %v3320, %v3320
    %v3453 = vpack.c.bf16 %v3321, %v3321
    %v3454 = vpack.c.bf16 %v3322, %v3322
    %v3455 = vpack.c.bf16 %v3323, %v3323
    %v3456 = vpack.c.bf16 %v3324, %v3324
    %v3457 = vpack.c.bf16 %v3325, %v3325
    %v3458 = vpack.c.bf16 %v3326, %v3326
    %v3459 = vpack.c.bf16 %v3327, %v3327
    %3460 = vst.msk [vmem:[%s3343 + $0x4] sm:$0xf] %vm3328, %v3444
    %3461 = vst.msk [vmem:[%s3343 + $0x10] sm:$0xf] %vm3328, %v3445
    %3462 = vst.msk [vmem:[%s3343 + $0x1c] sm:$0xf] %vm3328, %v3446
    %3463 = vst.msk [vmem:[%s3343 + $0x28] sm:$0xf] %vm3328, %v3447
    %3464 = vst.msk [vmem:[%s3343 + $0x34] sm:$0xf] %vm3328, %v3448
    %3465 = vst.msk [vmem:[%s3343 + $0x40] sm:$0xf] %vm3328, %v3449
    %3466 = vst.msk [vmem:[%s3343 + $0x4c] sm:$0xf] %vm3328, %v3450
    %3467 = vst.msk [vmem:[%s3343 + $0x58] sm:$0xf] %vm3328, %v3451
    %3468 = vst.msk [vmem:[%s3343 + $0x7c] sm:$0xf] %vm3328, %v3452
    %3469 = vst.msk [vmem:[%s3343 + $0x88] sm:$0xf] %vm3328, %v3453
    %3470 = vst.msk [vmem:[%s3343 + $0x94] sm:$0xf] %vm3328, %v3454
    %3471 = vst.msk [vmem:[%s3343 + $0xa0] sm:$0xf] %vm3328, %v3455
    %3472 = vst.msk [vmem:[%s3343 + $0xac] sm:$0xf] %vm3328, %v3456
    %3473 = vst.msk [vmem:[%s3343 + $0xb8] sm:$0xf] %vm3328, %v3457
    %3474 = vst.msk [vmem:[%s3343 + $0xc4] sm:$0xf] %vm3328, %v3458
    %3475 = vst.msk [vmem:[%s3343 + $0xd0] sm:$0xf] %vm3328, %v3459
    %v3476 = vld [vmem:[#allocation4] sm:$0x8]
    %v3477 = vld [vmem:[#allocation4 + $0x4] sm:$0xf]
    %v3478 = vld [vmem:[#allocation4 + $0xc] sm:$0x8]
    %v3479 = vld [vmem:[#allocation4 + $0x10] sm:$0xf]
    %v3480 = vld [vmem:[#allocation4 + $0x18] sm:$0x8]
    %v3481 = vld [vmem:[#allocation4 + $0x1c] sm:$0xf]
    %v3482 = vld [vmem:[#allocation4 + $0x24] sm:$0x8]
    %v3483 = vld [vmem:[#allocation4 + $0x28] sm:$0xf]
    %v3484 = vld [vmem:[#allocation4 + $0x30] sm:$0x8]
    %v3485 = vld [vmem:[#allocation4 + $0x34] sm:$0xf]
    %v3486 = vld [vmem:[#allocation4 + $0x3c] sm:$0x8]
    %v3487 = vld [vmem:[#allocation4 + $0x40] sm:$0xf]
    %v3488 = vld [vmem:[#allocation4 + $0x48] sm:$0x8]
    %v3489 = vld [vmem:[#allocation4 + $0x4c] sm:$0xf]
    %v3490 = vld [vmem:[#allocation4 + $0x54] sm:$0x8]
    %v3491 = vld [vmem:[#allocation4 + $0x58] sm:$0xf]
    %v3492 = vld [vmem:[#allocation4 + $0x78] sm:$0x8]
    %v3493 = vld [vmem:[#allocation4 + $0x7c] sm:$0xf]
    %v3494 = vld [vmem:[#allocation4 + $0x84] sm:$0x8]
    %v3495 = vld [vmem:[#allocation4 + $0x88] sm:$0xf]
    %v3496 = vld [vmem:[#allocation4 + $0x90] sm:$0x8]
    %v3497 = vld [vmem:[#allocation4 + $0x94] sm:$0xf]
    %v3498 = vld [vmem:[#allocation4 + $0x9c] sm:$0x8]
    %v3499 = vld [vmem:[#allocation4 + $0xa0] sm:$0xf]
    %v3500 = vld [vmem:[#allocation4 + $0xa8] sm:$0x8]
    %v3501 = vld [vmem:[#allocation4 + $0xac] sm:$0xf]
    %v3502 = vld [vmem:[#allocation4 + $0xb4] sm:$0x8]
    %v3503 = vld [vmem:[#allocation4 + $0xb8] sm:$0xf]
    %v3504 = vld [vmem:[#allocation4 + $0xc0] sm:$0x8]
    %v3505 = vld [vmem:[#allocation4 + $0xc4] sm:$0xf]
    %v3506 = vld [vmem:[#allocation4 + $0xcc] sm:$0x8]
    %v3507 = vld [vmem:[#allocation4 + $0xd0] sm:$0xf]
    %v3509 = vshrl.u32 %v3476, 16
    %v3511 = vrot.slane %v3509, 7
    %v3512 = vrot.slane %v3511, 4
    %v3514 = vshrl.u32 %v3477, 16
    %v3516 = vrot.slane %v3514, 7
    %v3517 = vshll.u32 %v3477, 16
    %v3519 = vor.u32 %v3516, %v3517
    %v3520 = vsel %vm1496, %v3512, %v3519
    %v3522 = vshrl.u32 %v3478, 16
    %v3524 = vrot.slane %v3522, 7
    %v3525 = vrot.slane %v3524, 4
    %v3527 = vshrl.u32 %v3479, 16
    %v3529 = vrot.slane %v3527, 7
    %v3530 = vshll.u32 %v3479, 16
    %v3532 = vor.u32 %v3529, %v3530
    %v3533 = vsel %vm1496, %v3525, %v3532
    %v3535 = vshrl.u32 %v3480, 16
    %v3537 = vrot.slane %v3535, 7
    %v3538 = vrot.slane %v3537, 4
    %v3540 = vshrl.u32 %v3481, 16
    %v3542 = vrot.slane %v3540, 7
    %v3543 = vshll.u32 %v3481, 16
    %v3545 = vor.u32 %v3542, %v3543
    %v3546 = vsel %vm1496, %v3538, %v3545
    %v3548 = vshrl.u32 %v3482, 16
    %v3550 = vrot.slane %v3548, 7
    %v3551 = vrot.slane %v3550, 4
    %v3553 = vshrl.u32 %v3483, 16
    %v3555 = vrot.slane %v3553, 7
    %v3556 = vshll.u32 %v3483, 16
    %v3558 = vor.u32 %v3555, %v3556
    %v3559 = vsel %vm1496, %v3551, %v3558
    %v3561 = vshrl.u32 %v3484, 16
    %v3563 = vrot.slane %v3561, 7
    %v3564 = vrot.slane %v3563, 4
    %v3566 = vshrl.u32 %v3485, 16
    %v3568 = vrot.slane %v3566, 7
    %v3569 = vshll.u32 %v3485, 16
    %v3571 = vor.u32 %v3568, %v3569
    %v3572 = vsel %vm1496, %v3564, %v3571
    %v3574 = vshrl.u32 %v3486, 16
    %v3576 = vrot.slane %v3574, 7
    %v3577 = vrot.slane %v3576, 4
    %v3579 = vshrl.u32 %v3487, 16
    %v3581 = vrot.slane %v3579, 7
    %v3582 = vshll.u32 %v3487, 16
    %v3584 = vor.u32 %v3581, %v3582
    %v3585 = vsel %vm1496, %v3577, %v3584
    %v3587 = vshrl.u32 %v3488, 16
    %v3589 = vrot.slane %v3587, 7
    %v3590 = vrot.slane %v3589, 4
    %v3592 = vshrl.u32 %v3489, 16
    %v3594 = vrot.slane %v3592, 7
    %v3595 = vshll.u32 %v3489, 16
    %v3597 = vor.u32 %v3594, %v3595
    %v3598 = vsel %vm1496, %v3590, %v3597
    %v3600 = vshrl.u32 %v3490, 16
    %v3602 = vrot.slane %v3600, 7
    %v3603 = vrot.slane %v3602, 4
    %v3605 = vshrl.u32 %v3491, 16
    %v3607 = vrot.slane %v3605, 7
    %v3608 = vshll.u32 %v3491, 16
    %v3610 = vor.u32 %v3607, %v3608
    %v3611 = vsel %vm1496, %v3603, %v3610
    %v3613 = vshrl.u32 %v3492, 16
    %v3615 = vrot.slane %v3613, 7
    %v3616 = vrot.slane %v3615, 4
    %v3618 = vshrl.u32 %v3493, 16
    %v3620 = vrot.slane %v3618, 7
    %v3621 = vshll.u32 %v3493, 16
    %v3623 = vor.u32 %v3620, %v3621
    %v3624 = vsel %vm1496, %v3616, %v3623
    %v3626 = vshrl.u32 %v3494, 16
    %v3628 = vrot.slane %v3626, 7
    %v3629 = vrot.slane %v3628, 4
    %v3631 = vshrl.u32 %v3495, 16
    %v3633 = vrot.slane %v3631, 7
    %v3634 = vshll.u32 %v3495, 16
    %v3636 = vor.u32 %v3633, %v3634
    %v3637 = vsel %vm1496, %v3629, %v3636
    %v3639 = vshrl.u32 %v3496, 16
    %v3641 = vrot.slane %v3639, 7
    %v3642 = vrot.slane %v3641, 4
    %v3644 = vshrl.u32 %v3497, 16
    %v3646 = vrot.slane %v3644, 7
    %v3647 = vshll.u32 %v3497, 16
    %v3649 = vor.u32 %v3646, %v3647
    %v3650 = vsel %vm1496, %v3642, %v3649
    %v3652 = vshrl.u32 %v3498, 16
    %v3654 = vrot.slane %v3652, 7
    %v3655 = vrot.slane %v3654, 4
    %v3657 = vshrl.u32 %v3499, 16
    %v3659 = vrot.slane %v3657, 7
    %v3660 = vshll.u32 %v3499, 16
    %v3662 = vor.u32 %v3659, %v3660
    %v3663 = vsel %vm1496, %v3655, %v3662
    %v3665 = vshrl.u32 %v3500, 16
    %v3667 = vrot.slane %v3665, 7
    %v3668 = vrot.slane %v3667, 4
    %v3670 = vshrl.u32 %v3501, 16
    %v3672 = vrot.slane %v3670, 7
    %v3673 = vshll.u32 %v3501, 16
    %v3675 = vor.u32 %v3672, %v3673
    %v3676 = vsel %vm1496, %v3668, %v3675
    %v3678 = vshrl.u32 %v3502, 16
    %v3680 = vrot.slane %v3678, 7
    %v3681 = vrot.slane %v3680, 4
    %v3683 = vshrl.u32 %v3503, 16
    %v3685 = vrot.slane %v3683, 7
    %v3686 = vshll.u32 %v3503, 16
    %v3688 = vor.u32 %v3685, %v3686
    %v3689 = vsel %vm1496, %v3681, %v3688
    %v3691 = vshrl.u32 %v3504, 16
    %v3693 = vrot.slane %v3691, 7
    %v3694 = vrot.slane %v3693, 4
    %v3696 = vshrl.u32 %v3505, 16
    %v3698 = vrot.slane %v3696, 7
    %v3699 = vshll.u32 %v3505, 16
    %v3701 = vor.u32 %v3698, %v3699
    %v3702 = vsel %vm1496, %v3694, %v3701
    %v3704 = vshrl.u32 %v3506, 16
    %v3706 = vrot.slane %v3704, 7
    %v3707 = vrot.slane %v3706, 4
    %v3709 = vshrl.u32 %v3507, 16
    %v3711 = vrot.slane %v3709, 7
    %v3712 = vshll.u32 %v3507, 16
    %v3714 = vor.u32 %v3711, %v3712
    %v3715 = vsel %vm1496, %v3707, %v3714
    %3732 = vst.msk [vmem:[#allocation5] sm:$0xf] %vm3328, %v3520
    %3733 = vst.msk [vmem:[#allocation5 + $0x4] sm:$0xf] %vm3328, %v3533
    %3734 = vst.msk [vmem:[#allocation5 + $0x8] sm:$0xf] %vm3328, %v3546
    %3735 = vst.msk [vmem:[#allocation5 + $0xc] sm:$0xf] %vm3328, %v3559
    %3736 = vst.msk [vmem:[#allocation5 + $0x10] sm:$0xf] %vm3328, %v3572
    %3737 = vst.msk [vmem:[#allocation5 + $0x14] sm:$0xf] %vm3328, %v3585
    %3738 = vst.msk [vmem:[#allocation5 + $0x18] sm:$0xf] %vm3328, %v3598
    %3739 = vst.msk [vmem:[#allocation5 + $0x1c] sm:$0xf] %vm3328, %v3611
    %3740 = vst.msk [vmem:[#allocation5 + $0x20] sm:$0xf] %vm3328, %v3624
    %3741 = vst.msk [vmem:[#allocation5 + $0x24] sm:$0xf] %vm3328, %v3637
    %3742 = vst.msk [vmem:[#allocation5 + $0x28] sm:$0xf] %vm3328, %v3650
    %3743 = vst.msk [vmem:[#allocation5 + $0x2c] sm:$0xf] %vm3328, %v3663
    %3744 = vst.msk [vmem:[#allocation5 + $0x30] sm:$0xf] %vm3328, %v3676
    %3745 = vst.msk [vmem:[#allocation5 + $0x34] sm:$0xf] %vm3328, %v3689
    %3746 = vst.msk [vmem:[#allocation5 + $0x38] sm:$0xf] %vm3328, %v3702
    %3747 = vst.msk [vmem:[#allocation5 + $0x3c] sm:$0xf] %vm3328, %v3715
    %v3748 = vld [vmem:[#allocation4 + $0x4] sm:$0xf]
    %v3749 = vld [vmem:[#allocation4 + $0x10] sm:$0xf]
    %v3750 = vld [vmem:[#allocation4 + $0x1c] sm:$0xf]
    %v3751 = vld [vmem:[#allocation4 + $0x28] sm:$0xf]
    %v3752 = vld [vmem:[#allocation4 + $0x34] sm:$0xf]
    %v3753 = vld [vmem:[#allocation4 + $0x40] sm:$0xf]
    %v3754 = vld [vmem:[#allocation4 + $0x4c] sm:$0xf]
    %v3755 = vld [vmem:[#allocation4 + $0x58] sm:$0xf]
    %v3756 = vld [vmem:[#allocation4 + $0x7c] sm:$0xf]
    %v3757 = vld [vmem:[#allocation4 + $0x88] sm:$0xf]
    %v3758 = vld [vmem:[#allocation4 + $0x94] sm:$0xf]
    %v3759 = vld [vmem:[#allocation4 + $0xa0] sm:$0xf]
    %v3760 = vld [vmem:[#allocation4 + $0xac] sm:$0xf]
    %v3761 = vld [vmem:[#allocation4 + $0xb8] sm:$0xf]
    %v3762 = vld [vmem:[#allocation4 + $0xc4] sm:$0xf]
    %v3763 = vld [vmem:[#allocation4 + $0xd0] sm:$0xf]
    %3780 = vrot.lane.b32.xlu0 %v3748, 8
    %v3781 = vpop.permute.xlu0 %3780
    %3782 = vrot.lane.b32.xlu0 %v3749, 8
    %v3783 = vpop.permute.xlu0 %3782
    %3784 = vrot.lane.b32.xlu0 %v3750, 8
    %v3785 = vpop.permute.xlu0 %3784
    %3786 = vrot.lane.b32.xlu0 %v3751, 8
    %v3787 = vpop.permute.xlu0 %3786
    %3788 = vrot.lane.b32.xlu0 %v3752, 8
    %v3789 = vpop.permute.xlu0 %3788
    %3790 = vrot.lane.b32.xlu0 %v3753, 8
    %v3791 = vpop.permute.xlu0 %3790
    %3792 = vrot.lane.b32.xlu0 %v3754, 8
    %v3793 = vpop.permute.xlu0 %3792
    %3794 = vrot.lane.b32.xlu0 %v3755, 8
    %v3795 = vpop.permute.xlu0 %3794
    %3796 = vrot.lane.b32.xlu0 %v3756, 8
    %v3797 = vpop.permute.xlu0 %3796
    %3798 = vrot.lane.b32.xlu0 %v3757, 8
    %v3799 = vpop.permute.xlu0 %3798
    %3800 = vrot.lane.b32.xlu0 %v3758, 8
    %v3801 = vpop.permute.xlu0 %3800
    %3802 = vrot.lane.b32.xlu0 %v3759, 8
    %v3803 = vpop.permute.xlu0 %3802
    %3804 = vrot.lane.b32.xlu0 %v3760, 8
    %v3805 = vpop.permute.xlu0 %3804
    %3806 = vrot.lane.b32.xlu0 %v3761, 8
    %v3807 = vpop.permute.xlu0 %3806
    %3808 = vrot.lane.b32.xlu0 %v3762, 8
    %v3809 = vpop.permute.xlu0 %3808
    %3810 = vrot.lane.b32.xlu0 %v3763, 8
    %v3811 = vpop.permute.xlu0 %3810
    %vm3828 = vcmask 126016
    %3829 = vst.msk [vmem:[#allocation5] sm:$0xf] %vm3828, %v3781
    %3830 = vst.msk [vmem:[#allocation5 + $0x4] sm:$0xf] %vm3828, %v3783
    %3831 = vst.msk [vmem:[#allocation5 + $0x8] sm:$0xf] %vm3828, %v3785
    %3832 = vst.msk [vmem:[#allocation5 + $0xc] sm:$0xf] %vm3828, %v3787
    %3833 = vst.msk [vmem:[#allocation5 + $0x10] sm:$0xf] %vm3828, %v3789
    %3834 = vst.msk [vmem:[#allocation5 + $0x14] sm:$0xf] %vm3828, %v3791
    %3835 = vst.msk [vmem:[#allocation5 + $0x18] sm:$0xf] %vm3828, %v3793
    %3836 = vst.msk [vmem:[#allocation5 + $0x1c] sm:$0xf] %vm3828, %v3795
    %3837 = vst.msk [vmem:[#allocation5 + $0x20] sm:$0xf] %vm3828, %v3797
    %3838 = vst.msk [vmem:[#allocation5 + $0x24] sm:$0xf] %vm3828, %v3799
    %3839 = vst.msk [vmem:[#allocation5 + $0x28] sm:$0xf] %vm3828, %v3801
    %3840 = vst.msk [vmem:[#allocation5 + $0x2c] sm:$0xf] %vm3828, %v3803
    %3841 = vst.msk [vmem:[#allocation5 + $0x30] sm:$0xf] %vm3828, %v3805
    %3842 = vst.msk [vmem:[#allocation5 + $0x34] sm:$0xf] %vm3828, %v3807
    %3843 = vst.msk [vmem:[#allocation5 + $0x38] sm:$0xf] %vm3828, %v3809
    %3844 = vst.msk [vmem:[#allocation5 + $0x3c] sm:$0xf] %vm3828, %v3811
    %v3845 = vld [vmem:[#allocation4 + $0x4] sm:$0xf]
    %v3846 = vld [vmem:[#allocation4 + $0x8] sm:$0x1]
    %v3847 = vld [vmem:[#allocation4 + $0x10] sm:$0xf]
    %v3848 = vld [vmem:[#allocation4 + $0x14] sm:$0x1]
    %v3849 = vld [vmem:[#allocation4 + $0x1c] sm:$0xf]
    %v3850 = vld [vmem:[#allocation4 + $0x20] sm:$0x1]
    %v3851 = vld [vmem:[#allocation4 + $0x28] sm:$0xf]
    %v3852 = vld [vmem:[#allocation4 + $0x2c] sm:$0x1]
    %v3853 = vld [vmem:[#allocation4 + $0x34] sm:$0xf]
    %v3854 = vld [vmem:[#allocation4 + $0x38] sm:$0x1]
    %v3855 = vld [vmem:[#allocation4 + $0x40] sm:$0xf]
    %v3856 = vld [vmem:[#allocation4 + $0x44] sm:$0x1]
    %v3857 = vld [vmem:[#allocation4 + $0x4c] sm:$0xf]
    %v3858 = vld [vmem:[#allocation4 + $0x50] sm:$0x1]
    %v3859 = vld [vmem:[#allocation4 + $0x58] sm:$0xf]
    %v3860 = vld [vmem:[#allocation4 + $0x5c] sm:$0x1]
    %v3861 = vld [vmem:[#allocation4 + $0x7c] sm:$0xf]
    %v3862 = vld [vmem:[#allocation4 + $0x80] sm:$0x1]
    %v3863 = vld [vmem:[#allocation4 + $0x88] sm:$0xf]
    %v3864 = vld [vmem:[#allocation4 + $0x8c] sm:$0x1]
    %v3865 = vld [vmem:[#allocation4 + $0x94] sm:$0xf]
    %v3866 = vld [vmem:[#allocation4 + $0x98] sm:$0x1]
    %v3867 = vld [vmem:[#allocation4 + $0xa0] sm:$0xf]
    %v3868 = vld [vmem:[#allocation4 + $0xa4] sm:$0x1]
    %v3869 = vld [vmem:[#allocation4 + $0xac] sm:$0xf]
    %v3870 = vld [vmem:[#allocation4 + $0xb0] sm:$0x1]
    %v3871 = vld [vmem:[#allocation4 + $0xb8] sm:$0xf]
    %v3872 = vld [vmem:[#allocation4 + $0xbc] sm:$0x1]
    %v3873 = vld [vmem:[#allocation4 + $0xc4] sm:$0xf]
    %v3874 = vld [vmem:[#allocation4 + $0xc8] sm:$0x1]
    %v3875 = vld [vmem:[#allocation4 + $0xd0] sm:$0xf]
    %v3876 = vld [vmem:[#allocation4 + $0xd4] sm:$0x1]
    %vm3877 = vsmask.f32 3328
    %vm3878 = vsmask.f32 7440
    %vm3879 = vmor %vm3877, %vm3878
    %v3881 = vshrl.u32 %v3845, 16
    %v3883 = vrot.slane %v3881, 4
    %v3884 = vshll.u32 %v3845, 16
    %v3886 = vrot.slane %v3884, 5
    %v3887 = vor.u32 %v3883, %v3886
    %v3888 = vrot.slane %v3887, 4
    %v3890 = vshll.u32 %v3846, 16
    %v3892 = vrot.slane %v3890, 5
    %v3893 = vsel %vm3879, %v3888, %v3892
    %v3895 = vshrl.u32 %v3847, 16
    %v3897 = vrot.slane %v3895, 4
    %v3898 = vshll.u32 %v3847, 16
    %v3900 = vrot.slane %v3898, 5
    %v3901 = vor.u32 %v3897, %v3900
    %v3902 = vrot.slane %v3901, 4
    %v3904 = vshll.u32 %v3848, 16
    %v3906 = vrot.slane %v3904, 5
    %v3907 = vsel %vm3879, %v3902, %v3906
    %v3909 = vshrl.u32 %v3849, 16
    %v3911 = vrot.slane %v3909, 4
    %v3912 = vshll.u32 %v3849, 16
    %v3914 = vrot.slane %v3912, 5
    %v3915 = vor.u32 %v3911, %v3914
    %v3916 = vrot.slane %v3915, 4
    %v3918 = vshll.u32 %v3850, 16
    %v3920 = vrot.slane %v3918, 5
    %v3921 = vsel %vm3879, %v3916, %v3920
    %v3923 = vshrl.u32 %v3851, 16
    %v3925 = vrot.slane %v3923, 4
    %v3926 = vshll.u32 %v3851, 16
    %v3928 = vrot.slane %v3926, 5
    %v3929 = vor.u32 %v3925, %v3928
    %v3930 = vrot.slane %v3929, 4
    %v3932 = vshll.u32 %v3852, 16
    %v3934 = vrot.slane %v3932, 5
    %v3935 = vsel %vm3879, %v3930, %v3934
    %v3937 = vshrl.u32 %v3853, 16
    %v3939 = vrot.slane %v3937, 4
    %v3940 = vshll.u32 %v3853, 16
    %v3942 = vrot.slane %v3940, 5
    %v3943 = vor.u32 %v3939, %v3942
    %v3944 = vrot.slane %v3943, 4
    %v3946 = vshll.u32 %v3854, 16
    %v3948 = vrot.slane %v3946, 5
    %v3949 = vsel %vm3879, %v3944, %v3948
    %v3951 = vshrl.u32 %v3855, 16
    %v3953 = vrot.slane %v3951, 4
    %v3954 = vshll.u32 %v3855, 16
    %v3956 = vrot.slane %v3954, 5
    %v3957 = vor.u32 %v3953, %v3956
    %v3958 = vrot.slane %v3957, 4
    %v3960 = vshll.u32 %v3856, 16
    %v3962 = vrot.slane %v3960, 5
    %v3963 = vsel %vm3879, %v3958, %v3962
    %v3965 = vshrl.u32 %v3857, 16
    %v3967 = vrot.slane %v3965, 4
    %v3968 = vshll.u32 %v3857, 16
    %v3970 = vrot.slane %v3968, 5
    %v3971 = vor.u32 %v3967, %v3970
    %v3972 = vrot.slane %v3971, 4
    %v3974 = vshll.u32 %v3858, 16
    %v3976 = vrot.slane %v3974, 5
    %v3977 = vsel %vm3879, %v3972, %v3976
    %v3979 = vshrl.u32 %v3859, 16
    %v3981 = vrot.slane %v3979, 4
    %v3982 = vshll.u32 %v3859, 16
    %v3984 = vrot.slane %v3982, 5
    %v3985 = vor.u32 %v3981, %v3984
    %v3986 = vrot.slane %v3985, 4
    %v3988 = vshll.u32 %v3860, 16
    %v3990 = vrot.slane %v3988, 5
    %v3991 = vsel %vm3879, %v3986, %v3990
    %v3993 = vshrl.u32 %v3861, 16
    %v3995 = vrot.slane %v3993, 4
    %v3996 = vshll.u32 %v3861, 16
    %v3998 = vrot.slane %v3996, 5
    %v3999 = vor.u32 %v3995, %v3998
    %v4000 = vrot.slane %v3999, 4
    %v4002 = vshll.u32 %v3862, 16
    %v4004 = vrot.slane %v4002, 5
    %v4005 = vsel %vm3879, %v4000, %v4004
    %v4007 = vshrl.u32 %v3863, 16
    %v4009 = vrot.slane %v4007, 4
    %v4010 = vshll.u32 %v3863, 16
    %v4012 = vrot.slane %v4010, 5
    %v4013 = vor.u32 %v4009, %v4012
    %v4014 = vrot.slane %v4013, 4
    %v4016 = vshll.u32 %v3864, 16
    %v4018 = vrot.slane %v4016, 5
    %v4019 = vsel %vm3879, %v4014, %v4018
    %v4021 = vshrl.u32 %v3865, 16
    %v4023 = vrot.slane %v4021, 4
    %v4024 = vshll.u32 %v3865, 16
    %v4026 = vrot.slane %v4024, 5
    %v4027 = vor.u32 %v4023, %v4026
    %v4028 = vrot.slane %v4027, 4
    %v4030 = vshll.u32 %v3866, 16
    %v4032 = vrot.slane %v4030, 5
    %v4033 = vsel %vm3879, %v4028, %v4032
    %v4035 = vshrl.u32 %v3867, 16
    %v4037 = vrot.slane %v4035, 4
    %v4038 = vshll.u32 %v3867, 16
    %v4040 = vrot.slane %v4038, 5
    %v4041 = vor.u32 %v4037, %v4040
    %v4042 = vrot.slane %v4041, 4
    %v4044 = vshll.u32 %v3868, 16
    %v4046 = vrot.slane %v4044, 5
    %v4047 = vsel %vm3879, %v4042, %v4046
    %v4049 = vshrl.u32 %v3869, 16
    %v4051 = vrot.slane %v4049, 4
    %v4052 = vshll.u32 %v3869, 16
    %v4054 = vrot.slane %v4052, 5
    %v4055 = vor.u32 %v4051, %v4054
    %v4056 = vrot.slane %v4055, 4
    %v4058 = vshll.u32 %v3870, 16
    %v4060 = vrot.slane %v4058, 5
    %v4061 = vsel %vm3879, %v4056, %v4060
    %v4063 = vshrl.u32 %v3871, 16
    %v4065 = vrot.slane %v4063, 4
    %v4066 = vshll.u32 %v3871, 16
    %v4068 = vrot.slane %v4066, 5
    %v4069 = vor.u32 %v4065, %v4068
    %v4070 = vrot.slane %v4069, 4
    %v4072 = vshll.u32 %v3872, 16
    %v4074 = vrot.slane %v4072, 5
    %v4075 = vsel %vm3879, %v4070, %v4074
    %v4077 = vshrl.u32 %v3873, 16
    %v4079 = vrot.slane %v4077, 4
    %v4080 = vshll.u32 %v3873, 16
    %v4082 = vrot.slane %v4080, 5
    %v4083 = vor.u32 %v4079, %v4082
    %v4084 = vrot.slane %v4083, 4
    %v4086 = vshll.u32 %v3874, 16
    %v4088 = vrot.slane %v4086, 5
    %v4089 = vsel %vm3879, %v4084, %v4088
    %v4091 = vshrl.u32 %v3875, 16
    %v4093 = vrot.slane %v4091, 4
    %v4094 = vshll.u32 %v3875, 16
    %v4096 = vrot.slane %v4094, 5
    %v4097 = vor.u32 %v4093, %v4096
    %v4098 = vrot.slane %v4097, 4
    %v4100 = vshll.u32 %v3876, 16
    %v4102 = vrot.slane %v4100, 5
    %v4103 = vsel %vm3879, %v4098, %v4102
    %4104 = vrot.lane.b32.xlu0 %v3893, 16
    %v4105 = vpop.permute.xlu0 %4104
    %4106 = vrot.lane.b32.xlu0 %v3907, 16
    %v4107 = vpop.permute.xlu0 %4106
    %4108 = vrot.lane.b32.xlu0 %v3921, 16
    %v4109 = vpop.permute.xlu0 %4108
    %4110 = vrot.lane.b32.xlu0 %v3935, 16
    %v4111 = vpop.permute.xlu0 %4110
    %4112 = vrot.lane.b32.xlu0 %v3949, 16
    %v4113 = vpop.permute.xlu0 %4112
    %4114 = vrot.lane.b32.xlu0 %v3963, 16
    %v4115 = vpop.permute.xlu0 %4114
    %4116 = vrot.lane.b32.xlu0 %v3977, 16
    %v4117 = vpop.permute.xlu0 %4116
    %4118 = vrot.lane.b32.xlu0 %v3991, 16
    %v4119 = vpop.permute.xlu0 %4118
    %4120 = vrot.lane.b32.xlu0 %v4005, 16
    %v4121 = vpop.permute.xlu0 %4120
    %4122 = vrot.lane.b32.xlu0 %v4019, 16
    %v4123 = vpop.permute.xlu0 %4122
    %4124 = vrot.lane.b32.xlu0 %v4033, 16
    %v4125 = vpop.permute.xlu0 %4124
    %4126 = vrot.lane.b32.xlu0 %v4047, 16
    %v4127 = vpop.permute.xlu0 %4126
    %4128 = vrot.lane.b32.xlu0 %v4061, 16
    %v4129 = vpop.permute.xlu0 %4128
    %4130 = vrot.lane.b32.xlu0 %v4075, 16
    %v4131 = vpop.permute.xlu0 %4130
    %4132 = vrot.lane.b32.xlu0 %v4089, 16
    %v4133 = vpop.permute.xlu0 %4132
    %4134 = vrot.lane.b32.xlu0 %v4103, 16
    %v4135 = vpop.permute.xlu0 %4134
    %vm4152 = vcmask 191616
    %4153 = vst.msk [vmem:[#allocation5] sm:$0xf] %vm4152, %v4105
    %4154 = vst.msk [vmem:[#allocation5 + $0x4] sm:$0xf] %vm4152, %v4107
    %4155 = vst.msk [vmem:[#allocation5 + $0x8] sm:$0xf] %vm4152, %v4109
    %4156 = vst.msk [vmem:[#allocation5 + $0xc] sm:$0xf] %vm4152, %v4111
    %4157 = vst.msk [vmem:[#allocation5 + $0x10] sm:$0xf] %vm4152, %v4113
    %4158 = vst.msk [vmem:[#allocation5 + $0x14] sm:$0xf] %vm4152, %v4115
    %4159 = vst.msk [vmem:[#allocation5 + $0x18] sm:$0xf] %vm4152, %v4117
    %4160 = vst.msk [vmem:[#allocation5 + $0x1c] sm:$0xf] %vm4152, %v4119
    %4161 = vst.msk [vmem:[#allocation5 + $0x20] sm:$0xf] %vm4152, %v4121
    %4162 = vst.msk [vmem:[#allocation5 + $0x24] sm:$0xf] %vm4152, %v4123
    %4163 = vst.msk [vmem:[#allocation5 + $0x28] sm:$0xf] %vm4152, %v4125
    %4164 = vst.msk [vmem:[#allocation5 + $0x2c] sm:$0xf] %vm4152, %v4127
    %4165 = vst.msk [vmem:[#allocation5 + $0x30] sm:$0xf] %vm4152, %v4129
    %4166 = vst.msk [vmem:[#allocation5 + $0x34] sm:$0xf] %vm4152, %v4131
    %4167 = vst.msk [vmem:[#allocation5 + $0x38] sm:$0xf] %vm4152, %v4133
    %4168 = vst.msk [vmem:[#allocation5 + $0x3c] sm:$0xf] %vm4152, %v4135
    %v4169 = vld [vmem:[%s3343] sm:$0x8]
    %v4170 = vld [vmem:[%s3343 + $0x4] sm:$0xf]
    %v4171 = vld [vmem:[%s3343 + $0xc] sm:$0x8]
    %v4172 = vld [vmem:[%s3343 + $0x10] sm:$0xf]
    %v4173 = vld [vmem:[%s3343 + $0x18] sm:$0x8]
    %v4174 = vld [vmem:[%s3343 + $0x1c] sm:$0xf]
    %v4175 = vld [vmem:[%s3343 + $0x24] sm:$0x8]
    %v4176 = vld [vmem:[%s3343 + $0x28] sm:$0xf]
    %v4177 = vld [vmem:[%s3343 + $0x30] sm:$0x8]
    %v4178 = vld [vmem:[%s3343 + $0x34] sm:$0xf]
    %v4179 = vld [vmem:[%s3343 + $0x3c] sm:$0x8]
    %v4180 = vld [vmem:[%s3343 + $0x40] sm:$0xf]
    %v4181 = vld [vmem:[%s3343 + $0x48] sm:$0x8]
    %v4182 = vld [vmem:[%s3343 + $0x4c] sm:$0xf]
    %v4183 = vld [vmem:[%s3343 + $0x54] sm:$0x8]
    %v4184 = vld [vmem:[%s3343 + $0x58] sm:$0xf]
    %v4185 = vld [vmem:[%s3343 + $0x78] sm:$0x8]
    %v4186 = vld [vmem:[%s3343 + $0x7c] sm:$0xf]
    %v4187 = vld [vmem:[%s3343 + $0x84] sm:$0x8]
    %v4188 = vld [vmem:[%s3343 + $0x88] sm:$0xf]
    %v4189 = vld [vmem:[%s3343 + $0x90] sm:$0x8]
    %v4190 = vld [vmem:[%s3343 + $0x94] sm:$0xf]
    %v4191 = vld [vmem:[%s3343 + $0x9c] sm:$0x8]
    %v4192 = vld [vmem:[%s3343 + $0xa0] sm:$0xf]
    %v4193 = vld [vmem:[%s3343 + $0xa8] sm:$0x8]
    %v4194 = vld [vmem:[%s3343 + $0xac] sm:$0xf]
    %v4195 = vld [vmem:[%s3343 + $0xb4] sm:$0x8]
    %v4196 = vld [vmem:[%s3343 + $0xb8] sm:$0xf]
    %v4197 = vld [vmem:[%s3343 + $0xc0] sm:$0x8]
    %v4198 = vld [vmem:[%s3343 + $0xc4] sm:$0xf]
    %v4199 = vld [vmem:[%s3343 + $0xcc] sm:$0x8]
    %v4200 = vld [vmem:[%s3343 + $0xd0] sm:$0xf]
    %v4202 = vshrl.u32 %v4169, 16
    %v4204 = vrot.slane %v4202, 7
    %v4205 = vrot.slane %v4204, 4
    %v4207 = vshrl.u32 %v4170, 16
    %v4209 = vrot.slane %v4207, 7
    %v4210 = vshll.u32 %v4170, 16
    %v4212 = vor.u32 %v4209, %v4210
    %v4213 = vsel %vm1496, %v4205, %v4212
    %v4215 = vshrl.u32 %v4171, 16
    %v4217 = vrot.slane %v4215, 7
    %v4218 = vrot.slane %v4217, 4
    %v4220 = vshrl.u32 %v4172, 16
    %v4222 = vrot.slane %v4220, 7
    %v4223 = vshll.u32 %v4172, 16
    %v4225 = vor.u32 %v4222, %v4223
    %v4226 = vsel %vm1496, %v4218, %v4225
    %v4228 = vshrl.u32 %v4173, 16
    %v4230 = vrot.slane %v4228, 7
    %v4231 = vrot.slane %v4230, 4
    %v4233 = vshrl.u32 %v4174, 16
    %v4235 = vrot.slane %v4233, 7
    %v4236 = vshll.u32 %v4174, 16
    %v4238 = vor.u32 %v4235, %v4236
    %v4239 = vsel %vm1496, %v4231, %v4238
    %v4241 = vshrl.u32 %v4175, 16
    %v4243 = vrot.slane %v4241, 7
    %v4244 = vrot.slane %v4243, 4
    %v4246 = vshrl.u32 %v4176, 16
    %v4248 = vrot.slane %v4246, 7
    %v4249 = vshll.u32 %v4176, 16
    %v4251 = vor.u32 %v4248, %v4249
    %v4252 = vsel %vm1496, %v4244, %v4251
    %v4254 = vshrl.u32 %v4177, 16
    %v4256 = vrot.slane %v4254, 7
    %v4257 = vrot.slane %v4256, 4
    %v4259 = vshrl.u32 %v4178, 16
    %v4261 = vrot.slane %v4259, 7
    %v4262 = vshll.u32 %v4178, 16
    %v4264 = vor.u32 %v4261, %v4262
    %v4265 = vsel %vm1496, %v4257, %v4264
    %v4267 = vshrl.u32 %v4179, 16
    %v4269 = vrot.slane %v4267, 7
    %v4270 = vrot.slane %v4269, 4
    %v4272 = vshrl.u32 %v4180, 16
    %v4274 = vrot.slane %v4272, 7
    %v4275 = vshll.u32 %v4180, 16
    %v4277 = vor.u32 %v4274, %v4275
    %v4278 = vsel %vm1496, %v4270, %v4277
    %v4280 = vshrl.u32 %v4181, 16
    %v4282 = vrot.slane %v4280, 7
    %v4283 = vrot.slane %v4282, 4
    %v4285 = vshrl.u32 %v4182, 16
    %v4287 = vrot.slane %v4285, 7
    %v4288 = vshll.u32 %v4182, 16
    %v4290 = vor.u32 %v4287, %v4288
    %v4291 = vsel %vm1496, %v4283, %v4290
    %v4293 = vshrl.u32 %v4183, 16
    %v4295 = vrot.slane %v4293, 7
    %v4296 = vrot.slane %v4295, 4
    %v4298 = vshrl.u32 %v4184, 16
    %v4300 = vrot.slane %v4298, 7
    %v4301 = vshll.u32 %v4184, 16
    %v4303 = vor.u32 %v4300, %v4301
    %v4304 = vsel %vm1496, %v4296, %v4303
    %v4306 = vshrl.u32 %v4185, 16
    %v4308 = vrot.slane %v4306, 7
    %v4309 = vrot.slane %v4308, 4
    %v4311 = vshrl.u32 %v4186, 16
    %v4313 = vrot.slane %v4311, 7
    %v4314 = vshll.u32 %v4186, 16
    %v4316 = vor.u32 %v4313, %v4314
    %v4317 = vsel %vm1496, %v4309, %v4316
    %v4319 = vshrl.u32 %v4187, 16
    %v4321 = vrot.slane %v4319, 7
    %v4322 = vrot.slane %v4321, 4
    %v4324 = vshrl.u32 %v4188, 16
    %v4326 = vrot.slane %v4324, 7
    %v4327 = vshll.u32 %v4188, 16
    %v4329 = vor.u32 %v4326, %v4327
    %v4330 = vsel %vm1496, %v4322, %v4329
    %v4332 = vshrl.u32 %v4189, 16
    %v4334 = vrot.slane %v4332, 7
    %v4335 = vrot.slane %v4334, 4
    %v4337 = vshrl.u32 %v4190, 16
    %v4339 = vrot.slane %v4337, 7
    %v4340 = vshll.u32 %v4190, 16
    %v4342 = vor.u32 %v4339, %v4340
    %v4343 = vsel %vm1496, %v4335, %v4342
    %v4345 = vshrl.u32 %v4191, 16
    %v4347 = vrot.slane %v4345, 7
    %v4348 = vrot.slane %v4347, 4
    %v4350 = vshrl.u32 %v4192, 16
    %v4352 = vrot.slane %v4350, 7
    %v4353 = vshll.u32 %v4192, 16
    %v4355 = vor.u32 %v4352, %v4353
    %v4356 = vsel %vm1496, %v4348, %v4355
    %v4358 = vshrl.u32 %v4193, 16
    %v4360 = vrot.slane %v4358, 7
    %v4361 = vrot.slane %v4360, 4
    %v4363 = vshrl.u32 %v4194, 16
    %v4365 = vrot.slane %v4363, 7
    %v4366 = vshll.u32 %v4194, 16
    %v4368 = vor.u32 %v4365, %v4366
    %v4369 = vsel %vm1496, %v4361, %v4368
    %v4371 = vshrl.u32 %v4195, 16
    %v4373 = vrot.slane %v4371, 7
    %v4374 = vrot.slane %v4373, 4
    %v4376 = vshrl.u32 %v4196, 16
    %v4378 = vrot.slane %v4376, 7
    %v4379 = vshll.u32 %v4196, 16
    %v4381 = vor.u32 %v4378, %v4379
    %v4382 = vsel %vm1496, %v4374, %v4381
    %v4384 = vshrl.u32 %v4197, 16
    %v4386 = vrot.slane %v4384, 7
    %v4387 = vrot.slane %v4386, 4
    %v4389 = vshrl.u32 %v4198, 16
    %v4391 = vrot.slane %v4389, 7
    %v4392 = vshll.u32 %v4198, 16
    %v4394 = vor.u32 %v4391, %v4392
    %v4395 = vsel %vm1496, %v4387, %v4394
    %v4397 = vshrl.u32 %v4199, 16
    %v4399 = vrot.slane %v4397, 7
    %v4400 = vrot.slane %v4399, 4
    %v4402 = vshrl.u32 %v4200, 16
    %v4404 = vrot.slane %v4402, 7
    %v4405 = vshll.u32 %v4200, 16
    %v4407 = vor.u32 %v4404, %v4405
    %v4408 = vsel %vm1496, %v4400, %v4407
    %4409 = vrot.lane.b32.xlu0 %v4213, 24
    %v4410 = vpop.permute.xlu0 %4409
    %4411 = vrot.lane.b32.xlu0 %v4226, 24
    %v4412 = vpop.permute.xlu0 %4411
    %4413 = vrot.lane.b32.xlu0 %v4239, 24
    %v4414 = vpop.permute.xlu0 %4413
    %4415 = vrot.lane.b32.xlu0 %v4252, 24
    %v4416 = vpop.permute.xlu0 %4415
    %4417 = vrot.lane.b32.xlu0 %v4265, 24
    %v4418 = vpop.permute.xlu0 %4417
    %4419 = vrot.lane.b32.xlu0 %v4278, 24
    %v4420 = vpop.permute.xlu0 %4419
    %4421 = vrot.lane.b32.xlu0 %v4291, 24
    %v4422 = vpop.permute.xlu0 %4421
    %4423 = vrot.lane.b32.xlu0 %v4304, 24
    %v4424 = vpop.permute.xlu0 %4423
    %4425 = vrot.lane.b32.xlu0 %v4317, 24
    %v4426 = vpop.permute.xlu0 %4425
    %4427 = vrot.lane.b32.xlu0 %v4330, 24
    %v4428 = vpop.permute.xlu0 %4427
    %4429 = vrot.lane.b32.xlu0 %v4343, 24
    %v4430 = vpop.permute.xlu0 %4429
    %4431 = vrot.lane.b32.xlu0 %v4356, 24
    %v4432 = vpop.permute.xlu0 %4431
    %4433 = vrot.lane.b32.xlu0 %v4369, 24
    %v4434 = vpop.permute.xlu0 %4433
    %4435 = vrot.lane.b32.xlu0 %v4382, 24
    %v4436 = vpop.permute.xlu0 %4435
    %4437 = vrot.lane.b32.xlu0 %v4395, 24
    %v4438 = vpop.permute.xlu0 %4437
    %4439 = vrot.lane.b32.xlu0 %v4408, 24
    %v4440 = vpop.permute.xlu0 %4439
    %vm4457 = vcmask 257216
    %4458 = vst.msk [vmem:[#allocation5] sm:$0xf] %vm4457, %v4410
    %4459 = vst.msk [vmem:[#allocation5 + $0x4] sm:$0xf] %vm4457, %v4412
    %4460 = vst.msk [vmem:[#allocation5 + $0x8] sm:$0xf] %vm4457, %v4414
    %4461 = vst.msk [vmem:[#allocation5 + $0xc] sm:$0xf] %vm4457, %v4416
    %4462 = vst.msk [vmem:[#allocation5 + $0x10] sm:$0xf] %vm4457, %v4418
    %4463 = vst.msk [vmem:[#allocation5 + $0x14] sm:$0xf] %vm4457, %v4420
    %4464 = vst.msk [vmem:[#allocation5 + $0x18] sm:$0xf] %vm4457, %v4422
    %4465 = vst.msk [vmem:[#allocation5 + $0x1c] sm:$0xf] %vm4457, %v4424
    %4466 = vst.msk [vmem:[#allocation5 + $0x20] sm:$0xf] %vm4457, %v4426
    %4467 = vst.msk [vmem:[#allocation5 + $0x24] sm:$0xf] %vm4457, %v4428
    %4468 = vst.msk [vmem:[#allocation5 + $0x28] sm:$0xf] %vm4457, %v4430
    %4469 = vst.msk [vmem:[#allocation5 + $0x2c] sm:$0xf] %vm4457, %v4432
    %4470 = vst.msk [vmem:[#allocation5 + $0x30] sm:$0xf] %vm4457, %v4434
    %4471 = vst.msk [vmem:[#allocation5 + $0x34] sm:$0xf] %vm4457, %v4436
    %4472 = vst.msk [vmem:[#allocation5 + $0x38] sm:$0xf] %vm4457, %v4438
    %4473 = vst.msk [vmem:[#allocation5 + $0x3c] sm:$0xf] %vm4457, %v4440
    %v4474 = vld [vmem:[%s3343 + $0x4] sm:$0xf]
    %v4475 = vld [vmem:[%s3343 + $0x10] sm:$0xf]
    %v4476 = vld [vmem:[%s3343 + $0x1c] sm:$0xf]
    %v4477 = vld [vmem:[%s3343 + $0x28] sm:$0xf]
    %v4478 = vld [vmem:[%s3343 + $0x34] sm:$0xf]
    %v4479 = vld [vmem:[%s3343 + $0x40] sm:$0xf]
    %v4480 = vld [vmem:[%s3343 + $0x4c] sm:$0xf]
    %v4481 = vld [vmem:[%s3343 + $0x58] sm:$0xf]
    %v4482 = vld [vmem:[%s3343 + $0x7c] sm:$0xf]
    %v4483 = vld [vmem:[%s3343 + $0x88] sm:$0xf]
    %v4484 = vld [vmem:[%s3343 + $0x94] sm:$0xf]
    %v4485 = vld [vmem:[%s3343 + $0xa0] sm:$0xf]
    %v4486 = vld [vmem:[%s3343 + $0xac] sm:$0xf]
    %v4487 = vld [vmem:[%s3343 + $0xb8] sm:$0xf]
    %v4488 = vld [vmem:[%s3343 + $0xc4] sm:$0xf]
    %v4489 = vld [vmem:[%s3343 + $0xd0] sm:$0xf]
    %4506 = vrot.lane.b32.xlu0 %v4474, 32
    %v4507 = vpop.permute.xlu0 %4506
    %4508 = vrot.lane.b32.xlu0 %v4475, 32
    %v4509 = vpop.permute.xlu0 %4508
    %4510 = vrot.lane.b32.xlu0 %v4476, 32
    %v4511 = vpop.permute.xlu0 %4510
    %4512 = vrot.lane.b32.xlu0 %v4477, 32
    %v4513 = vpop.permute.xlu0 %4512
    %4514 = vrot.lane.b32.xlu0 %v4478, 32
    %v4515 = vpop.permute.xlu0 %4514
    %4516 = vrot.lane.b32.xlu0 %v4479, 32
    %v4517 = vpop.permute.xlu0 %4516
    %4518 = vrot.lane.b32.xlu0 %v4480, 32
    %v4519 = vpop.permute.xlu0 %4518
    %4520 = vrot.lane.b32.xlu0 %v4481, 32
    %v4521 = vpop.permute.xlu0 %4520
    %4522 = vrot.lane.b32.xlu0 %v4482, 32
    %v4523 = vpop.permute.xlu0 %4522
    %4524 = vrot.lane.b32.xlu0 %v4483, 32
    %v4525 = vpop.permute.xlu0 %4524
    %4526 = vrot.lane.b32.xlu0 %v4484, 32
    %v4527 = vpop.permute.xlu0 %4526
    %4528 = vrot.lane.b32.xlu0 %v4485, 32
    %v4529 = vpop.permute.xlu0 %4528
    %4530 = vrot.lane.b32.xlu0 %v4486, 32
    %v4531 = vpop.permute.xlu0 %4530
    %4532 = vrot.lane.b32.xlu0 %v4487, 32
    %v4533 = vpop.permute.xlu0 %4532
    %4534 = vrot.lane.b32.xlu0 %v4488, 32
    %v4535 = vpop.permute.xlu0 %4534
    %4536 = vrot.lane.b32.xlu0 %v4489, 32
    %v4537 = vpop.permute.xlu0 %4536
    %vm4554 = vcmask 322816
    %4555 = vst.msk [vmem:[#allocation5] sm:$0xf] %vm4554, %v4507
    %4556 = vst.msk [vmem:[#allocation5 + $0x4] sm:$0xf] %vm4554, %v4509
    %4557 = vst.msk [vmem:[#allocation5 + $0x8] sm:$0xf] %vm4554, %v4511
    %4558 = vst.msk [vmem:[#allocation5 + $0xc] sm:$0xf] %vm4554, %v4513
    %4559 = vst.msk [vmem:[#allocation5 + $0x10] sm:$0xf] %vm4554, %v4515
    %4560 = vst.msk [vmem:[#allocation5 + $0x14] sm:$0xf] %vm4554, %v4517
    %4561 = vst.msk [vmem:[#allocation5 + $0x18] sm:$0xf] %vm4554, %v4519
    %4562 = vst.msk [vmem:[#allocation5 + $0x1c] sm:$0xf] %vm4554, %v4521
    %4563 = vst.msk [vmem:[#allocation5 + $0x20] sm:$0xf] %vm4554, %v4523
    %4564 = vst.msk [vmem:[#allocation5 + $0x24] sm:$0xf] %vm4554, %v4525
    %4565 = vst.msk [vmem:[#allocation5 + $0x28] sm:$0xf] %vm4554, %v4527
    %4566 = vst.msk [vmem:[#allocation5 + $0x2c] sm:$0xf] %vm4554, %v4529
    %4567 = vst.msk [vmem:[#allocation5 + $0x30] sm:$0xf] %vm4554, %v4531
    %4568 = vst.msk [vmem:[#allocation5 + $0x34] sm:$0xf] %vm4554, %v4533
    %4569 = vst.msk [vmem:[#allocation5 + $0x38] sm:$0xf] %vm4554, %v4535
    %4570 = vst.msk [vmem:[#allocation5 + $0x3c] sm:$0xf] %vm4554, %v4537
    %v4571 = vld [vmem:[%s3343 + $0x4] sm:$0xf]
    %v4572 = vld [vmem:[%s3343 + $0x8] sm:$0x1]
    %v4573 = vld [vmem:[%s3343 + $0x10] sm:$0xf]
    %v4574 = vld [vmem:[%s3343 + $0x14] sm:$0x1]
    %v4575 = vld [vmem:[%s3343 + $0x1c] sm:$0xf]
    %v4576 = vld [vmem:[%s3343 + $0x20] sm:$0x1]
    %v4577 = vld [vmem:[%s3343 + $0x28] sm:$0xf]
    %v4578 = vld [vmem:[%s3343 + $0x2c] sm:$0x1]
    %v4579 = vld [vmem:[%s3343 + $0x34] sm:$0xf]
    %v4580 = vld [vmem:[%s3343 + $0x38] sm:$0x1]
    %v4581 = vld [vmem:[%s3343 + $0x40] sm:$0xf]
    %v4582 = vld [vmem:[%s3343 + $0x44] sm:$0x1]
    %v4583 = vld [vmem:[%s3343 + $0x4c] sm:$0xf]
    %v4584 = vld [vmem:[%s3343 + $0x50] sm:$0x1]
    %v4585 = vld [vmem:[%s3343 + $0x58] sm:$0xf]
    %v4586 = vld [vmem:[%s3343 + $0x5c] sm:$0x1]
    %v4587 = vld [vmem:[%s3343 + $0x7c] sm:$0xf]
    %v4588 = vld [vmem:[%s3343 + $0x80] sm:$0x1]
    %v4589 = vld [vmem:[%s3343 + $0x88] sm:$0xf]
    %v4590 = vld [vmem:[%s3343 + $0x8c] sm:$0x1]
    %v4591 = vld [vmem:[%s3343 + $0x94] sm:$0xf]
    %v4592 = vld [vmem:[%s3343 + $0x98] sm:$0x1]
    %v4593 = vld [vmem:[%s3343 + $0xa0] sm:$0xf]
    %v4594 = vld [vmem:[%s3343 + $0xa4] sm:$0x1]
    %v4595 = vld [vmem:[%s3343 + $0xac] sm:$0xf]
    %v4596 = vld [vmem:[%s3343 + $0xb0] sm:$0x1]
    %v4597 = vld [vmem:[%s3343 + $0xb8] sm:$0xf]
    %v4598 = vld [vmem:[%s3343 + $0xbc] sm:$0x1]
    %v4599 = vld [vmem:[%s3343 + $0xc4] sm:$0xf]
    %v4600 = vld [vmem:[%s3343 + $0xc8] sm:$0x1]
    %v4601 = vld [vmem:[%s3343 + $0xd0] sm:$0xf]
    %v4602 = vld [vmem:[%s3343 + $0xd4] sm:$0x1]
    %v4604 = vshrl.u32 %v4571, 16
    %v4606 = vrot.slane %v4604, 4
    %v4607 = vshll.u32 %v4571, 16
    %v4609 = vrot.slane %v4607, 5
    %v4610 = vor.u32 %v4606, %v4609
    %v4611 = vrot.slane %v4610, 4
    %v4613 = vshll.u32 %v4572, 16
    %v4615 = vrot.slane %v4613, 5
    %v4616 = vsel %vm3879, %v4611, %v4615
    %v4618 = vshrl.u32 %v4573, 16
    %v4620 = vrot.slane %v4618, 4
    %v4621 = vshll.u32 %v4573, 16
    %v4623 = vrot.slane %v4621, 5
    %v4624 = vor.u32 %v4620, %v4623
    %v4625 = vrot.slane %v4624, 4
    %v4627 = vshll.u32 %v4574, 16
    %v4629 = vrot.slane %v4627, 5
    %v4630 = vsel %vm3879, %v4625, %v4629
    %v4632 = vshrl.u32 %v4575, 16
    %v4634 = vrot.slane %v4632, 4
    %v4635 = vshll.u32 %v4575, 16
    %v4637 = vrot.slane %v4635, 5
    %v4638 = vor.u32 %v4634, %v4637
    %v4639 = vrot.slane %v4638, 4
    %v4641 = vshll.u32 %v4576, 16
    %v4643 = vrot.slane %v4641, 5
    %v4644 = vsel %vm3879, %v4639, %v4643
    %v4646 = vshrl.u32 %v4577, 16
    %v4648 = vrot.slane %v4646, 4
    %v4649 = vshll.u32 %v4577, 16
    %v4651 = vrot.slane %v4649, 5
    %v4652 = vor.u32 %v4648, %v4651
    %v4653 = vrot.slane %v4652, 4
    %v4655 = vshll.u32 %v4578, 16
    %v4657 = vrot.slane %v4655, 5
    %v4658 = vsel %vm3879, %v4653, %v4657
    %v4660 = vshrl.u32 %v4579, 16
    %v4662 = vrot.slane %v4660, 4
    %v4663 = vshll.u32 %v4579, 16
    %v4665 = vrot.slane %v4663, 5
    %v4666 = vor.u32 %v4662, %v4665
    %v4667 = vrot.slane %v4666, 4
    %v4669 = vshll.u32 %v4580, 16
    %v4671 = vrot.slane %v4669, 5
    %v4672 = vsel %vm3879, %v4667, %v4671
    %v4674 = vshrl.u32 %v4581, 16
    %v4676 = vrot.slane %v4674, 4
    %v4677 = vshll.u32 %v4581, 16
    %v4679 = vrot.slane %v4677, 5
    %v4680 = vor.u32 %v4676, %v4679
    %v4681 = vrot.slane %v4680, 4
    %v4683 = vshll.u32 %v4582, 16
    %v4685 = vrot.slane %v4683, 5
    %v4686 = vsel %vm3879, %v4681, %v4685
    %v4688 = vshrl.u32 %v4583, 16
    %v4690 = vrot.slane %v4688, 4
    %v4691 = vshll.u32 %v4583, 16
    %v4693 = vrot.slane %v4691, 5
    %v4694 = vor.u32 %v4690, %v4693
    %v4695 = vrot.slane %v4694, 4
    %v4697 = vshll.u32 %v4584, 16
    %v4699 = vrot.slane %v4697, 5
    %v4700 = vsel %vm3879, %v4695, %v4699
    %v4702 = vshrl.u32 %v4585, 16
    %v4704 = vrot.slane %v4702, 4
    %v4705 = vshll.u32 %v4585, 16
    %v4707 = vrot.slane %v4705, 5
    %v4708 = vor.u32 %v4704, %v4707
    %v4709 = vrot.slane %v4708, 4
    %v4711 = vshll.u32 %v4586, 16
    %v4713 = vrot.slane %v4711, 5
    %v4714 = vsel %vm3879, %v4709, %v4713
    %v4716 = vshrl.u32 %v4587, 16
    %v4718 = vrot.slane %v4716, 4
    %v4719 = vshll.u32 %v4587, 16
    %v4721 = vrot.slane %v4719, 5
    %v4722 = vor.u32 %v4718, %v4721
    %v4723 = vrot.slane %v4722, 4
    %v4725 = vshll.u32 %v4588, 16
    %v4727 = vrot.slane %v4725, 5
    %v4728 = vsel %vm3879, %v4723, %v4727
    %v4730 = vshrl.u32 %v4589, 16
    %v4732 = vrot.slane %v4730, 4
    %v4733 = vshll.u32 %v4589, 16
    %v4735 = vrot.slane %v4733, 5
    %v4736 = vor.u32 %v4732, %v4735
    %v4737 = vrot.slane %v4736, 4
    %v4739 = vshll.u32 %v4590, 16
    %v4741 = vrot.slane %v4739, 5
    %v4742 = vsel %vm3879, %v4737, %v4741
    %v4744 = vshrl.u32 %v4591, 16
    %v4746 = vrot.slane %v4744, 4
    %v4747 = vshll.u32 %v4591, 16
    %v4749 = vrot.slane %v4747, 5
    %v4750 = vor.u32 %v4746, %v4749
    %v4751 = vrot.slane %v4750, 4
    %v4753 = vshll.u32 %v4592, 16
    %v4755 = vrot.slane %v4753, 5
    %v4756 = vsel %vm3879, %v4751, %v4755
    %v4758 = vshrl.u32 %v4593, 16
    %v4760 = vrot.slane %v4758, 4
    %v4761 = vshll.u32 %v4593, 16
    %v4763 = vrot.slane %v4761, 5
    %v4764 = vor.u32 %v4760, %v4763
    %v4765 = vrot.slane %v4764, 4
    %v4767 = vshll.u32 %v4594, 16
    %v4769 = vrot.slane %v4767, 5
    %v4770 = vsel %vm3879, %v4765, %v4769
    %v4772 = vshrl.u32 %v4595, 16
    %v4774 = vrot.slane %v4772, 4
    %v4775 = vshll.u32 %v4595, 16
    %v4777 = vrot.slane %v4775, 5
    %v4778 = vor.u32 %v4774, %v4777
    %v4779 = vrot.slane %v4778, 4
    %v4781 = vshll.u32 %v4596, 16
    %v4783 = vrot.slane %v4781, 5
    %v4784 = vsel %vm3879, %v4779, %v4783
    %v4786 = vshrl.u32 %v4597, 16
    %v4788 = vrot.slane %v4786, 4
    %v4789 = vshll.u32 %v4597, 16
    %v4791 = vrot.slane %v4789, 5
    %v4792 = vor.u32 %v4788, %v4791
    %v4793 = vrot.slane %v4792, 4
    %v4795 = vshll.u32 %v4598, 16
    %v4797 = vrot.slane %v4795, 5
    %v4798 = vsel %vm3879, %v4793, %v4797
    %v4800 = vshrl.u32 %v4599, 16
    %v4802 = vrot.slane %v4800, 4
    %v4803 = vshll.u32 %v4599, 16
    %v4805 = vrot.slane %v4803, 5
    %v4806 = vor.u32 %v4802, %v4805
    %v4807 = vrot.slane %v4806, 4
    %v4809 = vshll.u32 %v4600, 16
    %v4811 = vrot.slane %v4809, 5
    %v4812 = vsel %vm3879, %v4807, %v4811
    %v4814 = vshrl.u32 %v4601, 16
    %v4816 = vrot.slane %v4814, 4
    %v4817 = vshll.u32 %v4601, 16
    %v4819 = vrot.slane %v4817, 5
    %v4820 = vor.u32 %v4816, %v4819
    %v4821 = vrot.slane %v4820, 4
    %v4823 = vshll.u32 %v4602, 16
    %v4825 = vrot.slane %v4823, 5
    %v4826 = vsel %vm3879, %v4821, %v4825
    %4827 = vrot.lane.b32.xlu0 %v4616, 40
    %v4828 = vpop.permute.xlu0 %4827
    %4829 = vrot.lane.b32.xlu0 %v4630, 40
    %v4830 = vpop.permute.xlu0 %4829
    %4831 = vrot.lane.b32.xlu0 %v4644, 40
    %v4832 = vpop.permute.xlu0 %4831
    %4833 = vrot.lane.b32.xlu0 %v4658, 40
    %v4834 = vpop.permute.xlu0 %4833
    %4835 = vrot.lane.b32.xlu0 %v4672, 40
    %v4836 = vpop.permute.xlu0 %4835
    %4837 = vrot.lane.b32.xlu0 %v4686, 40
    %v4838 = vpop.permute.xlu0 %4837
    %4839 = vrot.lane.b32.xlu0 %v4700, 40
    %v4840 = vpop.permute.xlu0 %4839
    %4841 = vrot.lane.b32.xlu0 %v4714, 40
    %v4842 = vpop.permute.xlu0 %4841
    %4843 = vrot.lane.b32.xlu0 %v4728, 40
    %v4844 = vpop.permute.xlu0 %4843
    %4845 = vrot.lane.b32.xlu0 %v4742, 40
    %v4846 = vpop.permute.xlu0 %4845
    %4847 = vrot.lane.b32.xlu0 %v4756, 40
    %v4848 = vpop.permute.xlu0 %4847
    %4849 = vrot.lane.b32.xlu0 %v4770, 40
    %v4850 = vpop.permute.xlu0 %4849
    %4851 = vrot.lane.b32.xlu0 %v4784, 40
    %v4852 = vpop.permute.xlu0 %4851
    %4853 = vrot.lane.b32.xlu0 %v4798, 40
    %v4854 = vpop.permute.xlu0 %4853
    %4855 = vrot.lane.b32.xlu0 %v4812, 40
    %v4856 = vpop.permute.xlu0 %4855
    %4857 = vrot.lane.b32.xlu0 %v4826, 40
    %v4858 = vpop.permute.xlu0 %4857
    %vm4875 = vcmask 388416
    %4876 = vst.msk [vmem:[#allocation5] sm:$0xf] %vm4875, %v4828
    %4877 = vst.msk [vmem:[#allocation5 + $0x4] sm:$0xf] %vm4875, %v4830
    %4878 = vst.msk [vmem:[#allocation5 + $0x8] sm:$0xf] %vm4875, %v4832
    %4879 = vst.msk [vmem:[#allocation5 + $0xc] sm:$0xf] %vm4875, %v4834
    %4880 = vst.msk [vmem:[#allocation5 + $0x10] sm:$0xf] %vm4875, %v4836
    %4881 = vst.msk [vmem:[#allocation5 + $0x14] sm:$0xf] %vm4875, %v4838
    %4882 = vst.msk [vmem:[#allocation5 + $0x18] sm:$0xf] %vm4875, %v4840
    %4883 = vst.msk [vmem:[#allocation5 + $0x1c] sm:$0xf] %vm4875, %v4842
    %4884 = vst.msk [vmem:[#allocation5 + $0x20] sm:$0xf] %vm4875, %v4844
    %4885 = vst.msk [vmem:[#allocation5 + $0x24] sm:$0xf] %vm4875, %v4846
    %4886 = vst.msk [vmem:[#allocation5 + $0x28] sm:$0xf] %vm4875, %v4848
    %4887 = vst.msk [vmem:[#allocation5 + $0x2c] sm:$0xf] %vm4875, %v4850
    %4888 = vst.msk [vmem:[#allocation5 + $0x30] sm:$0xf] %vm4875, %v4852
    %4889 = vst.msk [vmem:[#allocation5 + $0x34] sm:$0xf] %vm4875, %v4854
    %4890 = vst.msk [vmem:[#allocation5 + $0x38] sm:$0xf] %vm4875, %v4856
    %4891 = vst.msk [vmem:[#allocation5 + $0x3c] sm:$0xf] %vm4875, %v4858
    %s4892 = scalar_lea.vmem [#allocation4], 24
    %v4893 = vld [vmem:[%s4892] sm:$0x8]
    %v4894 = vld [vmem:[%s4892 + $0x4] sm:$0xf]
    %v4895 = vld [vmem:[%s4892 + $0xc] sm:$0x8]
    %v4896 = vld [vmem:[%s4892 + $0x10] sm:$0xf]
    %v4897 = vld [vmem:[%s4892 + $0x18] sm:$0x8]
    %v4898 = vld [vmem:[%s4892 + $0x1c] sm:$0xf]
    %v4899 = vld [vmem:[%s4892 + $0x24] sm:$0x8]
    %v4900 = vld [vmem:[%s4892 + $0x28] sm:$0xf]
    %v4901 = vld [vmem:[%s4892 + $0x30] sm:$0x8]
    %v4902 = vld [vmem:[%s4892 + $0x34] sm:$0xf]
    %v4903 = vld [vmem:[%s4892 + $0x3c] sm:$0x8]
    %v4904 = vld [vmem:[%s4892 + $0x40] sm:$0xf]
    %v4905 = vld [vmem:[%s4892 + $0x48] sm:$0x8]
    %v4906 = vld [vmem:[%s4892 + $0x4c] sm:$0xf]
    %v4907 = vld [vmem:[%s4892 + $0x54] sm:$0x8]
    %v4908 = vld [vmem:[%s4892 + $0x58] sm:$0xf]
    %v4909 = vld [vmem:[%s4892 + $0x78] sm:$0x8]
    %v4910 = vld [vmem:[%s4892 + $0x7c] sm:$0xf]
    %v4911 = vld [vmem:[%s4892 + $0x84] sm:$0x8]
    %v4912 = vld [vmem:[%s4892 + $0x88] sm:$0xf]
    %v4913 = vld [vmem:[%s4892 + $0x90] sm:$0x8]
    %v4914 = vld [vmem:[%s4892 + $0x94] sm:$0xf]
    %v4915 = vld [vmem:[%s4892 + $0x9c] sm:$0x8]
    %v4916 = vld [vmem:[%s4892 + $0xa0] sm:$0xf]
    %v4917 = vld [vmem:[%s4892 + $0xa8] sm:$0x8]
    %v4918 = vld [vmem:[%s4892 + $0xac] sm:$0xf]
    %v4919 = vld [vmem:[%s4892 + $0xb4] sm:$0x8]
    %v4920 = vld [vmem:[%s4892 + $0xb8] sm:$0xf]
    %v4921 = vld [vmem:[%s4892 + $0xc0] sm:$0x8]
    %v4922 = vld [vmem:[%s4892 + $0xc4] sm:$0xf]
    %v4923 = vld [vmem:[%s4892 + $0xcc] sm:$0x8]
    %v4924 = vld [vmem:[%s4892 + $0xd0] sm:$0xf]
    %v4926 = vshrl.u32 %v4893, 16
    %v4928 = vrot.slane %v4926, 7
    %v4929 = vrot.slane %v4928, 4
    %v4931 = vshrl.u32 %v4894, 16
    %v4933 = vrot.slane %v4931, 7
    %v4934 = vshll.u32 %v4894, 16
    %v4936 = vor.u32 %v4933, %v4934
    %v4937 = vsel %vm1496, %v4929, %v4936
    %v4939 = vshrl.u32 %v4895, 16
    %v4941 = vrot.slane %v4939, 7
    %v4942 = vrot.slane %v4941, 4
    %v4944 = vshrl.u32 %v4896, 16
    %v4946 = vrot.slane %v4944, 7
    %v4947 = vshll.u32 %v4896, 16
    %v4949 = vor.u32 %v4946, %v4947
    %v4950 = vsel %vm1496, %v4942, %v4949
    %v4952 = vshrl.u32 %v4897, 16
    %v4954 = vrot.slane %v4952, 7
    %v4955 = vrot.slane %v4954, 4
    %v4957 = vshrl.u32 %v4898, 16
    %v4959 = vrot.slane %v4957, 7
    %v4960 = vshll.u32 %v4898, 16
    %v4962 = vor.u32 %v4959, %v4960
    %v4963 = vsel %vm1496, %v4955, %v4962
    %v4965 = vshrl.u32 %v4899, 16
    %v4967 = vrot.slane %v4965, 7
    %v4968 = vrot.slane %v4967, 4
    %v4970 = vshrl.u32 %v4900, 16
    %v4972 = vrot.slane %v4970, 7
    %v4973 = vshll.u32 %v4900, 16
    %v4975 = vor.u32 %v4972, %v4973
    %v4976 = vsel %vm1496, %v4968, %v4975
    %v4978 = vshrl.u32 %v4901, 16
    %v4980 = vrot.slane %v4978, 7
    %v4981 = vrot.slane %v4980, 4
    %v4983 = vshrl.u32 %v4902, 16
    %v4985 = vrot.slane %v4983, 7
    %v4986 = vshll.u32 %v4902, 16
    %v4988 = vor.u32 %v4985, %v4986
    %v4989 = vsel %vm1496, %v4981, %v4988
    %v4991 = vshrl.u32 %v4903, 16
    %v4993 = vrot.slane %v4991, 7
    %v4994 = vrot.slane %v4993, 4
    %v4996 = vshrl.u32 %v4904, 16
    %v4998 = vrot.slane %v4996, 7
    %v4999 = vshll.u32 %v4904, 16
    %v5001 = vor.u32 %v4998, %v4999
    %v5002 = vsel %vm1496, %v4994, %v5001
    %v5004 = vshrl.u32 %v4905, 16
    %v5006 = vrot.slane %v5004, 7
    %v5007 = vrot.slane %v5006, 4
    %v5009 = vshrl.u32 %v4906, 16
    %v5011 = vrot.slane %v5009, 7
    %v5012 = vshll.u32 %v4906, 16
    %v5014 = vor.u32 %v5011, %v5012
    %v5015 = vsel %vm1496, %v5007, %v5014
    %v5017 = vshrl.u32 %v4907, 16
    %v5019 = vrot.slane %v5017, 7
    %v5020 = vrot.slane %v5019, 4
    %v5022 = vshrl.u32 %v4908, 16
    %v5024 = vrot.slane %v5022, 7
    %v5025 = vshll.u32 %v4908, 16
    %v5027 = vor.u32 %v5024, %v5025
    %v5028 = vsel %vm1496, %v5020, %v5027
    %v5030 = vshrl.u32 %v4909, 16
    %v5032 = vrot.slane %v5030, 7
    %v5033 = vrot.slane %v5032, 4
    %v5035 = vshrl.u32 %v4910, 16
    %v5037 = vrot.slane %v5035, 7
    %v5038 = vshll.u32 %v4910, 16
    %v5040 = vor.u32 %v5037, %v5038
    %v5041 = vsel %vm1496, %v5033, %v5040
    %v5043 = vshrl.u32 %v4911, 16
    %v5045 = vrot.slane %v5043, 7
    %v5046 = vrot.slane %v5045, 4
    %v5048 = vshrl.u32 %v4912, 16
    %v5050 = vrot.slane %v5048, 7
    %v5051 = vshll.u32 %v4912, 16
    %v5053 = vor.u32 %v5050, %v5051
    %v5054 = vsel %vm1496, %v5046, %v5053
    %v5056 = vshrl.u32 %v4913, 16
    %v5058 = vrot.slane %v5056, 7
    %v5059 = vrot.slane %v5058, 4
    %v5061 = vshrl.u32 %v4914, 16
    %v5063 = vrot.slane %v5061, 7
    %v5064 = vshll.u32 %v4914, 16
    %v5066 = vor.u32 %v5063, %v5064
    %v5067 = vsel %vm1496, %v5059, %v5066
    %v5069 = vshrl.u32 %v4915, 16
    %v5071 = vrot.slane %v5069, 7
    %v5072 = vrot.slane %v5071, 4
    %v5074 = vshrl.u32 %v4916, 16
    %v5076 = vrot.slane %v5074, 7
    %v5077 = vshll.u32 %v4916, 16
    %v5079 = vor.u32 %v5076, %v5077
    %v5080 = vsel %vm1496, %v5072, %v5079
    %v5082 = vshrl.u32 %v4917, 16
    %v5084 = vrot.slane %v5082, 7
    %v5085 = vrot.slane %v5084, 4
    %v5087 = vshrl.u32 %v4918, 16
    %v5089 = vrot.slane %v5087, 7
    %v5090 = vshll.u32 %v4918, 16
    %v5092 = vor.u32 %v5089, %v5090
    %v5093 = vsel %vm1496, %v5085, %v5092
    %v5095 = vshrl.u32 %v4919, 16
    %v5097 = vrot.slane %v5095, 7
    %v5098 = vrot.slane %v5097, 4
    %v5100 = vshrl.u32 %v4920, 16
    %v5102 = vrot.slane %v5100, 7
    %v5103 = vshll.u32 %v4920, 16
    %v5105 = vor.u32 %v5102, %v5103
    %v5106 = vsel %vm1496, %v5098, %v5105
    %v5108 = vshrl.u32 %v4921, 16
    %v5110 = vrot.slane %v5108, 7
    %v5111 = vrot.slane %v5110, 4
    %v5113 = vshrl.u32 %v4922, 16
    %v5115 = vrot.slane %v5113, 7
    %v5116 = vshll.u32 %v4922, 16
    %v5118 = vor.u32 %v5115, %v5116
    %v5119 = vsel %vm1496, %v5111, %v5118
    %v5121 = vshrl.u32 %v4923, 16
    %v5123 = vrot.slane %v5121, 7
    %v5124 = vrot.slane %v5123, 4
    %v5126 = vshrl.u32 %v4924, 16
    %v5128 = vrot.slane %v5126, 7
    %v5129 = vshll.u32 %v4924, 16
    %v5131 = vor.u32 %v5128, %v5129
    %v5132 = vsel %vm1496, %v5124, %v5131
    %5133 = vrot.lane.b32.xlu0 %v4937, 48
    %v5134 = vpop.permute.xlu0 %5133
    %5135 = vrot.lane.b32.xlu0 %v4950, 48
    %v5136 = vpop.permute.xlu0 %5135
    %5137 = vrot.lane.b32.xlu0 %v4963, 48
    %v5138 = vpop.permute.xlu0 %5137
    %5139 = vrot.lane.b32.xlu0 %v4976, 48
    %v5140 = vpop.permute.xlu0 %5139
    %5141 = vrot.lane.b32.xlu0 %v4989, 48
    %v5142 = vpop.permute.xlu0 %5141
    %5143 = vrot.lane.b32.xlu0 %v5002, 48
    %v5144 = vpop.permute.xlu0 %5143
    %5145 = vrot.lane.b32.xlu0 %v5015, 48
    %v5146 = vpop.permute.xlu0 %5145
    %5147 = vrot.lane.b32.xlu0 %v5028, 48
    %v5148 = vpop.permute.xlu0 %5147
    %5149 = vrot.lane.b32.xlu0 %v5041, 48
    %v5150 = vpop.permute.xlu0 %5149
    %5151 = vrot.lane.b32.xlu0 %v5054, 48
    %v5152 = vpop.permute.xlu0 %5151
    %5153 = vrot.lane.b32.xlu0 %v5067, 48
    %v5154 = vpop.permute.xlu0 %5153
    %5155 = vrot.lane.b32.xlu0 %v5080, 48
    %v5156 = vpop.permute.xlu0 %5155
    %5157 = vrot.lane.b32.xlu0 %v5093, 48
    %v5158 = vpop.permute.xlu0 %5157
    %5159 = vrot.lane.b32.xlu0 %v5106, 48
    %v5160 = vpop.permute.xlu0 %5159
    %5161 = vrot.lane.b32.xlu0 %v5119, 48
    %v5162 = vpop.permute.xlu0 %5161
    %5163 = vrot.lane.b32.xlu0 %v5132, 48
    %v5164 = vpop.permute.xlu0 %5163
    %vm5181 = vcmask 454016
    %5182 = vst.msk [vmem:[#allocation5] sm:$0xf] %vm5181, %v5134
    %5183 = vst.msk [vmem:[#allocation5 + $0x4] sm:$0xf] %vm5181, %v5136
    %5184 = vst.msk [vmem:[#allocation5 + $0x8] sm:$0xf] %vm5181, %v5138
    %5185 = vst.msk [vmem:[#allocation5 + $0xc] sm:$0xf] %vm5181, %v5140
    %5186 = vst.msk [vmem:[#allocation5 + $0x10] sm:$0xf] %vm5181, %v5142
    %5187 = vst.msk [vmem:[#allocation5 + $0x14] sm:$0xf] %vm5181, %v5144
    %5188 = vst.msk [vmem:[#allocation5 + $0x18] sm:$0xf] %vm5181, %v5146
    %5189 = vst.msk [vmem:[#allocation5 + $0x1c] sm:$0xf] %vm5181, %v5148
    %5190 = vst.msk [vmem:[#allocation5 + $0x20] sm:$0xf] %vm5181, %v5150
    %5191 = vst.msk [vmem:[#allocation5 + $0x24] sm:$0xf] %vm5181, %v5152
    %5192 = vst.msk [vmem:[#allocation5 + $0x28] sm:$0xf] %vm5181, %v5154
    %5193 = vst.msk [vmem:[#allocation5 + $0x2c] sm:$0xf] %vm5181, %v5156
    %5194 = vst.msk [vmem:[#allocation5 + $0x30] sm:$0xf] %vm5181, %v5158
    %5195 = vst.msk [vmem:[#allocation5 + $0x34] sm:$0xf] %vm5181, %v5160
    %5196 = vst.msk [vmem:[#allocation5 + $0x38] sm:$0xf] %vm5181, %v5162
    %5197 = vst.msk [vmem:[#allocation5 + $0x3c] sm:$0xf] %vm5181, %v5164
    %v5198 = vld [vmem:[%s4892 + $0x4] sm:$0xf]
    %v5199 = vld [vmem:[%s4892 + $0x10] sm:$0xf]
    %v5200 = vld [vmem:[%s4892 + $0x1c] sm:$0xf]
    %v5201 = vld [vmem:[%s4892 + $0x28] sm:$0xf]
    %v5202 = vld [vmem:[%s4892 + $0x34] sm:$0xf]
    %v5203 = vld [vmem:[%s4892 + $0x40] sm:$0xf]
    %v5204 = vld [vmem:[%s4892 + $0x4c] sm:$0xf]
    %v5205 = vld [vmem:[%s4892 + $0x58] sm:$0xf]
    %v5206 = vld [vmem:[%s4892 + $0x7c] sm:$0xf]
    %v5207 = vld [vmem:[%s4892 + $0x88] sm:$0xf]
    %v5208 = vld [vmem:[%s4892 + $0x94] sm:$0xf]
    %v5209 = vld [vmem:[%s4892 + $0xa0] sm:$0xf]
    %v5210 = vld [vmem:[%s4892 + $0xac] sm:$0xf]
    %v5211 = vld [vmem:[%s4892 + $0xb8] sm:$0xf]
    %v5212 = vld [vmem:[%s4892 + $0xc4] sm:$0xf]
    %v5213 = vld [vmem:[%s4892 + $0xd0] sm:$0xf]
    %5230 = vrot.lane.b32.xlu0 %v5198, 56
    %v5231 = vpop.permute.xlu0 %5230
    %5232 = vrot.lane.b32.xlu0 %v5199, 56
    %v5233 = vpop.permute.xlu0 %5232
    %5234 = vrot.lane.b32.xlu0 %v5200, 56
    %v5235 = vpop.permute.xlu0 %5234
    %5236 = vrot.lane.b32.xlu0 %v5201, 56
    %v5237 = vpop.permute.xlu0 %5236
    %5238 = vrot.lane.b32.xlu0 %v5202, 56
    %v5239 = vpop.permute.xlu0 %5238
    %5240 = vrot.lane.b32.xlu0 %v5203, 56
    %v5241 = vpop.permute.xlu0 %5240
    %5242 = vrot.lane.b32.xlu0 %v5204, 56
    %v5243 = vpop.permute.xlu0 %5242
    %5244 = vrot.lane.b32.xlu0 %v5205, 56
    %v5245 = vpop.permute.xlu0 %5244
    %5246 = vrot.lane.b32.xlu0 %v5206, 56
    %v5247 = vpop.permute.xlu0 %5246
    %5248 = vrot.lane.b32.xlu0 %v5207, 56
    %v5249 = vpop.permute.xlu0 %5248
    %5250 = vrot.lane.b32.xlu0 %v5208, 56
    %v5251 = vpop.permute.xlu0 %5250
    %5252 = vrot.lane.b32.xlu0 %v5209, 56
    %v5253 = vpop.permute.xlu0 %5252
    %5254 = vrot.lane.b32.xlu0 %v5210, 56
    %v5255 = vpop.permute.xlu0 %5254
    %5256 = vrot.lane.b32.xlu0 %v5211, 56
    %v5257 = vpop.permute.xlu0 %5256
    %5258 = vrot.lane.b32.xlu0 %v5212, 56
    %v5259 = vpop.permute.xlu0 %5258
    %5260 = vrot.lane.b32.xlu0 %v5213, 56
    %v5261 = vpop.permute.xlu0 %5260
    %vm5278 = vcmask 519616
    %5279 = vst.msk [vmem:[#allocation5] sm:$0xf] %vm5278, %v5231
    %5280 = vst.msk [vmem:[#allocation5 + $0x4] sm:$0xf] %vm5278, %v5233
    %5281 = vst.msk [vmem:[#allocation5 + $0x8] sm:$0xf] %vm5278, %v5235
    %5282 = vst.msk [vmem:[#allocation5 + $0xc] sm:$0xf] %vm5278, %v5237
    %5283 = vst.msk [vmem:[#allocation5 + $0x10] sm:$0xf] %vm5278, %v5239
    %5284 = vst.msk [vmem:[#allocation5 + $0x14] sm:$0xf] %vm5278, %v5241
    %5285 = vst.msk [vmem:[#allocation5 + $0x18] sm:$0xf] %vm5278, %v5243
    %5286 = vst.msk [vmem:[#allocation5 + $0x1c] sm:$0xf] %vm5278, %v5245
    %5287 = vst.msk [vmem:[#allocation5 + $0x20] sm:$0xf] %vm5278, %v5247
    %5288 = vst.msk [vmem:[#allocation5 + $0x24] sm:$0xf] %vm5278, %v5249
    %5289 = vst.msk [vmem:[#allocation5 + $0x28] sm:$0xf] %vm5278, %v5251
    %5290 = vst.msk [vmem:[#allocation5 + $0x2c] sm:$0xf] %vm5278, %v5253
    %5291 = vst.msk [vmem:[#allocation5 + $0x30] sm:$0xf] %vm5278, %v5255
    %5292 = vst.msk [vmem:[#allocation5 + $0x34] sm:$0xf] %vm5278, %v5257
    %5293 = vst.msk [vmem:[#allocation5 + $0x38] sm:$0xf] %vm5278, %v5259
    %5294 = vst.msk [vmem:[#allocation5 + $0x3c] sm:$0xf] %vm5278, %v5261
    %v5295 = vld [vmem:[%s4892 + $0x4] sm:$0xf]
    %v5296 = vld [vmem:[%s4892 + $0x8] sm:$0x1]
    %v5297 = vld [vmem:[%s4892 + $0x10] sm:$0xf]
    %v5298 = vld [vmem:[%s4892 + $0x14] sm:$0x1]
    %v5299 = vld [vmem:[%s4892 + $0x1c] sm:$0xf]
    %v5300 = vld [vmem:[%s4892 + $0x20] sm:$0x1]
    %v5301 = vld [vmem:[%s4892 + $0x28] sm:$0xf]
    %v5302 = vld [vmem:[%s4892 + $0x2c] sm:$0x1]
    %v5303 = vld [vmem:[%s4892 + $0x34] sm:$0xf]
    %v5304 = vld [vmem:[%s4892 + $0x38] sm:$0x1]
    %v5305 = vld [vmem:[%s4892 + $0x40] sm:$0xf]
    %v5306 = vld [vmem:[%s4892 + $0x44] sm:$0x1]
    %v5307 = vld [vmem:[%s4892 + $0x4c] sm:$0xf]
    %v5308 = vld [vmem:[%s4892 + $0x50] sm:$0x1]
    %v5309 = vld [vmem:[%s4892 + $0x58] sm:$0xf]
    %v5310 = vld [vmem:[%s4892 + $0x5c] sm:$0x1]
    %v5311 = vld [vmem:[%s4892 + $0x7c] sm:$0xf]
    %v5312 = vld [vmem:[%s4892 + $0x80] sm:$0x1]
    %v5313 = vld [vmem:[%s4892 + $0x88] sm:$0xf]
    %v5314 = vld [vmem:[%s4892 + $0x8c] sm:$0x1]
    %v5315 = vld [vmem:[%s4892 + $0x94] sm:$0xf]
    %v5316 = vld [vmem:[%s4892 + $0x98] sm:$0x1]
    %v5317 = vld [vmem:[%s4892 + $0xa0] sm:$0xf]
    %v5318 = vld [vmem:[%s4892 + $0xa4] sm:$0x1]
    %v5319 = vld [vmem:[%s4892 + $0xac] sm:$0xf]
    %v5320 = vld [vmem:[%s4892 + $0xb0] sm:$0x1]
    %v5321 = vld [vmem:[%s4892 + $0xb8] sm:$0xf]
    %v5322 = vld [vmem:[%s4892 + $0xbc] sm:$0x1]
    %v5323 = vld [vmem:[%s4892 + $0xc4] sm:$0xf]
    %v5324 = vld [vmem:[%s4892 + $0xc8] sm:$0x1]
    %v5325 = vld [vmem:[%s4892 + $0xd0] sm:$0xf]
    %v5326 = vld [vmem:[%s4892 + $0xd4] sm:$0x1]
    %v5328 = vshrl.u32 %v5295, 16
    %v5330 = vrot.slane %v5328, 4
    %v5331 = vshll.u32 %v5295, 16
    %v5333 = vrot.slane %v5331, 5
    %v5334 = vor.u32 %v5330, %v5333
    %v5335 = vrot.slane %v5334, 4
    %v5337 = vshll.u32 %v5296, 16
    %v5339 = vrot.slane %v5337, 5
    %v5340 = vsel %vm3879, %v5335, %v5339
    %v5342 = vshrl.u32 %v5297, 16
    %v5344 = vrot.slane %v5342, 4
    %v5345 = vshll.u32 %v5297, 16
    %v5347 = vrot.slane %v5345, 5
    %v5348 = vor.u32 %v5344, %v5347
    %v5349 = vrot.slane %v5348, 4
    %v5351 = vshll.u32 %v5298, 16
    %v5353 = vrot.slane %v5351, 5
    %v5354 = vsel %vm3879, %v5349, %v5353
    %v5356 = vshrl.u32 %v5299, 16
    %v5358 = vrot.slane %v5356, 4
    %v5359 = vshll.u32 %v5299, 16
    %v5361 = vrot.slane %v5359, 5
    %v5362 = vor.u32 %v5358, %v5361
    %v5363 = vrot.slane %v5362, 4
    %v5365 = vshll.u32 %v5300, 16
    %v5367 = vrot.slane %v5365, 5
    %v5368 = vsel %vm3879, %v5363, %v5367
    %v5370 = vshrl.u32 %v5301, 16
    %v5372 = vrot.slane %v5370, 4
    %v5373 = vshll.u32 %v5301, 16
    %v5375 = vrot.slane %v5373, 5
    %v5376 = vor.u32 %v5372, %v5375
    %v5377 = vrot.slane %v5376, 4
    %v5379 = vshll.u32 %v5302, 16
    %v5381 = vrot.slane %v5379, 5
    %v5382 = vsel %vm3879, %v5377, %v5381
    %v5384 = vshrl.u32 %v5303, 16
    %v5386 = vrot.slane %v5384, 4
    %v5387 = vshll.u32 %v5303, 16
    %v5389 = vrot.slane %v5387, 5
    %v5390 = vor.u32 %v5386, %v5389
    %v5391 = vrot.slane %v5390, 4
    %v5393 = vshll.u32 %v5304, 16
    %v5395 = vrot.slane %v5393, 5
    %v5396 = vsel %vm3879, %v5391, %v5395
    %v5398 = vshrl.u32 %v5305, 16
    %v5400 = vrot.slane %v5398, 4
    %v5401 = vshll.u32 %v5305, 16
    %v5403 = vrot.slane %v5401, 5
    %v5404 = vor.u32 %v5400, %v5403
    %v5405 = vrot.slane %v5404, 4
    %v5407 = vshll.u32 %v5306, 16
    %v5409 = vrot.slane %v5407, 5
    %v5410 = vsel %vm3879, %v5405, %v5409
    %v5412 = vshrl.u32 %v5307, 16
    %v5414 = vrot.slane %v5412, 4
    %v5415 = vshll.u32 %v5307, 16
    %v5417 = vrot.slane %v5415, 5
    %v5418 = vor.u32 %v5414, %v5417
    %v5419 = vrot.slane %v5418, 4
    %v5421 = vshll.u32 %v5308, 16
    %v5423 = vrot.slane %v5421, 5
    %v5424 = vsel %vm3879, %v5419, %v5423
    %v5426 = vshrl.u32 %v5309, 16
    %v5428 = vrot.slane %v5426, 4
    %v5429 = vshll.u32 %v5309, 16
    %v5431 = vrot.slane %v5429, 5
    %v5432 = vor.u32 %v5428, %v5431
    %v5433 = vrot.slane %v5432, 4
    %v5435 = vshll.u32 %v5310, 16
    %v5437 = vrot.slane %v5435, 5
    %v5438 = vsel %vm3879, %v5433, %v5437
    %v5440 = vshrl.u32 %v5311, 16
    %v5442 = vrot.slane %v5440, 4
    %v5443 = vshll.u32 %v5311, 16
    %v5445 = vrot.slane %v5443, 5
    %v5446 = vor.u32 %v5442, %v5445
    %v5447 = vrot.slane %v5446, 4
    %v5449 = vshll.u32 %v5312, 16
    %v5451 = vrot.slane %v5449, 5
    %v5452 = vsel %vm3879, %v5447, %v5451
    %v5454 = vshrl.u32 %v5313, 16
    %v5456 = vrot.slane %v5454, 4
    %v5457 = vshll.u32 %v5313, 16
    %v5459 = vrot.slane %v5457, 5
    %v5460 = vor.u32 %v5456, %v5459
    %v5461 = vrot.slane %v5460, 4
    %v5463 = vshll.u32 %v5314, 16
    %v5465 = vrot.slane %v5463, 5
    %v5466 = vsel %vm3879, %v5461, %v5465
    %v5468 = vshrl.u32 %v5315, 16
    %v5470 = vrot.slane %v5468, 4
    %v5471 = vshll.u32 %v5315, 16
    %v5473 = vrot.slane %v5471, 5
    %v5474 = vor.u32 %v5470, %v5473
    %v5475 = vrot.slane %v5474, 4
    %v5477 = vshll.u32 %v5316, 16
    %v5479 = vrot.slane %v5477, 5
    %v5480 = vsel %vm3879, %v5475, %v5479
    %v5482 = vshrl.u32 %v5317, 16
    %v5484 = vrot.slane %v5482, 4
    %v5485 = vshll.u32 %v5317, 16
    %v5487 = vrot.slane %v5485, 5
    %v5488 = vor.u32 %v5484, %v5487
    %v5489 = vrot.slane %v5488, 4
    %v5491 = vshll.u32 %v5318, 16
    %v5493 = vrot.slane %v5491, 5
    %v5494 = vsel %vm3879, %v5489, %v5493
    %v5496 = vshrl.u32 %v5319, 16
    %v5498 = vrot.slane %v5496, 4
    %v5499 = vshll.u32 %v5319, 16
    %v5501 = vrot.slane %v5499, 5
    %v5502 = vor.u32 %v5498, %v5501
    %v5503 = vrot.slane %v5502, 4
    %v5505 = vshll.u32 %v5320, 16
    %v5507 = vrot.slane %v5505, 5
    %v5508 = vsel %vm3879, %v5503, %v5507
    %v5510 = vshrl.u32 %v5321, 16
    %v5512 = vrot.slane %v5510, 4
    %v5513 = vshll.u32 %v5321, 16
    %v5515 = vrot.slane %v5513, 5
    %v5516 = vor.u32 %v5512, %v5515
    %v5517 = vrot.slane %v5516, 4
    %v5519 = vshll.u32 %v5322, 16
    %v5521 = vrot.slane %v5519, 5
    %v5522 = vsel %vm3879, %v5517, %v5521
    %v5524 = vshrl.u32 %v5323, 16
    %v5526 = vrot.slane %v5524, 4
    %v5527 = vshll.u32 %v5323, 16
    %v5529 = vrot.slane %v5527, 5
    %v5530 = vor.u32 %v5526, %v5529
    %v5531 = vrot.slane %v5530, 4
    %v5533 = vshll.u32 %v5324, 16
    %v5535 = vrot.slane %v5533, 5
    %v5536 = vsel %vm3879, %v5531, %v5535
    %v5538 = vshrl.u32 %v5325, 16
    %v5540 = vrot.slane %v5538, 4
    %v5541 = vshll.u32 %v5325, 16
    %v5543 = vrot.slane %v5541, 5
    %v5544 = vor.u32 %v5540, %v5543
    %v5545 = vrot.slane %v5544, 4
    %v5547 = vshll.u32 %v5326, 16
    %v5549 = vrot.slane %v5547, 5
    %v5550 = vsel %vm3879, %v5545, %v5549
    %5551 = vrot.lane.b32.xlu0 %v5340, 64
    %v5552 = vpop.permute.xlu0 %5551
    %5553 = vrot.lane.b32.xlu0 %v5354, 64
    %v5554 = vpop.permute.xlu0 %5553
    %5555 = vrot.lane.b32.xlu0 %v5368, 64
    %v5556 = vpop.permute.xlu0 %5555
    %5557 = vrot.lane.b32.xlu0 %v5382, 64
    %v5558 = vpop.permute.xlu0 %5557
    %5559 = vrot.lane.b32.xlu0 %v5396, 64
    %v5560 = vpop.permute.xlu0 %5559
    %5561 = vrot.lane.b32.xlu0 %v5410, 64
    %v5562 = vpop.permute.xlu0 %5561
    %5563 = vrot.lane.b32.xlu0 %v5424, 64
    %v5564 = vpop.permute.xlu0 %5563
    %5565 = vrot.lane.b32.xlu0 %v5438, 64
    %v5566 = vpop.permute.xlu0 %5565
    %5567 = vrot.lane.b32.xlu0 %v5452, 64
    %v5568 = vpop.permute.xlu0 %5567
    %5569 = vrot.lane.b32.xlu0 %v5466, 64
    %v5570 = vpop.permute.xlu0 %5569
    %5571 = vrot.lane.b32.xlu0 %v5480, 64
    %v5572 = vpop.permute.xlu0 %5571
    %5573 = vrot.lane.b32.xlu0 %v5494, 64
    %v5574 = vpop.permute.xlu0 %5573
    %5575 = vrot.lane.b32.xlu0 %v5508, 64
    %v5576 = vpop.permute.xlu0 %5575
    %5577 = vrot.lane.b32.xlu0 %v5522, 64
    %v5578 = vpop.permute.xlu0 %5577
    %5579 = vrot.lane.b32.xlu0 %v5536, 64
    %v5580 = vpop.permute.xlu0 %5579
    %5581 = vrot.lane.b32.xlu0 %v5550, 64
    %v5582 = vpop.permute.xlu0 %5581
    %vm5599 = vcmask 585216
    %5600 = vst.msk [vmem:[#allocation5] sm:$0xf] %vm5599, %v5552
    %5601 = vst.msk [vmem:[#allocation5 + $0x4] sm:$0xf] %vm5599, %v5554
    %5602 = vst.msk [vmem:[#allocation5 + $0x8] sm:$0xf] %vm5599, %v5556
    %5603 = vst.msk [vmem:[#allocation5 + $0xc] sm:$0xf] %vm5599, %v5558
    %5604 = vst.msk [vmem:[#allocation5 + $0x10] sm:$0xf] %vm5599, %v5560
    %5605 = vst.msk [vmem:[#allocation5 + $0x14] sm:$0xf] %vm5599, %v5562
    %5606 = vst.msk [vmem:[#allocation5 + $0x18] sm:$0xf] %vm5599, %v5564
    %5607 = vst.msk [vmem:[#allocation5 + $0x1c] sm:$0xf] %vm5599, %v5566
    %5608 = vst.msk [vmem:[#allocation5 + $0x20] sm:$0xf] %vm5599, %v5568
    %5609 = vst.msk [vmem:[#allocation5 + $0x24] sm:$0xf] %vm5599, %v5570
    %5610 = vst.msk [vmem:[#allocation5 + $0x28] sm:$0xf] %vm5599, %v5572
    %5611 = vst.msk [vmem:[#allocation5 + $0x2c] sm:$0xf] %vm5599, %v5574
    %5612 = vst.msk [vmem:[#allocation5 + $0x30] sm:$0xf] %vm5599, %v5576
    %5613 = vst.msk [vmem:[#allocation5 + $0x34] sm:$0xf] %vm5599, %v5578
    %5614 = vst.msk [vmem:[#allocation5 + $0x38] sm:$0xf] %vm5599, %v5580
    %5615 = vst.msk [vmem:[#allocation5 + $0x3c] sm:$0xf] %vm5599, %v5582
    %v5616 = vld [vmem:[#allocation5] sm:$0xf]
    %v5617 = vld [vmem:[#allocation5 + $0x4] sm:$0xf]
    %v5618 = vld [vmem:[#allocation5 + $0x8] sm:$0xf]
    %v5619 = vld [vmem:[#allocation5 + $0xc] sm:$0xf]
    %v5620 = vld [vmem:[#allocation5 + $0x10] sm:$0xf]
    %v5621 = vld [vmem:[#allocation5 + $0x14] sm:$0xf]
    %v5622 = vld [vmem:[#allocation5 + $0x18] sm:$0xf]
    %v5623 = vld [vmem:[#allocation5 + $0x1c] sm:$0xf]
    %v5624 = vld [vmem:[#allocation5 + $0x20] sm:$0xf]
    %v5625 = vld [vmem:[#allocation5 + $0x24] sm:$0xf]
    %v5626 = vld [vmem:[#allocation5 + $0x28] sm:$0xf]
    %v5627 = vld [vmem:[#allocation5 + $0x2c] sm:$0xf]
    %v5628 = vld [vmem:[#allocation5 + $0x30] sm:$0xf]
    %v5629 = vld [vmem:[#allocation5 + $0x34] sm:$0xf]
    %v5630 = vld [vmem:[#allocation5 + $0x38] sm:$0xf]
    %v5631 = vld [vmem:[#allocation5 + $0x3c] sm:$0xf]
    %v5632 = vld [vmem:[%s6] sm:$0xf]
    %v5633 = vld [vmem:[%s6 + $0x4] sm:$0xf]
    %v5634 = vld [vmem:[%s6 + $0x8] sm:$0xf]
    %v5635 = vld [vmem:[%s6 + $0xc] sm:$0xf]
    %v5636 = vld [vmem:[%s6 + $0x10] sm:$0xf]
    %v5637 = vld [vmem:[%s6 + $0x14] sm:$0xf]
    %v5638 = vld [vmem:[%s6 + $0x18] sm:$0xf]
    %v5639 = vld [vmem:[%s6 + $0x1c] sm:$0xf]
    %v5640 = vld [vmem:[%s6 + $0x20] sm:$0xf]
    %v5657 = vunpack.c.l.b16 %v5616
    %v5658 = vunpack.c.l.b16 %v5617
    %v5659 = vunpack.c.l.b16 %v5618
    %v5660 = vunpack.c.l.b16 %v5619
    %v5661 = vunpack.c.l.b16 %v5620
    %v5662 = vunpack.c.l.b16 %v5621
    %v5663 = vunpack.c.l.b16 %v5622
    %v5664 = vunpack.c.l.b16 %v5623
    %v5665 = vunpack.c.l.b16 %v5624
    %v5666 = vunpack.c.l.b16 %v5625
    %v5667 = vunpack.c.l.b16 %v5626
    %v5668 = vunpack.c.l.b16 %v5627
    %v5669 = vunpack.c.l.b16 %v5628
    %v5670 = vunpack.c.l.b16 %v5629
    %v5671 = vunpack.c.l.b16 %v5630
    %v5672 = vunpack.c.l.b16 %v5631
    %v5673 = vpack.c.b16 %v5658, %v5657
    %v5674 = vpack.c.b16 %v5660, %v5659
    %v5675 = vpack.c.b16 %v5662, %v5661
    %v5676 = vpack.c.b16 %v5664, %v5663
    %v5677 = vpack.c.b16 %v5666, %v5665
    %v5678 = vpack.c.b16 %v5668, %v5667
    %v5679 = vpack.c.b16 %v5670, %v5669
    %v5680 = vpack.c.b16 %v5672, %v5671
    %v5690 = vunpack.c.l.b16 %v5632
    %v5691 = vunpack.c.l.b16 %v5633
    %v5692 = vunpack.c.l.b16 %v5634
    %v5693 = vunpack.c.l.b16 %v5635
    %v5694 = vunpack.c.l.b16 %v5636
    %v5695 = vunpack.c.l.b16 %v5637
    %v5696 = vunpack.c.l.b16 %v5638
    %v5697 = vunpack.c.l.b16 %v5639
    %v5698 = vunpack.c.l.b16 %v5640
    %v5699 = vpack.c.b16 %v5691, %v5690
    %v5700 = vpack.c.b16 %v5693, %v5692
    %v5701 = vpack.c.b16 %v5695, %v5694
    %v5702 = vpack.c.b16 %v5697, %v5696
    %v5703 = vpack.c.b16 %v5698, %v5698
    %vm5708 = vcmask 588800
    %v5710 = vsel %vm5708, %v5673, 0
    %v5713 = vsel %vm5708, %v5674, 0
    %v5716 = vsel %vm5708, %v5675, 0
    %v5719 = vsel %vm5708, %v5676, 0
    %v5722 = vsel %vm5708, %v5677, 0
    %v5725 = vsel %vm5708, %v5678, 0
    %v5728 = vsel %vm5708, %v5679, 0
    %v5731 = vsel %vm5708, %v5680, 0
    %vm5733 = vcmask 1043456
    %v5735 = vsel %vm5733, %v5703, 0
    %5737 = vmatprep.subr.bf16.mxu0 0
    %5738 = vmatpush1.bf16.msra.mxu0 0
    %5739 = vmatprep.subr.bf16.mxu0 0
    %5740 = vmatpush1.bf16.msra.mxu0 0
    %5741 = vmatprep.subr.bf16.mxu0 0
    %5742 = vmatpush1.bf16.msra.mxu0 0
    %5743 = vmatprep.subr.bf16.mxu0 0
    %5744 = vmatpush1.bf16.msra.mxu0 %v5735
    %5745 = vmatprep.subr.bf16.mxu0 0
    %5746 = vmatpush1.bf16.msra.mxu0 %v5702
    %5747 = vmatprep.subr.bf16.mxu0 0
    %5748 = vmatpush1.bf16.msra.mxu0 %v5701
    %5749 = vmatprep.subr.bf16.mxu0 0
    %5750 = vmatpush1.bf16.msra.mxu0 %v5700
    %5751 = vmatprep.subr.bf16.mxu0 0
    %5752 = vmatpush1.bf16.msra.mxu0 %v5699
    %5753 = vmatprep.subr.bf16.mxu0 0
    %5754 = vmatpush2.bf16.msra.mxu0 0
    %5755 = vmatprep.subr.bf16.mxu0 0
    %5756 = vmatpush2.bf16.msra.mxu0 0
    %5757 = vmatprep.subr.bf16.mxu0 0
    %5758 = vmatpush2.bf16.msra.mxu0 0
    %5759 = vmatprep.subr.bf16.mxu0 0
    %5760 = vmatpush2.bf16.msra.mxu0 0
    %5761 = vmatprep.subr.bf16.mxu0 0
    %5762 = vmatpush2.bf16.msra.mxu0 0
    %5763 = vmatprep.subr.bf16.mxu0 0
    %5764 = vmatpush2.bf16.msra.mxu0 0
    %5765 = vmatprep.subr.bf16.mxu0 0
    %5766 = vmatpush2.bf16.msra.mxu0 0
    %5767 = vmatprep.subr.bf16.mxu0 0
    %5768 = vmatpush2.bf16.msra.mxu0 0
    %5769 = vmatprep.mubr.bf16.mxu0 0
    %5770 = vmatmul.mubr.bf16.gmra.mxu0 %v5710
    %v5771 = vpop.f32.mrf.mxu0
    %v5772 = vadd.f32 0.0, %v5771
    %v5773 = vpop.f32.mrf.mxu0
    %v5774 = vpop.f32.mrf.mxu0
    %v5775 = vadd.f32 0.0, %v5774
    %v5776 = vpop.f32.mrf.mxu0
    %5777 = vmatprep.mubr.bf16.mxu0 0
    %5778 = vmatmul.mubr.bf16.gmra.mxu0 %v5713
    %v5779 = vpop.f32.mrf.mxu0
    %v5780 = vadd.f32 0.0, %v5779
    %v5781 = vpop.f32.mrf.mxu0
    %v5782 = vpop.f32.mrf.mxu0
    %v5783 = vadd.f32 0.0, %v5782
    %v5784 = vpop.f32.mrf.mxu0
    %5785 = vmatprep.mubr.bf16.mxu0 0
    %5786 = vmatmul.mubr.bf16.gmra.mxu0 %v5716
    %v5787 = vpop.f32.mrf.mxu0
    %v5788 = vadd.f32 0.0, %v5787
    %v5789 = vpop.f32.mrf.mxu0
    %v5790 = vpop.f32.mrf.mxu0
    %v5791 = vadd.f32 0.0, %v5790
    %v5792 = vpop.f32.mrf.mxu0
    %5793 = vmatprep.mubr.bf16.mxu0 0
    %5794 = vmatmul.mubr.bf16.gmra.mxu0 %v5719
    %v5795 = vpop.f32.mrf.mxu0
    %v5796 = vadd.f32 0.0, %v5795
    %v5797 = vpop.f32.mrf.mxu0
    %v5798 = vpop.f32.mrf.mxu0
    %v5799 = vadd.f32 0.0, %v5798
    %v5800 = vpop.f32.mrf.mxu0
    %5801 = vmatprep.mubr.bf16.mxu0 0
    %5802 = vmatmul.mubr.bf16.gmra.mxu0 %v5722
    %v5803 = vpop.f32.mrf.mxu0
    %v5804 = vadd.f32 0.0, %v5803
    %v5805 = vpop.f32.mrf.mxu0
    %v5806 = vpop.f32.mrf.mxu0
    %v5807 = vadd.f32 0.0, %v5806
    %v5808 = vpop.f32.mrf.mxu0
    %5809 = vmatprep.mubr.bf16.mxu0 0
    %5810 = vmatmul.mubr.bf16.gmra.mxu0 %v5725
    %v5811 = vpop.f32.mrf.mxu0
    %v5812 = vadd.f32 0.0, %v5811
    %v5813 = vpop.f32.mrf.mxu0
    %v5814 = vpop.f32.mrf.mxu0
    %v5815 = vadd.f32 0.0, %v5814
    %v5816 = vpop.f32.mrf.mxu0
    %5817 = vmatprep.mubr.bf16.mxu0 0
    %5818 = vmatmul.mubr.bf16.gmra.mxu0 %v5728
    %v5819 = vpop.f32.mrf.mxu0
    %v5820 = vadd.f32 0.0, %v5819
    %v5821 = vpop.f32.mrf.mxu0
    %v5822 = vpop.f32.mrf.mxu0
    %v5823 = vadd.f32 0.0, %v5822
    %v5824 = vpop.f32.mrf.mxu0
    %5825 = vmatprep.mubr.bf16.mxu0 0
    %5826 = vmatmul.mubr.bf16.gmra.mxu0 %v5731
    %v5827 = vpop.f32.mrf.mxu0
    %v5828 = vadd.f32 0.0, %v5827
    %v5829 = vpop.f32.mrf.mxu0
    %v5830 = vpop.f32.mrf.mxu0
    %v5831 = vadd.f32 0.0, %v5830
    %v5832 = vpop.f32.mrf.mxu0
    %5833 = vdwg.mxu0
    %5834 = vst.msk [vmem:[#allocation6] sm:$0xff] %vm3132, 0.0
    %5835 = vst.msk [vmem:[#allocation6 + $0x8] sm:$0xff] %vm3132, 0.0
    %5836 = vst.msk [vmem:[#allocation6 + $0x10] sm:$0xff] %vm3132, 0.0
    %5837 = vst.msk [vmem:[#allocation6 + $0x18] sm:$0xff] %vm3132, 0.0
    %5838 = vst.msk [vmem:[#allocation6 + $0x20] sm:$0xff] %vm3132, 0.0
    %5839 = vst.msk [vmem:[#allocation6 + $0x28] sm:$0xff] %vm3132, 0.0
    %5840 = vst.msk [vmem:[#allocation6 + $0x30] sm:$0xff] %vm3132, 0.0
    %5841 = vst.msk [vmem:[#allocation6 + $0x38] sm:$0xff] %vm3132, 0.0
    %5842 = vst.msk [vmem:[#allocation6 + $0x40] sm:$0xff] %vm3132, 0.0
    %5843 = vst.msk [vmem:[#allocation6 + $0x48] sm:$0xff] %vm3132, 0.0
    %5844 = vst.msk [vmem:[#allocation6 + $0x50] sm:$0xff] %vm3132, 0.0
    %5845 = vst.msk [vmem:[#allocation6 + $0x58] sm:$0xff] %vm3132, 0.0
    %5846 = vst.msk [vmem:[#allocation6 + $0x60] sm:$0xff] %vm3132, 0.0
    %5847 = vst.msk [vmem:[#allocation6 + $0x68] sm:$0xff] %vm3132, 0.0
    %5848 = vst.msk [vmem:[#allocation6 + $0x70] sm:$0xff] %vm3132, 0.0
    %5849 = vst.msk [vmem:[#allocation6 + $0x78] sm:$0xff] %vm3132, 0.0
    %5866 = vrot.lane.b32.xlu0 %v1446, 2
    %v5867 = vpop.permute.xlu0 %5866
    %5868 = vrot.lane.b32.xlu0 %v1447, 2
    %v5869 = vpop.permute.xlu0 %5868
    %5870 = vrot.lane.b32.xlu0 %v1448, 2
    %v5871 = vpop.permute.xlu0 %5870
    %5872 = vrot.lane.b32.xlu0 %v1449, 2
    %v5873 = vpop.permute.xlu0 %5872
    %5874 = vrot.lane.b32.xlu0 %v1450, 2
    %v5875 = vpop.permute.xlu0 %5874
    %5876 = vrot.lane.b32.xlu0 %v1451, 2
    %v5877 = vpop.permute.xlu0 %5876
    %5878 = vrot.lane.b32.xlu0 %v1452, 2
    %v5879 = vpop.permute.xlu0 %5878
    %5880 = vrot.lane.b32.xlu0 %v1453, 2
    %v5881 = vpop.permute.xlu0 %5880
    %5882 = vrot.lane.b32.xlu0 %v1454, 2
    %v5883 = vpop.permute.xlu0 %5882
    %5884 = vrot.lane.b32.xlu0 %v1455, 2
    %v5885 = vpop.permute.xlu0 %5884
    %5886 = vrot.lane.b32.xlu0 %v1456, 2
    %v5887 = vpop.permute.xlu0 %5886
    %5888 = vrot.lane.b32.xlu0 %v1457, 2
    %v5889 = vpop.permute.xlu0 %5888
    %5890 = vrot.lane.b32.xlu0 %v1458, 2
    %v5891 = vpop.permute.xlu0 %5890
    %5892 = vrot.lane.b32.xlu0 %v1459, 2
    %v5893 = vpop.permute.xlu0 %5892
    %5894 = vrot.lane.b32.xlu0 %v1460, 2
    %v5895 = vpop.permute.xlu0 %5894
    %5896 = vrot.lane.b32.xlu0 %v1461, 2
    %v5897 = vpop.permute.xlu0 %5896
    %vm5914 = vcmask 48144
    %5915 = vst.msk [vmem:[#allocation6] sm:$0xff] %vm5914, %v5867
    %5916 = vst.msk [vmem:[#allocation6 + $0x8] sm:$0xff] %vm5914, %v5869
    %5917 = vst.msk [vmem:[#allocation6 + $0x10] sm:$0xff] %vm5914, %v5871
    %5918 = vst.msk [vmem:[#allocation6 + $0x18] sm:$0xff] %vm5914, %v5873
    %5919 = vst.msk [vmem:[#allocation6 + $0x20] sm:$0xff] %vm5914, %v5875
    %5920 = vst.msk [vmem:[#allocation6 + $0x28] sm:$0xff] %vm5914, %v5877
    %5921 = vst.msk [vmem:[#allocation6 + $0x30] sm:$0xff] %vm5914, %v5879
    %5922 = vst.msk [vmem:[#allocation6 + $0x38] sm:$0xff] %vm5914, %v5881
    %5923 = vst.msk [vmem:[#allocation6 + $0x40] sm:$0xff] %vm5914, %v5883
    %5924 = vst.msk [vmem:[#allocation6 + $0x48] sm:$0xff] %vm5914, %v5885
    %5925 = vst.msk [vmem:[#allocation6 + $0x50] sm:$0xff] %vm5914, %v5887
    %5926 = vst.msk [vmem:[#allocation6 + $0x58] sm:$0xff] %vm5914, %v5889
    %5927 = vst.msk [vmem:[#allocation6 + $0x60] sm:$0xff] %vm5914, %v5891
    %5928 = vst.msk [vmem:[#allocation6 + $0x68] sm:$0xff] %vm5914, %v5893
    %5929 = vst.msk [vmem:[#allocation6 + $0x70] sm:$0xff] %vm5914, %v5895
    %5930 = vst.msk [vmem:[#allocation6 + $0x78] sm:$0xff] %vm5914, %v5897
    %v5931 = vld [vmem:[#allocation6] sm:$0xff]
    %v5932 = vld [vmem:[#allocation6 + $0x8] sm:$0xff]
    %v5933 = vld [vmem:[#allocation6 + $0x10] sm:$0xff]
    %v5934 = vld [vmem:[#allocation6 + $0x18] sm:$0xff]
    %v5935 = vld [vmem:[#allocation6 + $0x20] sm:$0xff]
    %v5936 = vld [vmem:[#allocation6 + $0x28] sm:$0xff]
    %v5937 = vld [vmem:[#allocation6 + $0x30] sm:$0xff]
    %v5938 = vld [vmem:[#allocation6 + $0x38] sm:$0xff]
    %v5939 = vld [vmem:[#allocation6 + $0x40] sm:$0xff]
    %v5940 = vld [vmem:[#allocation6 + $0x48] sm:$0xff]
    %v5941 = vld [vmem:[#allocation6 + $0x50] sm:$0xff]
    %v5942 = vld [vmem:[#allocation6 + $0x58] sm:$0xff]
    %v5943 = vld [vmem:[#allocation6 + $0x60] sm:$0xff]
    %v5944 = vld [vmem:[#allocation6 + $0x68] sm:$0xff]
    %v5945 = vld [vmem:[#allocation6 + $0x70] sm:$0xff]
    %v5946 = vld [vmem:[#allocation6 + $0x78] sm:$0xff]
    %v5947 = vadd.f32 %v5931, %v5772
    %v5948 = vadd.f32 %v5932, %v5775
    %v5949 = vadd.f32 %v5933, %v5780
    %v5950 = vadd.f32 %v5934, %v5783
    %v5951 = vadd.f32 %v5935, %v5788
    %v5952 = vadd.f32 %v5936, %v5791
    %v5953 = vadd.f32 %v5937, %v5796
    %v5954 = vadd.f32 %v5938, %v5799
    %v5955 = vadd.f32 %v5939, %v5804
    %v5956 = vadd.f32 %v5940, %v5807
    %v5957 = vadd.f32 %v5941, %v5812
    %v5958 = vadd.f32 %v5942, %v5815
    %v5959 = vadd.f32 %v5943, %v5820
    %v5960 = vadd.f32 %v5944, %v5823
    %v5961 = vadd.f32 %v5945, %v5828
    %v5962 = vadd.f32 %v5946, %v5831
    %5963 = vst.msk [vmem:[#allocation6] sm:$0xff] %vm3132, %v5947
    %5964 = vst.msk [vmem:[#allocation6 + $0x8] sm:$0xff] %vm3132, %v5948
    %5965 = vst.msk [vmem:[#allocation6 + $0x10] sm:$0xff] %vm3132, %v5949
    %5966 = vst.msk [vmem:[#allocation6 + $0x18] sm:$0xff] %vm3132, %v5950
    %5967 = vst.msk [vmem:[#allocation6 + $0x20] sm:$0xff] %vm3132, %v5951
    %5968 = vst.msk [vmem:[#allocation6 + $0x28] sm:$0xff] %vm3132, %v5952
    %5969 = vst.msk [vmem:[#allocation6 + $0x30] sm:$0xff] %vm3132, %v5953
    %5970 = vst.msk [vmem:[#allocation6 + $0x38] sm:$0xff] %vm3132, %v5954
    %5971 = vst.msk [vmem:[#allocation6 + $0x40] sm:$0xff] %vm3132, %v5955
    %5972 = vst.msk [vmem:[#allocation6 + $0x48] sm:$0xff] %vm3132, %v5956
    %5973 = vst.msk [vmem:[#allocation6 + $0x50] sm:$0xff] %vm3132, %v5957
    %5974 = vst.msk [vmem:[#allocation6 + $0x58] sm:$0xff] %vm3132, %v5958
    %5975 = vst.msk [vmem:[#allocation6 + $0x60] sm:$0xff] %vm3132, %v5959
    %5976 = vst.msk [vmem:[#allocation6 + $0x68] sm:$0xff] %vm3132, %v5960
    %5977 = vst.msk [vmem:[#allocation6 + $0x70] sm:$0xff] %vm3132, %v5961
    %5978 = vst.msk [vmem:[#allocation6 + $0x78] sm:$0xff] %vm3132, %v5962
    // Predicated region
    $region30: #{tpu_custom_call.1} parent=1 // pred_check
      _
    $region31: #{tpu_custom_call.1} parent=1 // pred_check_branch
      %5980 = sbr.rel (0) target = $region33
    $region32: #{tpu_custom_call.1} parent=1 // pred_region
      %s5982 = ssub.s32 2048, 2048
      %5983 = vsyncadd [#allocation7], %s5982
      %s5984 = sshll.u32 [#allocation6], 4
      %s5985 = int_to_ptr.vmem [resolvable:$true] %s5984
      %5990 = dma.vmem_to_hbm [thread:$0]  %s5985, 2048, %s7, [#allocation7], 128, 128, 8
    $region33: #{tpu_custom_call.1} parent=1 // pred_fallthru
      _
    // Predicated region
    $region34: #{tpu_custom_call.1} parent=1 // pred_check
      _
    $region35: #{tpu_custom_call.1} parent=1 // pred_check_branch
      %5992 = sbr.rel (0) target = $region37
    $region36: #{tpu_custom_call.1} parent=1 // pred_region
      %5993 = dma.done [#allocation7], 2048
    $region37: #{tpu_custom_call.1} parent=1 // pred_fallthru
      _
    %5994 = vsyncpa [#allocation7], 1

</llo_original>
